<compile_context>
chip_gen: v7x
topology: tpu7x:2x2x1
jax: 0.10.0
libtpu: 0.0.40
codegen_flags: <defaults>
</compile_context>

<pallas_src>
import functools

import jax
import jax.numpy as jnp
from jax.experimental import pallas as pl
from jax.experimental.pallas import tpu as pltpu


def _sigmoid(x):
    # logistic via tanh (EUP path); numerically identical to 1/(1+exp(-x)).
    return 0.5 * jnp.tanh(0.5 * x) + 0.5


def _largest_divisor_leq(n, cap):
    best = 1
    for d in range(1, min(n, cap) + 1):
        if n % d == 0:
            best = d
    return best


# ---------------------------------------------------------------------------
# Kernel 1: hoisted, tiled input projection for all timesteps
#   xw[rows, cols] = x[rows, :] @ W_ih^T[:, cols] + (b_ih + b_hh)[cols]
# ---------------------------------------------------------------------------
def _input_proj_kernel(x_ref, w_ref, b_ref, o_ref):
    # x_ref: (RT, I)   w_ref: (I, CT)   b_ref: (1, CT)   o_ref: (RT, CT)
    o_ref[...] = (
        jnp.dot(x_ref[...], w_ref[...], preferred_element_type=jnp.float32)
        + b_ref[...]
    ).astype(o_ref.dtype)


def _input_projection(x2d, w_t, bias, *, max_row_tile=512, max_col_tile=512):
    R, I = x2d.shape
    G = w_t.shape[1]
    # Row tile: 512 rows (multiple of 8) or the full extent if smaller.
    row_tile = R if R <= max_row_tile else max_row_tile
    # Column tile: lane-dense multiple of 128 (512) or the full extent if smaller.
    col_tile = G if G <= max_col_tile else max_col_tile
    grid = (pl.cdiv(R, row_tile), pl.cdiv(G, col_tile))

    return pl.pallas_call(
        _input_proj_kernel,
        out_shape=jax.ShapeDtypeStruct((R, G), jnp.float32),
        grid=grid,
        in_specs=[
            pl.BlockSpec((row_tile, I), lambda r, c: (r, 0)),
            pl.BlockSpec((I, col_tile), lambda r, c: (0, c)),
            pl.BlockSpec((1, col_tile), lambda r, c: (0, c)),
        ],
        out_specs=pl.BlockSpec((row_tile, col_tile), lambda r, c: (r, c)),
        compiler_params=pltpu.CompilerParams(
            dimension_semantics=("parallel", "parallel"),
        ),
    )(x2d, w_t, bias)


# ---------------------------------------------------------------------------
# Kernel 2: sequential LSTM recurrence, TT timesteps per grid step
# ---------------------------------------------------------------------------
def _lstm_scan_kernel(xw_ref, whh_ref, o_ref, h_scr, c_scr, *, H, TT, reverse):
    # xw_ref: (TT, B, 4H) f32 precomputed x_t @ W_ih^T + bias (pipelined per block)
    # whh_ref: (H, 4H)    recurrent weight (f32 or bf16), resident across steps
    # o_ref:  (TT, B, H)  h_t written per step (f32)
    # h_scr, c_scr: (B, H) f32 VMEM scratch, persistent across grid iterations
    tb = pl.program_id(0)

    @pl.when(tb == 0)
    def _():
        h_scr[...] = jnp.zeros_like(h_scr)
        c_scr[...] = jnp.zeros_like(c_scr)

    whh = whh_ref[...]            # resident (H, 4H), MXU dtype
    mxu_dtype = whh.dtype

    def step(j, carry):
        h, c = carry
        # Backward direction walks the block from its last timestep to its first.
        s = (TT - 1 - j) if reverse else j
        gates = xw_ref[s] + jnp.dot(
            h.astype(mxu_dtype), whh, preferred_element_type=jnp.float32
        )  # (B, 4H), PyTorch gate order (i, f, g, o) along the lane-dense 4H axis.
        i = _sigmoid(gates[:, 0:H])
        f = _sigmoid(gates[:, H:2 * H])
        g = jnp.tanh(gates[:, 2 * H:3 * H])
        o = _sigmoid(gates[:, 3 * H:4 * H])
        c = f * c + i * g
        h = o * jnp.tanh(c)
        o_ref[s] = h.astype(o_ref.dtype)
        return (h, c)

    h, c = jax.lax.fori_loop(0, TT, step, (h_scr[...], c_scr[...]), unroll=True)
    h_scr[...] = h
    c_scr[...] = c


# ---------------------------------------------------------------------------
# One layer, one direction:  x (T, B, I) -> h_seq (T, B, H)
# ---------------------------------------------------------------------------
def _lstm_single_direction(x, p, *, reverse, max_time_block=32):
    T, B, _ = x.shape
    w_ih_t = p["w_ih_t"]          # (I, 4H), f32 or bf16
    w_hh_t = p["w_hh_t"]          # (H, 4H), f32 or bf16
    bias = p["bias"]              # (1, 4H), f32
    I, G = w_ih_t.shape
    H = w_hh_t.shape[0]

    # One big tiled MXU matmul for the whole sequence (4H lane-dense output, f32).
    xw = _input_projection(x.reshape(T * B, I).astype(w_ih_t.dtype), w_ih_t, bias)
    xw = xw.reshape(T, B, G)

    # Sequential recurrence; TT timesteps per grid step, h/c in persistent scratch.
    TT = _largest_divisor_leq(T, max_time_block)
    n_tb = T // TT
    if reverse:
        t_map = lambda tb: (n_tb - 1 - tb, 0, 0)   # in-kernel time reversal
    else:
        t_map = lambda tb: (tb, 0, 0)

    h_seq = pl.pallas_call(
        functools.partial(_lstm_scan_kernel, H=H, TT=TT, reverse=reverse),
        out_shape=jax.ShapeDtypeStruct((T, B, H), jnp.float32),
        grid=(n_tb,),
        in_specs=[
            pl.BlockSpec((TT, B, G), t_map),
            pl.BlockSpec((H, G), lambda tb: (0, 0)),
        ],
        out_specs=pl.BlockSpec((TT, B, H), t_map),
        scratch_shapes=[
            pltpu.VMEM((B, H), jnp.float32),
            pltpu.VMEM((B, H), jnp.float32),
        ],
        compiler_params=pltpu.CompilerParams(
            dimension_semantics=("arbitrary",),
        ),
    )(xw, w_hh_t)
    return h_seq


# ---------------------------------------------------------------------------
# Parameter preparation (hoisted out of the forward path) and forward pass
# ---------------------------------------------------------------------------
def prepare_lstm_params(params, *, mxu_dtype=jnp.float32):
    """Pre-transpose weights ((4H,X)->(X,4H)), fold biases, cast MXU operands."""
    prepared = []
    for layer_params in params:
        layer = []
        for p in layer_params:
            layer.append({
                "w_ih_t": jnp.transpose(jnp.asarray(p["w_ih"], jnp.float32)).astype(mxu_dtype),
                "w_hh_t": jnp.transpose(jnp.asarray(p["w_hh"], jnp.float32)).astype(mxu_dtype),
                "bias": (p["b_ih"] + p["b_hh"]).reshape(1, -1).astype(jnp.float32),
            })
        prepared.append(layer)
    return prepared


def lstm_layer(x, prepared_params):
    """Forward of nn.LSTM (batch_first=False): x (T, B, input_size).

    prepared_params: output of prepare_lstm_params -- list over layers, each a list
    over directions of {"w_ih_t", "w_hh_t", "bias"}.
    Returns outputs (T, B, num_directions * H), matching `outputs, _ = lstm(x)`.
    """
    out = x
    for layer_params in prepared_params:
        dir_outs = [
            _lstm_single_direction(out, p, reverse=(d == 1))
            for d, p in enumerate(layer_params)
        ]
        out = dir_outs[0] if len(dir_outs) == 1 else jnp.concatenate(dir_outs, axis=-1)
        # TODO(synk): train-mode inter-layer dropout not applied (dropout=0.0 / eval).
    return out


# ---------------------------------------------------------------------------
# Pure-JAX reference (matches PyTorch LSTM math, gate order i,f,g,o)
# ---------------------------------------------------------------------------
def _lstm_single_direction_ref(x, w_ih, w_hh, b_ih, b_hh):
    H = w_hh.shape[1]
    B = x.shape[1]

    def step(carry, x_t):
        h, c = carry
        gates = x_t @ w_ih.T + h @ w_hh.T + b_ih + b_hh
        i = _sigmoid(gates[:, 0:H])
        f = _sigmoid(gates[:, H:2 * H])
        g = jnp.tanh(gates[:, 2 * H:3 * H])
        o = _sigmoid(gates[:, 3 * H:4 * H])
        c = f * c + i * g
        h = o * jnp.tanh(c)
        return (h, c), h

    init = (jnp.zeros((B, H), jnp.float32), jnp.zeros((B, H), jnp.float32))
    _, hs = jax.lax.scan(step, init, x)
    return hs


def _lstm_layer_ref(x, params):
    out = x
    for layer_params in params:
        dir_outs = []
        for d, p in enumerate(layer_params):
            xin = out[::-1] if d == 1 else out
            h = _lstm_single_direction_ref(xin, p["w_ih"], p["w_hh"], p["b_ih"], p["b_hh"])
            if d == 1:
                h = h[::-1]
            dir_outs.append(h)
        out = dir_outs[0] if len(dir_outs) == 1 else jnp.concatenate(dir_outs, axis=-1)
    return out


def _init_lstm_params(key, input_size, hidden_size, num_layers, bidirectional):
    num_dirs = 2 if bidirectional else 1
    k = 1.0 / (hidden_size ** 0.5)
    params = []
    for layer in range(num_layers):
        in_size = input_size if layer == 0 else hidden_size * num_dirs
        layer_params = []
        for _ in range(num_dirs):
            key, k1, k2, k3, k4 = jax.random.split(key, 5)
            layer_params.append({
                "w_ih": jax.random.uniform(k1, (4 * hidden_size, in_size),
                                           minval=-k, maxval=k, dtype=jnp.float32),
                "w_hh": jax.random.uniform(k2, (4 * hidden_size, hidden_size),
                                           minval=-k, maxval=k, dtype=jnp.float32),
                "b_ih": jax.random.uniform(k3, (4 * hidden_size,),
                                           minval=-k, maxval=k, dtype=jnp.float32),
                "b_hh": jax.random.uniform(k4, (4 * hidden_size,),
                                           minval=-k, maxval=k, dtype=jnp.float32),
            })
        params.append(layer_params)
    return params


if __name__ == "__main__":
    # Module config (synthetic, deterministic init).
    input_size, hidden_size = 16, 32
    num_layers, bidirectional = 2, True
    T, B = 8, 2

    key = jax.random.PRNGKey(0)
    kx, kp = jax.random.split(key)
    x = jax.random.normal(kx, (T, B, input_size), dtype=jnp.float32)
    params = _init_lstm_params(kp, input_size, hidden_size, num_layers, bidirectional)

    ref = _lstm_layer_ref(x, params)
    num_dirs = 2 if bidirectional else 1

    # f32 MXU path (exact check against the reference).
    prep_f32 = prepare_lstm_params(params, mxu_dtype=jnp.float32)
    fwd = jax.jit(lstm_layer)
    out = jax.block_until_ready(fwd(x, prep_f32))
    assert out.shape == ref.shape == (T, B, num_dirs * hidden_size), (out.shape, ref.shape)
    assert jnp.allclose(out, ref, rtol=1e-4, atol=1e-4), float(jnp.max(jnp.abs(out - ref)))

    # bf16 MXU operands (production path on v6e/v7x; f32 accumulation + f32 gate math).
    prep_bf16 = prepare_lstm_params(params, mxu_dtype=jnp.bfloat16)
    out16 = jax.block_until_ready(fwd(x, prep_bf16))
    assert jnp.allclose(out16, ref, rtol=5e-2, atol=5e-2), float(jnp.max(jnp.abs(out16 - ref)))

    print("KERNEL_OK")
</pallas_src>

<mosaic_0001>
module attributes {stable_mosaic.version = 11 : i64} {
  func.func @_input_proj_kernel(%arg0: i32, %arg1: i32, %arg2: memref<16x16xf32, #tpu.memory_space<vmem>>, %arg3: memref<16x128xf32, #tpu.memory_space<vmem>>, %arg4: memref<1x128xf32, #tpu.memory_space<vmem>>, %arg5: memref<16x128xf32, #tpu.memory_space<vmem>>) attributes {dimension_semantics = [#tpu.dimension_semantics<parallel>, #tpu.dimension_semantics<parallel>], iteration_bounds = array<i64: 1, 1>, scalar_prefetch = 0 : i64, scratch_operands = 0 : i64, tpu.core_type = #tpu.core_type<tc>, window_params = [{transform_indices = @transform_0, window_bounds = array<i64: 16, 16>}, {transform_indices = @transform_1, window_bounds = array<i64: 16, 128>}, {transform_indices = @transform_2, window_bounds = array<i64: 1, 128>}, {transform_indices = @transform_3, window_bounds = array<i64: 16, 128>}]} {
    %c0 = arith.constant 0 : index
    %c0_0 = arith.constant 0 : index
    %0 = vector.load %arg2[%c0, %c0_0] : memref<16x16xf32, #tpu.memory_space<vmem>>, vector<16x16xf32>
    %c0_1 = arith.constant 0 : index
    %c0_2 = arith.constant 0 : index
    %1 = vector.load %arg3[%c0_1, %c0_2] : memref<16x128xf32, #tpu.memory_space<vmem>>, vector<16x128xf32>
    %cst = arith.constant dense<0.000000e+00> : vector<16x128xf32>
    %2 = tpu.matmul %0, %1, %cst {dimension_numbers = #tpu.dot_dimension_numbers<[1], [0], [0], [1], [0, 0, 1, 1], [], []>} : vector<16x16xf32>, vector<16x128xf32>, vector<16x128xf32> -> vector<16x128xf32>
    %c0_3 = arith.constant 0 : index
    %c0_4 = arith.constant 0 : index
    %3 = vector.load %arg4[%c0_3, %c0_4] : memref<1x128xf32, #tpu.memory_space<vmem>>, vector<1x128xf32>
    %4 = vector.broadcast %3 : vector<1x128xf32> to vector<16x128xf32>
    %5 = arith.addf %2, %4 : vector<16x128xf32>
    %c0_5 = arith.constant 0 : index
    %c0_6 = arith.constant 0 : index
    %6 = vector.load %arg5[%c0_5, %c0_6] : memref<16x128xf32, #tpu.memory_space<vmem>>, vector<16x128xf32>
    tpu.vector_store %arg5[%c0_5, %c0_6], %5 {strides = array<i32>} : memref<16x128xf32, #tpu.memory_space<vmem>>, vector<16x128xf32>,
    return
  }
  func.func @transform_0(%arg0: i32, %arg1: i32) -> (i32, i32) {
    %c0_i32 = arith.constant 0 : i32
    %c0_i32_0 = arith.constant 0 : i32
    return %arg0, %c0_i32 : i32, i32
  }
  func.func @transform_1(%arg0: i32, %arg1: i32) -> (i32, i32) {
    %c0_i32 = arith.constant 0 : i32
    %c0_i32_0 = arith.constant 0 : i32
    return %c0_i32, %arg1 : i32, i32
  }
  func.func @transform_2(%arg0: i32, %arg1: i32) -> (i32, i32) {
    %c0_i32 = arith.constant 0 : i32
    %c0_i32_0 = arith.constant 0 : i32
    return %c0_i32, %arg1 : i32, i32
  }
  func.func @transform_3(%arg0: i32, %arg1: i32) -> (i32, i32) {
    %c0_i32 = arith.constant 0 : i32
    return %arg0, %arg1 : i32, i32
  }
}

module attributes {stable_mosaic.version = 11 : i64} {
  func.func @_input_proj_kernel(%arg0: i32, %arg1: i32, %arg2: memref<16x16xf32, #tpu.memory_space<vmem>>, %arg3: memref<16x128xf32, #tpu.memory_space<vmem>>, %arg4: memref<1x128xf32, #tpu.memory_space<vmem>>, %arg5: memref<16x128xf32, #tpu.memory_space<vmem>>) attributes {dimension_semantics = [#tpu.dimension_semantics<parallel>, #tpu.dimension_semantics<parallel>], iteration_bounds = array<i64: 1, 1>, scalar_prefetch = 0 : i64, scratch_operands = 0 : i64, tpu.core_type = #tpu.core_type<tc>, window_params = [{transform_indices = @transform_0, window_bounds = array<i64: 16, 16>}, {transform_indices = @transform_1, window_bounds = array<i64: 16, 128>}, {transform_indices = @transform_2, window_bounds = array<i64: 1, 128>}, {transform_indices = @transform_3, window_bounds = array<i64: 16, 128>}]} {
    %c0 = arith.constant 0 : index
    %c0_0 = arith.constant 0 : index
    %0 = vector.load %arg2[%c0, %c0_0] : memref<16x16xf32, #tpu.memory_space<vmem>>, vector<16x16xf32>
    %c0_1 = arith.constant 0 : index
    %c0_2 = arith.constant 0 : index
    %1 = vector.load %arg3[%c0_1, %c0_2] : memref<16x128xf32, #tpu.memory_space<vmem>>, vector<16x128xf32>
    %cst = arith.constant dense<0.000000e+00> : vector<16x128xf32>
    %2 = tpu.matmul %0, %1, %cst {dimension_numbers = #tpu.dot_dimension_numbers<[1], [0], [0], [1], [0, 0, 1, 1], [], []>} : vector<16x16xf32>, vector<16x128xf32>, vector<16x128xf32> -> vector<16x128xf32>
    %c0_3 = arith.constant 0 : index
    %c0_4 = arith.constant 0 : index
    %3 = vector.load %arg4[%c0_3, %c0_4] : memref<1x128xf32, #tpu.memory_space<vmem>>, vector<1x128xf32>
    %4 = vector.broadcast %3 : vector<1x128xf32> to vector<16x128xf32>
    %5 = arith.addf %2, %4 : vector<16x128xf32>
    %c0_5 = arith.constant 0 : index
    %c0_6 = arith.constant 0 : index
    %6 = vector.load %arg5[%c0_5, %c0_6] : memref<16x128xf32, #tpu.memory_space<vmem>>, vector<16x128xf32>
    tpu.vector_store %arg5[%c0_5, %c0_6], %5 {strides = array<i32>} : memref<16x128xf32, #tpu.memory_space<vmem>>, vector<16x128xf32>,
    return
  }
  func.func @transform_0(%arg0: i32, %arg1: i32) -> (i32, i32) {
    %c0_i32 = arith.constant 0 : i32
    %c0_i32_0 = arith.constant 0 : i32
    return %arg0, %c0_i32 : i32, i32
  }
  func.func @transform_1(%arg0: i32, %arg1: i32) -> (i32, i32) {
    %c0_i32 = arith.constant 0 : i32
    %c0_i32_0 = arith.constant 0 : i32
    return %c0_i32, %arg1 : i32, i32
  }
  func.func @transform_2(%arg0: i32, %arg1: i32) -> (i32, i32) {
    %c0_i32 = arith.constant 0 : i32
    %c0_i32_0 = arith.constant 0 : i32
    return %c0_i32, %arg1 : i32, i32
  }
  func.func @transform_3(%arg0: i32, %arg1: i32) -> (i32, i32) {
    %c0_i32 = arith.constant 0 : i32
    return %arg0, %arg1 : i32, i32
  }
}

module attributes {stable_mosaic.version = 11 : i64} {
  func.func @_lstm_scan_kernel(%arg0: i32, %arg1: memref<8x2x128xf32, #tpu.memory_space<vmem>>, %arg2: memref<32x128xf32, #tpu.memory_space<vmem>>, %arg3: memref<8x2x32xf32, #tpu.memory_space<vmem>>, %arg4: memref<2x32xf32, #tpu.memory_space<vmem>>, %arg5: memref<2x32xf32, #tpu.memory_space<vmem>>) attributes {dimension_semantics = [#tpu.dimension_semantics<arbitrary>], iteration_bounds = array<i64: 1>, scalar_prefetch = 0 : i64, scratch_operands = 2 : i64, tpu.core_type = #tpu.core_type<tc>, window_params = [{transform_indices = @transform_0, window_bounds = array<i64: 8, 2, 128>}, {pipeline_mode = #tpu.pipeline_mode<synchronous>, transform_indices = @transform_1, window_bounds = array<i64: 32, 128>}, {transform_indices = @transform_2, window_bounds = array<i64: 8, 2, 32>}]} {
    %c0_i32 = arith.constant 0 : i32
    %0 = arith.cmpi eq, %arg0, %c0_i32 : i32
    %1 = arith.extui %0 : i1 to i32
    %c0_i32_0 = arith.constant 0 : i32
    %2 = arith.cmpi ne, %1, %c0_i32_0 : i32
    scf.if %2 {
      %cst_122 = arith.constant 0.000000e+00 : f32
      %328 = vector.broadcast %cst_122 : f32 to vector<2x32xf32>
      %c0_123 = arith.constant 0 : index
      %c0_124 = arith.constant 0 : index
      %329 = vector.load %arg4[%c0_123, %c0_124] : memref<2x32xf32, #tpu.memory_space<vmem>>, vector<2x32xf32>
      tpu.vector_store %arg4[%c0_123, %c0_124], %328 {strides = array<i32>} : memref<2x32xf32, #tpu.memory_space<vmem>>, vector<2x32xf32>,
      %cst_125 = arith.constant 0.000000e+00 : f32
      %330 = vector.broadcast %cst_125 : f32 to vector<2x32xf32>
      %c0_126 = arith.constant 0 : index
      %c0_127 = arith.constant 0 : index
      %331 = vector.load %arg5[%c0_126, %c0_127] : memref<2x32xf32, #tpu.memory_space<vmem>>, vector<2x32xf32>
      tpu.vector_store %arg5[%c0_126, %c0_127], %330 {strides = array<i32>} : memref<2x32xf32, #tpu.memory_space<vmem>>, vector<2x32xf32>,
    } else {
    }
    %c0 = arith.constant 0 : index
    %c0_1 = arith.constant 0 : index
    %3 = vector.load %arg2[%c0, %c0_1] : memref<32x128xf32, #tpu.memory_space<vmem>>, vector<32x128xf32>
    %c0_2 = arith.constant 0 : index
    %c0_3 = arith.constant 0 : index
    %4 = vector.load %arg4[%c0_2, %c0_3] : memref<2x32xf32, #tpu.memory_space<vmem>>, vector<2x32xf32>
    %c0_4 = arith.constant 0 : index
    %c0_5 = arith.constant 0 : index
    %5 = vector.load %arg5[%c0_4, %c0_5] : memref<2x32xf32, #tpu.memory_space<vmem>>, vector<2x32xf32>
    %c0_i32_6 = arith.constant 0 : i32
    %6 = arith.index_cast %c0_i32_6 : i32 to index
    %c0_7 = arith.constant 0 : index
    %c0_8 = arith.constant 0 : index
    %7 = vector.load %arg1[%6, %c0_7, %c0_8] : memref<8x2x128xf32, #tpu.memory_space<vmem>>, vector<1x2x128xf32>
    %8 = vector.shape_cast %7 : vector<1x2x128xf32> to vector<2x128xf32>
    %cst = arith.constant dense<0.000000e+00> : vector<2x128xf32>
    %9 = tpu.matmul %4, %3, %cst {dimension_numbers = #tpu.dot_dimension_numbers<[1], [0], [0], [1], [0, 0, 1, 1], [], []>} : vector<2x32xf32>, vector<32x128xf32>, vector<2x128xf32> -> vector<2x128xf32>
    %10 = arith.addf %8, %9 : vector<2x128xf32>
    %11 = vector.extract_strided_slice %10 {offsets = [0, 0], sizes = [2, 32], strides = [1, 1]} : vector<2x128xf32> to vector<2x32xf32>
    %cst_9 = arith.constant 5.000000e-01 : f32
    %12 = vector.broadcast %cst_9 : f32 to vector<2x32xf32>
    %13 = arith.mulf %12, %11 : vector<2x32xf32>
    %14 = math.tanh %13 : vector<2x32xf32>
    %cst_10 = arith.constant 5.000000e-01 : f32
    %15 = vector.broadcast %cst_10 : f32 to vector<2x32xf32>
    %16 = arith.mulf %15, %14 : vector<2x32xf32>
    %cst_11 = arith.constant 5.000000e-01 : f32
    %17 = vector.broadcast %cst_11 : f32 to vector<2x32xf32>
    %18 = arith.addf %16, %17 : vector<2x32xf32>
    %19 = vector.extract_strided_slice %10 {offsets = [0, 32], sizes = [2, 32], strides = [1, 1]} : vector<2x128xf32> to vector<2x32xf32>
    %cst_12 = arith.constant 5.000000e-01 : f32
    %20 = vector.broadcast %cst_12 : f32 to vector<2x32xf32>
    %21 = arith.mulf %20, %19 : vector<2x32xf32>
    %22 = math.tanh %21 : vector<2x32xf32>
    %cst_13 = arith.constant 5.000000e-01 : f32
    %23 = vector.broadcast %cst_13 : f32 to vector<2x32xf32>
    %24 = arith.mulf %23, %22 : vector<2x32xf32>
    %cst_14 = arith.constant 5.000000e-01 : f32
    %25 = vector.broadcast %cst_14 : f32 to vector<2x32xf32>
    %26 = arith.addf %24, %25 : vector<2x32xf32>
    %27 = vector.extract_strided_slice %10 {offsets = [0, 64], sizes = [2, 32], strides = [1, 1]} : vector<2x128xf32> to vector<2x32xf32>
    %28 = math.tanh %27 : vector<2x32xf32>
    %29 = vector.extract_strided_slice %10 {offsets = [0, 96], sizes = [2, 32], strides = [1, 1]} : vector<2x128xf32> to vector<2x32xf32>
    %cst_15 = arith.constant 5.000000e-01 : f32
    %30 = vector.broadcast %cst_15 : f32 to vector<2x32xf32>
    %31 = arith.mulf %30, %29 : vector<2x32xf32>
    %32 = math.tanh %31 : vector<2x32xf32>
    %cst_16 = arith.constant 5.000000e-01 : f32
    %33 = vector.broadcast %cst_16 : f32 to vector<2x32xf32>
    %34 = arith.mulf %33, %32 : vector<2x32xf32>
    %cst_17 = arith.constant 5.000000e-01 : f32
    %35 = vector.broadcast %cst_17 : f32 to vector<2x32xf32>
    %36 = arith.addf %34, %35 : vector<2x32xf32>
    %37 = arith.mulf %26, %5 : vector<2x32xf32>
    %38 = arith.mulf %18, %28 : vector<2x32xf32>
    %39 = arith.addf %37, %38 : vector<2x32xf32>
    %40 = math.tanh %39 : vector<2x32xf32>
    %41 = arith.mulf %36, %40 : vector<2x32xf32>
    %42 = arith.index_cast %c0_i32_6 : i32 to index
    %c0_18 = arith.constant 0 : index
    %c0_19 = arith.constant 0 : index
    %43 = vector.load %arg3[%42, %c0_18, %c0_19] : memref<8x2x32xf32, #tpu.memory_space<vmem>>, vector<1x2x32xf32>
    %44 = vector.shape_cast %43 : vector<1x2x32xf32> to vector<2x32xf32>
    %45 = vector.shape_cast %41 : vector<2x32xf32> to vector<1x2x32xf32>
    tpu.vector_store %arg3[%42, %c0_18, %c0_19], %45 {strides = array<i32>} : memref<8x2x32xf32, #tpu.memory_space<vmem>>, vector<1x2x32xf32>,
    %c1_i32 = arith.constant 1 : i32
    %46 = arith.index_cast %c1_i32 : i32 to index
    %c0_20 = arith.constant 0 : index
    %c0_21 = arith.constant 0 : index
    %47 = vector.load %arg1[%46, %c0_20, %c0_21] : memref<8x2x128xf32, #tpu.memory_space<vmem>>, vector<1x2x128xf32>
    %48 = vector.shape_cast %47 : vector<1x2x128xf32> to vector<2x128xf32>
    %cst_22 = arith.constant dense<0.000000e+00> : vector<2x128xf32>
    %49 = tpu.matmul %41, %3, %cst_22 {dimension_numbers = #tpu.dot_dimension_numbers<[1], [0], [0], [1], [0, 0, 1, 1], [], []>} : vector<2x32xf32>, vector<32x128xf32>, vector<2x128xf32> -> vector<2x128xf32>
    %50 = arith.addf %48, %49 : vector<2x128xf32>
    %51 = vector.extract_strided_slice %50 {offsets = [0, 0], sizes = [2, 32], strides = [1, 1]} : vector<2x128xf32> to vector<2x32xf32>
    %cst_23 = arith.constant 5.000000e-01 : f32
    %52 = vector.broadcast %cst_23 : f32 to vector<2x32xf32>
    %53 = arith.mulf %52, %51 : vector<2x32xf32>
    %54 = math.tanh %53 : vector<2x32xf32>
    %cst_24 = arith.constant 5.000000e-01 : f32
    %55 = vector.broadcast %cst_24 : f32 to vector<2x32xf32>
    %56 = arith.mulf %55, %54 : vector<2x32xf32>
    %cst_25 = arith.constant 5.000000e-01 : f32
    %57 = vector.broadcast %cst_25 : f32 to vector<2x32xf32>
    %58 = arith.addf %56, %57 : vector<2x32xf32>
    %59 = vector.extract_strided_slice %50 {offsets = [0, 32], sizes = [2, 32], strides = [1, 1]} : vector<2x128xf32> to vector<2x32xf32>
    %cst_26 = arith.constant 5.000000e-01 : f32
    %60 = vector.broadcast %cst_26 : f32 to vector<2x32xf32>
    %61 = arith.mulf %60, %59 : vector<2x32xf32>
    %62 = math.tanh %61 : vector<2x32xf32>
    %cst_27 = arith.constant 5.000000e-01 : f32
    %63 = vector.broadcast %cst_27 : f32 to vector<2x32xf32>
    %64 = arith.mulf %63, %62 : vector<2x32xf32>
    %cst_28 = arith.constant 5.000000e-01 : f32
    %65 = vector.broadcast %cst_28 : f32 to vector<2x32xf32>
    %66 = arith.addf %64, %65 : vector<2x32xf32>
    %67 = vector.extract_strided_slice %50 {offsets = [0, 64], sizes = [2, 32], strides = [1, 1]} : vector<2x128xf32> to vector<2x32xf32>
    %68 = math.tanh %67 : vector<2x32xf32>
    %69 = vector.extract_strided_slice %50 {offsets = [0, 96], sizes = [2, 32], strides = [1, 1]} : vector<2x128xf32> to vector<2x32xf32>
    %cst_29 = arith.constant 5.000000e-01 : f32
    %70 = vector.broadcast %cst_29 : f32 to vector<2x32xf32>
    %71 = arith.mulf %70, %69 : vector<2x32xf32>
    %72 = math.tanh %71 : vector<2x32xf32>
    %cst_30 = arith.constant 5.000000e-01 : f32
    %73 = vector.broadcast %cst_30 : f32 to vector<2x32xf32>
    %74 = arith.mulf %73, %72 : vector<2x32xf32>
    %cst_31 = arith.constant 5.000000e-01 : f32
    %75 = vector.broadcast %cst_31 : f32 to vector<2x32xf32>
    %76 = arith.addf %74, %75 : vector<2x32xf32>
    %77 = arith.mulf %66, %39 : vector<2x32xf32>
    %78 = arith.mulf %58, %68 : vector<2x32xf32>
    %79 = arith.addf %77, %78 : vector<2x32xf32>
    %80 = math.tanh %79 : vector<2x32xf32>
    %81 = arith.mulf %76, %80 : vector<2x32xf32>
    %82 = arith.index_cast %c1_i32 : i32 to index
    %c0_32 = arith.constant 0 : index
    %c0_33 = arith.constant 0 : index
    %83 = vector.load %arg3[%82, %c0_32, %c0_33] : memref<8x2x32xf32, #tpu.memory_space<vmem>>, vector<1x2x32xf32>
    %84 = vector.shape_cast %83 : vector<1x2x32xf32> to vector<2x32xf32>
    %85 = vector.shape_cast %81 : vector<2x32xf32> to vector<1x2x32xf32>
    tpu.vector_store %arg3[%82, %c0_32, %c0_33], %85 {strides = array<i32>} : memref<8x2x32xf32, #tpu.memory_space<vmem>>, vector<1x2x32xf32>,
    %c2_i32 = arith.constant 2 : i32
    %86 = arith.index_cast %c2_i32 : i32 to index
    %c0_34 = arith.constant 0 : index
    %c0_35 = arith.constant 0 : index
    %87 = vector.load %arg1[%86, %c0_34, %c0_35] : memref<8x2x128xf32, #tpu.memory_space<vmem>>, vector<1x2x128xf32>
    %88 = vector.shape_cast %87 : vector<1x2x128xf32> to vector<2x128xf32>
    %cst_36 = arith.constant dense<0.000000e+00> : vector<2x128xf32>
    %89 = tpu.matmul %81, %3, %cst_36 {dimension_numbers = #tpu.dot_dimension_numbers<[1], [0], [0], [1], [0, 0, 1, 1], [], []>} : vector<2x32xf32>, vector<32x128xf32>, vector<2x128xf32> -> vector<2x128xf32>
    %90 = arith.addf %88, %89 : vector<2x128xf32>
    %91 = vector.extract_strided_slice %90 {offsets = [0, 0], sizes = [2, 32], strides = [1, 1]} : vector<2x128xf32> to vector<2x32xf32>
    %cst_37 = arith.constant 5.000000e-01 : f32
    %92 = vector.broadcast %cst_37 : f32 to vector<2x32xf32>
    %93 = arith.mulf %92, %91 : vector<2x32xf32>
    %94 = math.tanh %93 : vector<2x32xf32>
    %cst_38 = arith.constant 5.000000e-01 : f32
    %95 = vector.broadcast %cst_38 : f32 to vector<2x32xf32>
    %96 = arith.mulf %95, %94 : vector<2x32xf32>
    %cst_39 = arith.constant 5.000000e-01 : f32
    %97 = vector.broadcast %cst_39 : f32 to vector<2x32xf32>
    %98 = arith.addf %96, %97 : vector<2x32xf32>
    %99 = vector.extract_strided_slice %90 {offsets = [0, 32], sizes = [2, 32], strides = [1, 1]} : vector<2x128xf32> to vector<2x32xf32>
    %cst_40 = arith.constant 5.000000e-01 : f32
    %100 = vector.broadcast %cst_40 : f32 to vector<2x32xf32>
    %101 = arith.mulf %100, %99 : vector<2x32xf32>
    %102 = math.tanh %101 : vector<2x32xf32>
    %cst_41 = arith.constant 5.000000e-01 : f32
    %103 = vector.broadcast %cst_41 : f32 to vector<2x32xf32>
    %104 = arith.mulf %103, %102 : vector<2x32xf32>
    %cst_42 = arith.constant 5.000000e-01 : f32
    %105 = vector.broadcast %cst_42 : f32 to vector<2x32xf32>
    %106 = arith.addf %104, %105 : vector<2x32xf32>
    %107 = vector.extract_strided_slice %90 {offsets = [0, 64], sizes = [2, 32], strides = [1, 1]} : vector<2x128xf32> to vector<2x32xf32>
    %108 = math.tanh %107 : vector<2x32xf32>
    %109 = vector.extract_strided_slice %90 {offsets = [0, 96], sizes = [2, 32], strides = [1, 1]} : vector<2x128xf32> to vector<2x32xf32>
    %cst_43 = arith.constant 5.000000e-01 : f32
    %110 = vector.broadcast %cst_43 : f32 to vector<2x32xf32>
    %111 = arith.mulf %110, %109 : vector<2x32xf32>
    %112 = math.tanh %111 : vector<2x32xf32>
    %cst_44 = arith.constant 5.000000e-01 : f32
    %113 = vector.broadcast %cst_44 : f32 to vector<2x32xf32>
    %114 = arith.mulf %113, %112 : vector<2x32xf32>
    %cst_45 = arith.constant 5.000000e-01 : f32
    %115 = vector.broadcast %cst_45 : f32 to vector<2x32xf32>
    %116 = arith.addf %114, %115 : vector<2x32xf32>
    %117 = arith.mulf %106, %79 : vector<2x32xf32>
    %118 = arith.mulf %98, %108 : vector<2x32xf32>
    %119 = arith.addf %117, %118 : vector<2x32xf32>
    %120 = math.tanh %119 : vector<2x32xf32>
    %121 = arith.mulf %116, %120 : vector<2x32xf32>
    %122 = arith.index_cast %c2_i32 : i32 to index
    %c0_46 = arith.constant 0 : index
    %c0_47 = arith.constant 0 : index
    %123 = vector.load %arg3[%122, %c0_46, %c0_47] : memref<8x2x32xf32, #tpu.memory_space<vmem>>, vector<1x2x32xf32>
    %124 = vector.shape_cast %123 : vector<1x2x32xf32> to vector<2x32xf32>
    %125 = vector.shape_cast %121 : vector<2x32xf32> to vector<1x2x32xf32>
    tpu.vector_store %arg3[%122, %c0_46, %c0_47], %125 {strides = array<i32>} : memref<8x2x32xf32, #tpu.memory_space<vmem>>, vector<1x2x32xf32>,
    %c3_i32 = arith.constant 3 : i32
    %126 = arith.index_cast %c3_i32 : i32 to index
    %c0_48 = arith.constant 0 : index
    %c0_49 = arith.constant 0 : index
    %127 = vector.load %arg1[%126, %c0_48, %c0_49] : memref<8x2x128xf32, #tpu.memory_space<vmem>>, vector<1x2x128xf32>
    %128 = vector.shape_cast %127 : vector<1x2x128xf32> to vector<2x128xf32>
    %cst_50 = arith.constant dense<0.000000e+00> : vector<2x128xf32>
    %129 = tpu.matmul %121, %3, %cst_50 {dimension_numbers = #tpu.dot_dimension_numbers<[1], [0], [0], [1], [0, 0, 1, 1], [], []>} : vector<2x32xf32>, vector<32x128xf32>, vector<2x128xf32> -> vector<2x128xf32>
    %130 = arith.addf %128, %129 : vector<2x128xf32>
    %131 = vector.extract_strided_slice %130 {offsets = [0, 0], sizes = [2, 32], strides = [1, 1]} : vector<2x128xf32> to vector<2x32xf32>
    %cst_51 = arith.constant 5.000000e-01 : f32
    %132 = vector.broadcast %cst_51 : f32 to vector<2x32xf32>
    %133 = arith.mulf %132, %131 : vector<2x32xf32>
    %134 = math.tanh %133 : vector<2x32xf32>
    %cst_52 = arith.constant 5.000000e-01 : f32
    %135 = vector.broadcast %cst_52 : f32 to vector<2x32xf32>
    %136 = arith.mulf %135, %134 : vector<2x32xf32>
    %cst_53 = arith.constant 5.000000e-01 : f32
    %137 = vector.broadcast %cst_53 : f32 to vector<2x32xf32>
    %138 = arith.addf %136, %137 : vector<2x32xf32>
    %139 = vector.extract_strided_slice %130 {offsets = [0, 32], sizes = [2, 32], strides = [1, 1]} : vector<2x128xf32> to vector<2x32xf32>
    %cst_54 = arith.constant 5.000000e-01 : f32
    %140 = vector.broadcast %cst_54 : f32 to vector<2x32xf32>
    %141 = arith.mulf %140, %139 : vector<2x32xf32>
    %142 = math.tanh %141 : vector<2x32xf32>
    %cst_55 = arith.constant 5.000000e-01 : f32
    %143 = vector.broadcast %cst_55 : f32 to vector<2x32xf32>
    %144 = arith.mulf %143, %142 : vector<2x32xf32>
    %cst_56 = arith.constant 5.000000e-01 : f32
    %145 = vector.broadcast %cst_56 : f32 to vector<2x32xf32>
    %146 = arith.addf %144, %145 : vector<2x32xf32>
    %147 = vector.extract_strided_slice %130 {offsets = [0, 64], sizes = [2, 32], strides = [1, 1]} : vector<2x128xf32> to vector<2x32xf32>
    %148 = math.tanh %147 : vector<2x32xf32>
    %149 = vector.extract_strided_slice %130 {offsets = [0, 96], sizes = [2, 32], strides = [1, 1]} : vector<2x128xf32> to vector<2x32xf32>
    %cst_57 = arith.constant 5.000000e-01 : f32
    %150 = vector.broadcast %cst_57 : f32 to vector<2x32xf32>
    %151 = arith.mulf %150, %149 : vector<2x32xf32>
    %152 = math.tanh %151 : vector<2x32xf32>
    %cst_58 = arith.constant 5.000000e-01 : f32
    %153 = vector.broadcast %cst_58 : f32 to vector<2x32xf32>
    %154 = arith.mulf %153, %152 : vector<2x32xf32>
    %cst_59 = arith.constant 5.000000e-01 : f32
    %155 = vector.broadcast %cst_59 : f32 to vector<2x32xf32>
    %156 = arith.addf %154, %155 : vector<2x32xf32>
    %157 = arith.mulf %146, %119 : vector<2x32xf32>
    %158 = arith.mulf %138, %148 : vector<2x32xf32>
    %159 = arith.addf %157, %158 : vector<2x32xf32>
    %160 = math.tanh %159 : vector<2x32xf32>
    %161 = arith.mulf %156, %160 : vector<2x32xf32>
    %162 = arith.index_cast %c3_i32 : i32 to index
    %c0_60 = arith.constant 0 : index
    %c0_61 = arith.constant 0 : index
    %163 = vector.load %arg3[%162, %c0_60, %c0_61] : memref<8x2x32xf32, #tpu.memory_space<vmem>>, vector<1x2x32xf32>
    %164 = vector.shape_cast %163 : vector<1x2x32xf32> to vector<2x32xf32>
    %165 = vector.shape_cast %161 : vector<2x32xf32> to vector<1x2x32xf32>
    tpu.vector_store %arg3[%162, %c0_60, %c0_61], %165 {strides = array<i32>} : memref<8x2x32xf32, #tpu.memory_space<vmem>>, vector<1x2x32xf32>,
    %c4_i32 = arith.constant 4 : i32
    %166 = arith.index_cast %c4_i32 : i32 to index
    %c0_62 = arith.constant 0 : index
    %c0_63 = arith.constant 0 : index
    %167 = vector.load %arg1[%166, %c0_62, %c0_63] : memref<8x2x128xf32, #tpu.memory_space<vmem>>, vector<1x2x128xf32>
    %168 = vector.shape_cast %167 : vector<1x2x128xf32> to vector<2x128xf32>
    %cst_64 = arith.constant dense<0.000000e+00> : vector<2x128xf32>
    %169 = tpu.matmul %161, %3, %cst_64 {dimension_numbers = #tpu.dot_dimension_numbers<[1], [0], [0], [1], [0, 0, 1, 1], [], []>} : vector<2x32xf32>, vector<32x128xf32>, vector<2x128xf32> -> vector<2x128xf32>
    %170 = arith.addf %168, %169 : vector<2x128xf32>
    %171 = vector.extract_strided_slice %170 {offsets = [0, 0], sizes = [2, 32], strides = [1, 1]} : vector<2x128xf32> to vector<2x32xf32>
    %cst_65 = arith.constant 5.000000e-01 : f32
    %172 = vector.broadcast %cst_65 : f32 to vector<2x32xf32>
    %173 = arith.mulf %172, %171 : vector<2x32xf32>
    %174 = math.tanh %173 : vector<2x32xf32>
    %cst_66 = arith.constant 5.000000e-01 : f32
    %175 = vector.broadcast %cst_66 : f32 to vector<2x32xf32>
    %176 = arith.mulf %175, %174 : vector<2x32xf32>
    %cst_67 = arith.constant 5.000000e-01 : f32
    %177 = vector.broadcast %cst_67 : f32 to vector<2x32xf32>
    %178 = arith.addf %176, %177 : vector<2x32xf32>
    %179 = vector.extract_strided_slice %170 {offsets = [0, 32], sizes = [2, 32], strides = [1, 1]} : vector<2x128xf32> to vector<2x32xf32>
    %cst_68 = arith.constant 5.000000e-01 : f32
    %180 = vector.broadcast %cst_68 : f32 to vector<2x32xf32>
    %181 = arith.mulf %180, %179 : vector<2x32xf32>
    %182 = math.tanh %181 : vector<2x32xf32>
    %cst_69 = arith.constant 5.000000e-01 : f32
    %183 = vector.broadcast %cst_69 : f32 to vector<2x32xf32>
    %184 = arith.mulf %183, %182 : vector<2x32xf32>
    %cst_70 = arith.constant 5.000000e-01 : f32
    %185 = vector.broadcast %cst_70 : f32 to vector<2x32xf32>
    %186 = arith.addf %184, %185 : vector<2x32xf32>
    %187 = vector.extract_strided_slice %170 {offsets = [0, 64], sizes = [2, 32], strides = [1, 1]} : vector<2x128xf32> to vector<2x32xf32>
    %188 = math.tanh %187 : vector<2x32xf32>
    %189 = vector.extract_strided_slice %170 {offsets = [0, 96], sizes = [2, 32], strides = [1, 1]} : vector<2x128xf32> to vector<2x32xf32>
    %cst_71 = arith.constant 5.000000e-01 : f32
    %190 = vector.broadcast %cst_71 : f32 to vector<2x32xf32>
    %191 = arith.mulf %190, %189 : vector<2x32xf32>
    %192 = math.tanh %191 : vector<2x32xf32>
    %cst_72 = arith.constant 5.000000e-01 : f32
    %193 = vector.broadcast %cst_72 : f32 to vector<2x32xf32>
    %194 = arith.mulf %193, %192 : vector<2x32xf32>
    %cst_73 = arith.constant 5.000000e-01 : f32
    %195 = vector.broadcast %cst_73 : f32 to vector<2x32xf32>
    %196 = arith.addf %194, %195 : vector<2x32xf32>
    %197 = arith.mulf %186, %159 : vector<2x32xf32>
    %198 = arith.mulf %178, %188 : vector<2x32xf32>
    %199 = arith.addf %197, %198 : vector<2x32xf32>
    %200 = math.tanh %199 : vector<2x32xf32>
    %201 = arith.mulf %196, %200 : vector<2x32xf32>
    %202 = arith.index_cast %c4_i32 : i32 to index
    %c0_74 = arith.constant 0 : index
    %c0_75 = arith.constant 0 : index
    %203 = vector.load %arg3[%202, %c0_74, %c0_75] : memref<8x2x32xf32, #tpu.memory_space<vmem>>, vector<1x2x32xf32>
    %204 = vector.shape_cast %203 : vector<1x2x32xf32> to vector<2x32xf32>
    %205 = vector.shape_cast %201 : vector<2x32xf32> to vector<1x2x32xf32>
    tpu.vector_store %arg3[%202, %c0_74, %c0_75], %205 {strides = array<i32>} : memref<8x2x32xf32, #tpu.memory_space<vmem>>, vector<1x2x32xf32>,
    %c5_i32 = arith.constant 5 : i32
    %206 = arith.index_cast %c5_i32 : i32 to index
    %c0_76 = arith.constant 0 : index
    %c0_77 = arith.constant 0 : index
    %207 = vector.load %arg1[%206, %c0_76, %c0_77] : memref<8x2x128xf32, #tpu.memory_space<vmem>>, vector<1x2x128xf32>
    %208 = vector.shape_cast %207 : vector<1x2x128xf32> to vector<2x128xf32>
    %cst_78 = arith.constant dense<0.000000e+00> : vector<2x128xf32>
    %209 = tpu.matmul %201, %3, %cst_78 {dimension_numbers = #tpu.dot_dimension_numbers<[1], [0], [0], [1], [0, 0, 1, 1], [], []>} : vector<2x32xf32>, vector<32x128xf32>, vector<2x128xf32> -> vector<2x128xf32>
    %210 = arith.addf %208, %209 : vector<2x128xf32>
    %211 = vector.extract_strided_slice %210 {offsets = [0, 0], sizes = [2, 32], strides = [1, 1]} : vector<2x128xf32> to vector<2x32xf32>
    %cst_79 = arith.constant 5.000000e-01 : f32
    %212 = vector.broadcast %cst_79 : f32 to vector<2x32xf32>
    %213 = arith.mulf %212, %211 : vector<2x32xf32>
    %214 = math.tanh %213 : vector<2x32xf32>
    %cst_80 = arith.constant 5.000000e-01 : f32
    %215 = vector.broadcast %cst_80 : f32 to vector<2x32xf32>
    %216 = arith.mulf %215, %214 : vector<2x32xf32>
    %cst_81 = arith.constant 5.000000e-01 : f32
    %217 = vector.broadcast %cst_81 : f32 to vector<2x32xf32>
    %218 = arith.addf %216, %217 : vector<2x32xf32>
    %219 = vector.extract_strided_slice %210 {offsets = [0, 32], sizes = [2, 32], strides = [1, 1]} : vector<2x128xf32> to vector<2x32xf32>
    %cst_82 = arith.constant 5.000000e-01 : f32
    %220 = vector.broadcast %cst_82 : f32 to vector<2x32xf32>
    %221 = arith.mulf %220, %219 : vector<2x32xf32>
    %222 = math.tanh %221 : vector<2x32xf32>
    %cst_83 = arith.constant 5.000000e-01 : f32
    %223 = vector.broadcast %cst_83 : f32 to vector<2x32xf32>
    %224 = arith.mulf %223, %222 : vector<2x32xf32>
    %cst_84 = arith.constant 5.000000e-01 : f32
    %225 = vector.broadcast %cst_84 : f32 to vector<2x32xf32>
    %226 = arith.addf %224, %225 : vector<2x32xf32>
    %227 = vector.extract_strided_slice %210 {offsets = [0, 64], sizes = [2, 32], strides = [1, 1]} : vector<2x128xf32> to vector<2x32xf32>
    %228 = math.tanh %227 : vector<2x32xf32>
    %229 = vector.extract_strided_slice %210 {offsets = [0, 96], sizes = [2, 32], strides = [1, 1]} : vector<2x128xf32> to vector<2x32xf32>
    %cst_85 = arith.constant 5.000000e-01 : f32
    %230 = vector.broadcast %cst_85 : f32 to vector<2x32xf32>
    %231 = arith.mulf %230, %229 : vector<2x32xf32>
    %232 = math.tanh %231 : vector<2x32xf32>
    %cst_86 = arith.constant 5.000000e-01 : f32
    %233 = vector.broadcast %cst_86 : f32 to vector<2x32xf32>
    %234 = arith.mulf %233, %232 : vector<2x32xf32>
    %cst_87 = arith.constant 5.000000e-01 : f32
    %235 = vector.broadcast %cst_87 : f32 to vector<2x32xf32>
    %236 = arith.addf %234, %235 : vector<2x32xf32>
    %237 = arith.mulf %226, %199 : vector<2x32xf32>
    %238 = arith.mulf %218, %228 : vector<2x32xf32>
    %239 = arith.addf %237, %238 : vector<2x32xf32>
    %240 = math.tanh %239 : vector<2x32xf32>
    %241 = arith.mulf %236, %240 : vector<2x32xf32>
    %242 = arith.index_cast %c5_i32 : i32 to index
    %c0_88 = arith.constant 0 : index
    %c0_89 = arith.constant 0 : index
    %243 = vector.load %arg3[%242, %c0_88, %c0_89] : memref<8x2x32xf32, #tpu.memory_space<vmem>>, vector<1x2x32xf32>
    %244 = vector.shape_cast %243 : vector<1x2x32xf32> to vector<2x32xf32>
    %245 = vector.shape_cast %241 : vector<2x32xf32> to vector<1x2x32xf32>
    tpu.vector_store %arg3[%242, %c0_88, %c0_89], %245 {strides = array<i32>} : memref<8x2x32xf32, #tpu.memory_space<vmem>>, vector<1x2x32xf32>,
    %c6_i32 = arith.constant 6 : i32
    %246 = arith.index_cast %c6_i32 : i32 to index
    %c0_90 = arith.constant 0 : index
    %c0_91 = arith.constant 0 : index
    %247 = vector.load %arg1[%246, %c0_90, %c0_91] : memref<8x2x128xf32, #tpu.memory_space<vmem>>, vector<1x2x128xf32>
    %248 = vector.shape_cast %247 : vector<1x2x128xf32> to vector<2x128xf32>
    %cst_92 = arith.constant dense<0.000000e+00> : vector<2x128xf32>
    %249 = tpu.matmul %241, %3, %cst_92 {dimension_numbers = #tpu.dot_dimension_numbers<[1], [0], [0], [1], [0, 0, 1, 1], [], []>} : vector<2x32xf32>, vector<32x128xf32>, vector<2x128xf32> -> vector<2x128xf32>
    %250 = arith.addf %248, %249 : vector<2x128xf32>
    %251 = vector.extract_strided_slice %250 {offsets = [0, 0], sizes = [2, 32], strides = [1, 1]} : vector<2x128xf32> to vector<2x32xf32>
    %cst_93 = arith.constant 5.000000e-01 : f32
    %252 = vector.broadcast %cst_93 : f32 to vector<2x32xf32>
    %253 = arith.mulf %252, %251 : vector<2x32xf32>
    %254 = math.tanh %253 : vector<2x32xf32>
    %cst_94 = arith.constant 5.000000e-01 : f32
    %255 = vector.broadcast %cst_94 : f32 to vector<2x32xf32>
    %256 = arith.mulf %255, %254 : vector<2x32xf32>
    %cst_95 = arith.constant 5.000000e-01 : f32
    %257 = vector.broadcast %cst_95 : f32 to vector<2x32xf32>
    %258 = arith.addf %256, %257 : vector<2x32xf32>
    %259 = vector.extract_strided_slice %250 {offsets = [0, 32], sizes = [2, 32], strides = [1, 1]} : vector<2x128xf32> to vector<2x32xf32>
    %cst_96 = arith.constant 5.000000e-01 : f32
    %260 = vector.broadcast %cst_96 : f32 to vector<2x32xf32>
    %261 = arith.mulf %260, %259 : vector<2x32xf32>
    %262 = math.tanh %261 : vector<2x32xf32>
    %cst_97 = arith.constant 5.000000e-01 : f32
    %263 = vector.broadcast %cst_97 : f32 to vector<2x32xf32>
    %264 = arith.mulf %263, %262 : vector<2x32xf32>
    %cst_98 = arith.constant 5.000000e-01 : f32
    %265 = vector.broadcast %cst_98 : f32 to vector<2x32xf32>
    %266 = arith.addf %264, %265 : vector<2x32xf32>
    %267 = vector.extract_strided_slice %250 {offsets = [0, 64], sizes = [2, 32], strides = [1, 1]} : vector<2x128xf32> to vector<2x32xf32>
    %268 = math.tanh %267 : vector<2x32xf32>
    %269 = vector.extract_strided_slice %250 {offsets = [0, 96], sizes = [2, 32], strides = [1, 1]} : vector<2x128xf32> to vector<2x32xf32>
    %cst_99 = arith.constant 5.000000e-01 : f32
    %270 = vector.broadcast %cst_99 : f32 to vector<2x32xf32>
    %271 = arith.mulf %270, %269 : vector<2x32xf32>
    %272 = math.tanh %271 : vector<2x32xf32>
    %cst_100 = arith.constant 5.000000e-01 : f32
    %273 = vector.broadcast %cst_100 : f32 to vector<2x32xf32>
    %274 = arith.mulf %273, %272 : vector<2x32xf32>
    %cst_101 = arith.constant 5.000000e-01 : f32
    %275 = vector.broadcast %cst_101 : f32 to vector<2x32xf32>
    %276 = arith.addf %274, %275 : vector<2x32xf32>
    %277 = arith.mulf %266, %239 : vector<2x32xf32>
    %278 = arith.mulf %258, %268 : vector<2x32xf32>
    %279 = arith.addf %277, %278 : vector<2x32xf32>
    %280 = math.tanh %279 : vector<2x32xf32>
    %281 = arith.mulf %276, %280 : vector<2x32xf32>
    %282 = arith.index_cast %c6_i32 : i32 to index
    %c0_102 = arith.constant 0 : index
    %c0_103 = arith.constant 0 : index
    %283 = vector.load %arg3[%282, %c0_102, %c0_103] : memref<8x2x32xf32, #tpu.memory_space<vmem>>, vector<1x2x32xf32>
    %284 = vector.shape_cast %283 : vector<1x2x32xf32> to vector<2x32xf32>
    %285 = vector.shape_cast %281 : vector<2x32xf32> to vector<1x2x32xf32>
    tpu.vector_store %arg3[%282, %c0_102, %c0_103], %285 {strides = array<i32>} : memref<8x2x32xf32, #tpu.memory_space<vmem>>, vector<1x2x32xf32>,
    %c7_i32 = arith.constant 7 : i32
    %286 = arith.index_cast %c7_i32 : i32 to index
    %c0_104 = arith.constant 0 : index
    %c0_105 = arith.constant 0 : index
    %287 = vector.load %arg1[%286, %c0_104, %c0_105] : memref<8x2x128xf32, #tpu.memory_space<vmem>>, vector<1x2x128xf32>
    %288 = vector.shape_cast %287 : vector<1x2x128xf32> to vector<2x128xf32>
    %cst_106 = arith.constant dense<0.000000e+00> : vector<2x128xf32>
    %289 = tpu.matmul %281, %3, %cst_106 {dimension_numbers = #tpu.dot_dimension_numbers<[1], [0], [0], [1], [0, 0, 1, 1], [], []>} : vector<2x32xf32>, vector<32x128xf32>, vector<2x128xf32> -> vector<2x128xf32>
    %290 = arith.addf %288, %289 : vector<2x128xf32>
    %291 = vector.extract_strided_slice %290 {offsets = [0, 0], sizes = [2, 32], strides = [1, 1]} : vector<2x128xf32> to vector<2x32xf32>
    %cst_107 = arith.constant 5.000000e-01 : f32
    %292 = vector.broadcast %cst_107 : f32 to vector<2x32xf32>
    %293 = arith.mulf %292, %291 : vector<2x32xf32>
    %294 = math.tanh %293 : vector<2x32xf32>
    %cst_108 = arith.constant 5.000000e-01 : f32
    %295 = vector.broadcast %cst_108 : f32 to vector<2x32xf32>
    %296 = arith.mulf %295, %294 : vector<2x32xf32>
    %cst_109 = arith.constant 5.000000e-01 : f32
    %297 = vector.broadcast %cst_109 : f32 to vector<2x32xf32>
    %298 = arith.addf %296, %297 : vector<2x32xf32>
    %299 = vector.extract_strided_slice %290 {offsets = [0, 32], sizes = [2, 32], strides = [1, 1]} : vector<2x128xf32> to vector<2x32xf32>
    %cst_110 = arith.constant 5.000000e-01 : f32
    %300 = vector.broadcast %cst_110 : f32 to vector<2x32xf32>
    %301 = arith.mulf %300, %299 : vector<2x32xf32>
    %302 = math.tanh %301 : vector<2x32xf32>
    %cst_111 = arith.constant 5.000000e-01 : f32
    %303 = vector.broadcast %cst_111 : f32 to vector<2x32xf32>
    %304 = arith.mulf %303, %302 : vector<2x32xf32>
    %cst_112 = arith.constant 5.000000e-01 : f32
    %305 = vector.broadcast %cst_112 : f32 to vector<2x32xf32>
    %306 = arith.addf %304, %305 : vector<2x32xf32>
    %307 = vector.extract_strided_slice %290 {offsets = [0, 64], sizes = [2, 32], strides = [1, 1]} : vector<2x128xf32> to vector<2x32xf32>
    %308 = math.tanh %307 : vector<2x32xf32>
    %309 = vector.extract_strided_slice %290 {offsets = [0, 96], sizes = [2, 32], strides = [1, 1]} : vector<2x128xf32> to vector<2x32xf32>
    %cst_113 = arith.constant 5.000000e-01 : f32
    %310 = vector.broadcast %cst_113 : f32 to vector<2x32xf32>
    %311 = arith.mulf %310, %309 : vector<2x32xf32>
    %312 = math.tanh %311 : vector<2x32xf32>
    %cst_114 = arith.constant 5.000000e-01 : f32
    %313 = vector.broadcast %cst_114 : f32 to vector<2x32xf32>
    %314 = arith.mulf %313, %312 : vector<2x32xf32>
    %cst_115 = arith.constant 5.000000e-01 : f32
    %315 = vector.broadcast %cst_115 : f32 to vector<2x32xf32>
    %316 = arith.addf %314, %315 : vector<2x32xf32>
    %317 = arith.mulf %306, %279 : vector<2x32xf32>
    %318 = arith.mulf %298, %308 : vector<2x32xf32>
    %319 = arith.addf %317, %318 : vector<2x32xf32>
    %320 = math.tanh %319 : vector<2x32xf32>
    %321 = arith.mulf %316, %320 : vector<2x32xf32>
    %322 = arith.index_cast %c7_i32 : i32 to index
    %c0_116 = arith.constant 0 : index
    %c0_117 = arith.constant 0 : index
    %323 = vector.load %arg3[%322, %c0_116, %c0_117] : memref<8x2x32xf32, #tpu.memory_space<vmem>>, vector<1x2x32xf32>
    %324 = vector.shape_cast %323 : vector<1x2x32xf32> to vector<2x32xf32>
    %325 = vector.shape_cast %321 : vector<2x32xf32> to vector<1x2x32xf32>
    tpu.vector_store %arg3[%322, %c0_116, %c0_117], %325 {strides = array<i32>} : memref<8x2x32xf32, #tpu.memory_space<vmem>>, vector<1x2x32xf32>,
    %c8_i32 = arith.constant 8 : i32
    %c0_118 = arith.constant 0 : index
    %c0_119 = arith.constant 0 : index
    %326 = vector.load %arg4[%c0_118, %c0_119] : memref<2x32xf32, #tpu.memory_space<vmem>>, vector<2x32xf32>
    tpu.vector_store %arg4[%c0_118, %c0_119], %321 {strides = array<i32>} : memref<2x32xf32, #tpu.memory_space<vmem>>, vector<2x32xf32>,
    %c0_120 = arith.constant 0 : index
    %c0_121 = arith.constant 0 : index
    %327 = vector.load %arg5[%c0_120, %c0_121] : memref<2x32xf32, #tpu.memory_space<vmem>>, vector<2x32xf32>
    tpu.vector_store %arg5[%c0_120, %c0_121], %319 {strides = array<i32>} : memref<2x32xf32, #tpu.memory_space<vmem>>, vector<2x32xf32>,
    return
  }
  func.func @transform_0(%arg0: i32) -> (i32, i32, i32) {
    %c0_i32 = arith.constant 0 : i32
    %c0_i32_0 = arith.constant 0 : i32
    %c0_i32_1 = arith.constant 0 : i32
    return %arg0, %c0_i32, %c0_i32_0 : i32, i32, i32
  }
  func.func @transform_1(%arg0: i32) -> (i32, i32) {
    %c0_i32 = arith.constant 0 : i32
    %c0_i32_0 = arith.constant 0 : i32
    %c0_i32_1 = arith.constant 0 : i32
    return %c0_i32, %c0_i32_0 : i32, i32
  }
  func.func @transform_2(%arg0: i32) -> (i32, i32, i32) {
    %c0_i32 = arith.constant 0 : i32
    %c0_i32_0 = arith.constant 0 : i32
    %c0_i32_1 = arith.constant 0 : i32
    return %arg0, %c0_i32, %c0_i32_0 : i32, i32, i32
  }
}

module attributes {stable_mosaic.version = 11 : i64} {
  func.func @_lstm_scan_kernel(%arg0: i32, %arg1: memref<8x2x128xf32, #tpu.memory_space<vmem>>, %arg2: memref<32x128xf32, #tpu.memory_space<vmem>>, %arg3: memref<8x2x32xf32, #tpu.memory_space<vmem>>, %arg4: memref<2x32xf32, #tpu.memory_space<vmem>>, %arg5: memref<2x32xf32, #tpu.memory_space<vmem>>) attributes {dimension_semantics = [#tpu.dimension_semantics<arbitrary>], iteration_bounds = array<i64: 1>, scalar_prefetch = 0 : i64, scratch_operands = 2 : i64, tpu.core_type = #tpu.core_type<tc>, window_params = [{transform_indices = @transform_0, window_bounds = array<i64: 8, 2, 128>}, {pipeline_mode = #tpu.pipeline_mode<synchronous>, transform_indices = @transform_1, window_bounds = array<i64: 32, 128>}, {transform_indices = @transform_2, window_bounds = array<i64: 8, 2, 32>}]} {
    %c0_i32 = arith.constant 0 : i32
    %0 = arith.cmpi eq, %arg0, %c0_i32 : i32
    %1 = arith.extui %0 : i1 to i32
    %c0_i32_0 = arith.constant 0 : i32
    %2 = arith.cmpi ne, %1, %c0_i32_0 : i32
    scf.if %2 {
      %cst_130 = arith.constant 0.000000e+00 : f32
      %336 = vector.broadcast %cst_130 : f32 to vector<2x32xf32>
      %c0_131 = arith.constant 0 : index
      %c0_132 = arith.constant 0 : index
      %337 = vector.load %arg4[%c0_131, %c0_132] : memref<2x32xf32, #tpu.memory_space<vmem>>, vector<2x32xf32>
      tpu.vector_store %arg4[%c0_131, %c0_132], %336 {strides = array<i32>} : memref<2x32xf32, #tpu.memory_space<vmem>>, vector<2x32xf32>,
      %cst_133 = arith.constant 0.000000e+00 : f32
      %338 = vector.broadcast %cst_133 : f32 to vector<2x32xf32>
      %c0_134 = arith.constant 0 : index
      %c0_135 = arith.constant 0 : index
      %339 = vector.load %arg5[%c0_134, %c0_135] : memref<2x32xf32, #tpu.memory_space<vmem>>, vector<2x32xf32>
      tpu.vector_store %arg5[%c0_134, %c0_135], %338 {strides = array<i32>} : memref<2x32xf32, #tpu.memory_space<vmem>>, vector<2x32xf32>,
    } else {
    }
    %c0 = arith.constant 0 : index
    %c0_1 = arith.constant 0 : index
    %3 = vector.load %arg2[%c0, %c0_1] : memref<32x128xf32, #tpu.memory_space<vmem>>, vector<32x128xf32>
    %c0_2 = arith.constant 0 : index
    %c0_3 = arith.constant 0 : index
    %4 = vector.load %arg4[%c0_2, %c0_3] : memref<2x32xf32, #tpu.memory_space<vmem>>, vector<2x32xf32>
    %c0_4 = arith.constant 0 : index
    %c0_5 = arith.constant 0 : index
    %5 = vector.load %arg5[%c0_4, %c0_5] : memref<2x32xf32, #tpu.memory_space<vmem>>, vector<2x32xf32>
    %c0_i32_6 = arith.constant 0 : i32
    %c7_i32 = arith.constant 7 : i32
    %6 = arith.subi %c7_i32, %c0_i32_6 : i32
    %7 = arith.index_cast %6 : i32 to index
    %c0_7 = arith.constant 0 : index
    %c0_8 = arith.constant 0 : index
    %8 = vector.load %arg1[%7, %c0_7, %c0_8] : memref<8x2x128xf32, #tpu.memory_space<vmem>>, vector<1x2x128xf32>
    %9 = vector.shape_cast %8 : vector<1x2x128xf32> to vector<2x128xf32>
    %cst = arith.constant dense<0.000000e+00> : vector<2x128xf32>
    %10 = tpu.matmul %4, %3, %cst {dimension_numbers = #tpu.dot_dimension_numbers<[1], [0], [0], [1], [0, 0, 1, 1], [], []>} : vector<2x32xf32>, vector<32x128xf32>, vector<2x128xf32> -> vector<2x128xf32>
    %11 = arith.addf %9, %10 : vector<2x128xf32>
    %12 = vector.extract_strided_slice %11 {offsets = [0, 0], sizes = [2, 32], strides = [1, 1]} : vector<2x128xf32> to vector<2x32xf32>
    %cst_9 = arith.constant 5.000000e-01 : f32
    %13 = vector.broadcast %cst_9 : f32 to vector<2x32xf32>
    %14 = arith.mulf %13, %12 : vector<2x32xf32>
    %15 = math.tanh %14 : vector<2x32xf32>
    %cst_10 = arith.constant 5.000000e-01 : f32
    %16 = vector.broadcast %cst_10 : f32 to vector<2x32xf32>
    %17 = arith.mulf %16, %15 : vector<2x32xf32>
    %cst_11 = arith.constant 5.000000e-01 : f32
    %18 = vector.broadcast %cst_11 : f32 to vector<2x32xf32>
    %19 = arith.addf %17, %18 : vector<2x32xf32>
    %20 = vector.extract_strided_slice %11 {offsets = [0, 32], sizes = [2, 32], strides = [1, 1]} : vector<2x128xf32> to vector<2x32xf32>
    %cst_12 = arith.constant 5.000000e-01 : f32
    %21 = vector.broadcast %cst_12 : f32 to vector<2x32xf32>
    %22 = arith.mulf %21, %20 : vector<2x32xf32>
    %23 = math.tanh %22 : vector<2x32xf32>
    %cst_13 = arith.constant 5.000000e-01 : f32
    %24 = vector.broadcast %cst_13 : f32 to vector<2x32xf32>
    %25 = arith.mulf %24, %23 : vector<2x32xf32>
    %cst_14 = arith.constant 5.000000e-01 : f32
    %26 = vector.broadcast %cst_14 : f32 to vector<2x32xf32>
    %27 = arith.addf %25, %26 : vector<2x32xf32>
    %28 = vector.extract_strided_slice %11 {offsets = [0, 64], sizes = [2, 32], strides = [1, 1]} : vector<2x128xf32> to vector<2x32xf32>
    %29 = math.tanh %28 : vector<2x32xf32>
    %30 = vector.extract_strided_slice %11 {offsets = [0, 96], sizes = [2, 32], strides = [1, 1]} : vector<2x128xf32> to vector<2x32xf32>
    %cst_15 = arith.constant 5.000000e-01 : f32
    %31 = vector.broadcast %cst_15 : f32 to vector<2x32xf32>
    %32 = arith.mulf %31, %30 : vector<2x32xf32>
    %33 = math.tanh %32 : vector<2x32xf32>
    %cst_16 = arith.constant 5.000000e-01 : f32
    %34 = vector.broadcast %cst_16 : f32 to vector<2x32xf32>
    %35 = arith.mulf %34, %33 : vector<2x32xf32>
    %cst_17 = arith.constant 5.000000e-01 : f32
    %36 = vector.broadcast %cst_17 : f32 to vector<2x32xf32>
    %37 = arith.addf %35, %36 : vector<2x32xf32>
    %38 = arith.mulf %27, %5 : vector<2x32xf32>
    %39 = arith.mulf %19, %29 : vector<2x32xf32>
    %40 = arith.addf %38, %39 : vector<2x32xf32>
    %41 = math.tanh %40 : vector<2x32xf32>
    %42 = arith.mulf %37, %41 : vector<2x32xf32>
    %43 = arith.index_cast %6 : i32 to index
    %c0_18 = arith.constant 0 : index
    %c0_19 = arith.constant 0 : index
    %44 = vector.load %arg3[%43, %c0_18, %c0_19] : memref<8x2x32xf32, #tpu.memory_space<vmem>>, vector<1x2x32xf32>
    %45 = vector.shape_cast %44 : vector<1x2x32xf32> to vector<2x32xf32>
    %46 = vector.shape_cast %42 : vector<2x32xf32> to vector<1x2x32xf32>
    tpu.vector_store %arg3[%43, %c0_18, %c0_19], %46 {strides = array<i32>} : memref<8x2x32xf32, #tpu.memory_space<vmem>>, vector<1x2x32xf32>,
    %c1_i32 = arith.constant 1 : i32
    %c7_i32_20 = arith.constant 7 : i32
    %47 = arith.subi %c7_i32_20, %c1_i32 : i32
    %48 = arith.index_cast %47 : i32 to index
    %c0_21 = arith.constant 0 : index
    %c0_22 = arith.constant 0 : index
    %49 = vector.load %arg1[%48, %c0_21, %c0_22] : memref<8x2x128xf32, #tpu.memory_space<vmem>>, vector<1x2x128xf32>
    %50 = vector.shape_cast %49 : vector<1x2x128xf32> to vector<2x128xf32>
    %cst_23 = arith.constant dense<0.000000e+00> : vector<2x128xf32>
    %51 = tpu.matmul %42, %3, %cst_23 {dimension_numbers = #tpu.dot_dimension_numbers<[1], [0], [0], [1], [0, 0, 1, 1], [], []>} : vector<2x32xf32>, vector<32x128xf32>, vector<2x128xf32> -> vector<2x128xf32>
    %52 = arith.addf %50, %51 : vector<2x128xf32>
    %53 = vector.extract_strided_slice %52 {offsets = [0, 0], sizes = [2, 32], strides = [1, 1]} : vector<2x128xf32> to vector<2x32xf32>
    %cst_24 = arith.constant 5.000000e-01 : f32
    %54 = vector.broadcast %cst_24 : f32 to vector<2x32xf32>
    %55 = arith.mulf %54, %53 : vector<2x32xf32>
    %56 = math.tanh %55 : vector<2x32xf32>
    %cst_25 = arith.constant 5.000000e-01 : f32
    %57 = vector.broadcast %cst_25 : f32 to vector<2x32xf32>
    %58 = arith.mulf %57, %56 : vector<2x32xf32>
    %cst_26 = arith.constant 5.000000e-01 : f32
    %59 = vector.broadcast %cst_26 : f32 to vector<2x32xf32>
    %60 = arith.addf %58, %59 : vector<2x32xf32>
    %61 = vector.extract_strided_slice %52 {offsets = [0, 32], sizes = [2, 32], strides = [1, 1]} : vector<2x128xf32> to vector<2x32xf32>
    %cst_27 = arith.constant 5.000000e-01 : f32
    %62 = vector.broadcast %cst_27 : f32 to vector<2x32xf32>
    %63 = arith.mulf %62, %61 : vector<2x32xf32>
    %64 = math.tanh %63 : vector<2x32xf32>
    %cst_28 = arith.constant 5.000000e-01 : f32
    %65 = vector.broadcast %cst_28 : f32 to vector<2x32xf32>
    %66 = arith.mulf %65, %64 : vector<2x32xf32>
    %cst_29 = arith.constant 5.000000e-01 : f32
    %67 = vector.broadcast %cst_29 : f32 to vector<2x32xf32>
    %68 = arith.addf %66, %67 : vector<2x32xf32>
    %69 = vector.extract_strided_slice %52 {offsets = [0, 64], sizes = [2, 32], strides = [1, 1]} : vector<2x128xf32> to vector<2x32xf32>
    %70 = math.tanh %69 : vector<2x32xf32>
    %71 = vector.extract_strided_slice %52 {offsets = [0, 96], sizes = [2, 32], strides = [1, 1]} : vector<2x128xf32> to vector<2x32xf32>
    %cst_30 = arith.constant 5.000000e-01 : f32
    %72 = vector.broadcast %cst_30 : f32 to vector<2x32xf32>
    %73 = arith.mulf %72, %71 : vector<2x32xf32>
    %74 = math.tanh %73 : vector<2x32xf32>
    %cst_31 = arith.constant 5.000000e-01 : f32
    %75 = vector.broadcast %cst_31 : f32 to vector<2x32xf32>
    %76 = arith.mulf %75, %74 : vector<2x32xf32>
    %cst_32 = arith.constant 5.000000e-01 : f32
    %77 = vector.broadcast %cst_32 : f32 to vector<2x32xf32>
    %78 = arith.addf %76, %77 : vector<2x32xf32>
    %79 = arith.mulf %68, %40 : vector<2x32xf32>
    %80 = arith.mulf %60, %70 : vector<2x32xf32>
    %81 = arith.addf %79, %80 : vector<2x32xf32>
    %82 = math.tanh %81 : vector<2x32xf32>
    %83 = arith.mulf %78, %82 : vector<2x32xf32>
    %84 = arith.index_cast %47 : i32 to index
    %c0_33 = arith.constant 0 : index
    %c0_34 = arith.constant 0 : index
    %85 = vector.load %arg3[%84, %c0_33, %c0_34] : memref<8x2x32xf32, #tpu.memory_space<vmem>>, vector<1x2x32xf32>
    %86 = vector.shape_cast %85 : vector<1x2x32xf32> to vector<2x32xf32>
    %87 = vector.shape_cast %83 : vector<2x32xf32> to vector<1x2x32xf32>
    tpu.vector_store %arg3[%84, %c0_33, %c0_34], %87 {strides = array<i32>} : memref<8x2x32xf32, #tpu.memory_space<vmem>>, vector<1x2x32xf32>,
    %c2_i32 = arith.constant 2 : i32
    %c7_i32_35 = arith.constant 7 : i32
    %88 = arith.subi %c7_i32_35, %c2_i32 : i32
    %89 = arith.index_cast %88 : i32 to index
    %c0_36 = arith.constant 0 : index
    %c0_37 = arith.constant 0 : index
    %90 = vector.load %arg1[%89, %c0_36, %c0_37] : memref<8x2x128xf32, #tpu.memory_space<vmem>>, vector<1x2x128xf32>
    %91 = vector.shape_cast %90 : vector<1x2x128xf32> to vector<2x128xf32>
    %cst_38 = arith.constant dense<0.000000e+00> : vector<2x128xf32>
    %92 = tpu.matmul %83, %3, %cst_38 {dimension_numbers = #tpu.dot_dimension_numbers<[1], [0], [0], [1], [0, 0, 1, 1], [], []>} : vector<2x32xf32>, vector<32x128xf32>, vector<2x128xf32> -> vector<2x128xf32>
    %93 = arith.addf %91, %92 : vector<2x128xf32>
    %94 = vector.extract_strided_slice %93 {offsets = [0, 0], sizes = [2, 32], strides = [1, 1]} : vector<2x128xf32> to vector<2x32xf32>
    %cst_39 = arith.constant 5.000000e-01 : f32
    %95 = vector.broadcast %cst_39 : f32 to vector<2x32xf32>
    %96 = arith.mulf %95, %94 : vector<2x32xf32>
    %97 = math.tanh %96 : vector<2x32xf32>
    %cst_40 = arith.constant 5.000000e-01 : f32
    %98 = vector.broadcast %cst_40 : f32 to vector<2x32xf32>
    %99 = arith.mulf %98, %97 : vector<2x32xf32>
    %cst_41 = arith.constant 5.000000e-01 : f32
    %100 = vector.broadcast %cst_41 : f32 to vector<2x32xf32>
    %101 = arith.addf %99, %100 : vector<2x32xf32>
    %102 = vector.extract_strided_slice %93 {offsets = [0, 32], sizes = [2, 32], strides = [1, 1]} : vector<2x128xf32> to vector<2x32xf32>
    %cst_42 = arith.constant 5.000000e-01 : f32
    %103 = vector.broadcast %cst_42 : f32 to vector<2x32xf32>
    %104 = arith.mulf %103, %102 : vector<2x32xf32>
    %105 = math.tanh %104 : vector<2x32xf32>
    %cst_43 = arith.constant 5.000000e-01 : f32
    %106 = vector.broadcast %cst_43 : f32 to vector<2x32xf32>
    %107 = arith.mulf %106, %105 : vector<2x32xf32>
    %cst_44 = arith.constant 5.000000e-01 : f32
    %108 = vector.broadcast %cst_44 : f32 to vector<2x32xf32>
    %109 = arith.addf %107, %108 : vector<2x32xf32>
    %110 = vector.extract_strided_slice %93 {offsets = [0, 64], sizes = [2, 32], strides = [1, 1]} : vector<2x128xf32> to vector<2x32xf32>
    %111 = math.tanh %110 : vector<2x32xf32>
    %112 = vector.extract_strided_slice %93 {offsets = [0, 96], sizes = [2, 32], strides = [1, 1]} : vector<2x128xf32> to vector<2x32xf32>
    %cst_45 = arith.constant 5.000000e-01 : f32
    %113 = vector.broadcast %cst_45 : f32 to vector<2x32xf32>
    %114 = arith.mulf %113, %112 : vector<2x32xf32>
    %115 = math.tanh %114 : vector<2x32xf32>
    %cst_46 = arith.constant 5.000000e-01 : f32
    %116 = vector.broadcast %cst_46 : f32 to vector<2x32xf32>
    %117 = arith.mulf %116, %115 : vector<2x32xf32>
    %cst_47 = arith.constant 5.000000e-01 : f32
    %118 = vector.broadcast %cst_47 : f32 to vector<2x32xf32>
    %119 = arith.addf %117, %118 : vector<2x32xf32>
    %120 = arith.mulf %109, %81 : vector<2x32xf32>
    %121 = arith.mulf %101, %111 : vector<2x32xf32>
    %122 = arith.addf %120, %121 : vector<2x32xf32>
    %123 = math.tanh %122 : vector<2x32xf32>
    %124 = arith.mulf %119, %123 : vector<2x32xf32>
    %125 = arith.index_cast %88 : i32 to index
    %c0_48 = arith.constant 0 : index
    %c0_49 = arith.constant 0 : index
    %126 = vector.load %arg3[%125, %c0_48, %c0_49] : memref<8x2x32xf32, #tpu.memory_space<vmem>>, vector<1x2x32xf32>
    %127 = vector.shape_cast %126 : vector<1x2x32xf32> to vector<2x32xf32>
    %128 = vector.shape_cast %124 : vector<2x32xf32> to vector<1x2x32xf32>
    tpu.vector_store %arg3[%125, %c0_48, %c0_49], %128 {strides = array<i32>} : memref<8x2x32xf32, #tpu.memory_space<vmem>>, vector<1x2x32xf32>,
    %c3_i32 = arith.constant 3 : i32
    %c7_i32_50 = arith.constant 7 : i32
    %129 = arith.subi %c7_i32_50, %c3_i32 : i32
    %130 = arith.index_cast %129 : i32 to index
    %c0_51 = arith.constant 0 : index
    %c0_52 = arith.constant 0 : index
    %131 = vector.load %arg1[%130, %c0_51, %c0_52] : memref<8x2x128xf32, #tpu.memory_space<vmem>>, vector<1x2x128xf32>
    %132 = vector.shape_cast %131 : vector<1x2x128xf32> to vector<2x128xf32>
    %cst_53 = arith.constant dense<0.000000e+00> : vector<2x128xf32>
    %133 = tpu.matmul %124, %3, %cst_53 {dimension_numbers = #tpu.dot_dimension_numbers<[1], [0], [0], [1], [0, 0, 1, 1], [], []>} : vector<2x32xf32>, vector<32x128xf32>, vector<2x128xf32> -> vector<2x128xf32>
    %134 = arith.addf %132, %133 : vector<2x128xf32>
    %135 = vector.extract_strided_slice %134 {offsets = [0, 0], sizes = [2, 32], strides = [1, 1]} : vector<2x128xf32> to vector<2x32xf32>
    %cst_54 = arith.constant 5.000000e-01 : f32
    %136 = vector.broadcast %cst_54 : f32 to vector<2x32xf32>
    %137 = arith.mulf %136, %135 : vector<2x32xf32>
    %138 = math.tanh %137 : vector<2x32xf32>
    %cst_55 = arith.constant 5.000000e-01 : f32
    %139 = vector.broadcast %cst_55 : f32 to vector<2x32xf32>
    %140 = arith.mulf %139, %138 : vector<2x32xf32>
    %cst_56 = arith.constant 5.000000e-01 : f32
    %141 = vector.broadcast %cst_56 : f32 to vector<2x32xf32>
    %142 = arith.addf %140, %141 : vector<2x32xf32>
    %143 = vector.extract_strided_slice %134 {offsets = [0, 32], sizes = [2, 32], strides = [1, 1]} : vector<2x128xf32> to vector<2x32xf32>
    %cst_57 = arith.constant 5.000000e-01 : f32
    %144 = vector.broadcast %cst_57 : f32 to vector<2x32xf32>
    %145 = arith.mulf %144, %143 : vector<2x32xf32>
    %146 = math.tanh %145 : vector<2x32xf32>
    %cst_58 = arith.constant 5.000000e-01 : f32
    %147 = vector.broadcast %cst_58 : f32 to vector<2x32xf32>
    %148 = arith.mulf %147, %146 : vector<2x32xf32>
    %cst_59 = arith.constant 5.000000e-01 : f32
    %149 = vector.broadcast %cst_59 : f32 to vector<2x32xf32>
    %150 = arith.addf %148, %149 : vector<2x32xf32>
    %151 = vector.extract_strided_slice %134 {offsets = [0, 64], sizes = [2, 32], strides = [1, 1]} : vector<2x128xf32> to vector<2x32xf32>
    %152 = math.tanh %151 : vector<2x32xf32>
    %153 = vector.extract_strided_slice %134 {offsets = [0, 96], sizes = [2, 32], strides = [1, 1]} : vector<2x128xf32> to vector<2x32xf32>
    %cst_60 = arith.constant 5.000000e-01 : f32
    %154 = vector.broadcast %cst_60 : f32 to vector<2x32xf32>
    %155 = arith.mulf %154, %153 : vector<2x32xf32>
    %156 = math.tanh %155 : vector<2x32xf32>
    %cst_61 = arith.constant 5.000000e-01 : f32
    %157 = vector.broadcast %cst_61 : f32 to vector<2x32xf32>
    %158 = arith.mulf %157, %156 : vector<2x32xf32>
    %cst_62 = arith.constant 5.000000e-01 : f32
    %159 = vector.broadcast %cst_62 : f32 to vector<2x32xf32>
    %160 = arith.addf %158, %159 : vector<2x32xf32>
    %161 = arith.mulf %150, %122 : vector<2x32xf32>
    %162 = arith.mulf %142, %152 : vector<2x32xf32>
    %163 = arith.addf %161, %162 : vector<2x32xf32>
    %164 = math.tanh %163 : vector<2x32xf32>
    %165 = arith.mulf %160, %164 : vector<2x32xf32>
    %166 = arith.index_cast %129 : i32 to index
    %c0_63 = arith.constant 0 : index
    %c0_64 = arith.constant 0 : index
    %167 = vector.load %arg3[%166, %c0_63, %c0_64] : memref<8x2x32xf32, #tpu.memory_space<vmem>>, vector<1x2x32xf32>
    %168 = vector.shape_cast %167 : vector<1x2x32xf32> to vector<2x32xf32>
    %169 = vector.shape_cast %165 : vector<2x32xf32> to vector<1x2x32xf32>
    tpu.vector_store %arg3[%166, %c0_63, %c0_64], %169 {strides = array<i32>} : memref<8x2x32xf32, #tpu.memory_space<vmem>>, vector<1x2x32xf32>,
    %c4_i32 = arith.constant 4 : i32
    %c7_i32_65 = arith.constant 7 : i32
    %170 = arith.subi %c7_i32_65, %c4_i32 : i32
    %171 = arith.index_cast %170 : i32 to index
    %c0_66 = arith.constant 0 : index
    %c0_67 = arith.constant 0 : index
    %172 = vector.load %arg1[%171, %c0_66, %c0_67] : memref<8x2x128xf32, #tpu.memory_space<vmem>>, vector<1x2x128xf32>
    %173 = vector.shape_cast %172 : vector<1x2x128xf32> to vector<2x128xf32>
    %cst_68 = arith.constant dense<0.000000e+00> : vector<2x128xf32>
    %174 = tpu.matmul %165, %3, %cst_68 {dimension_numbers = #tpu.dot_dimension_numbers<[1], [0], [0], [1], [0, 0, 1, 1], [], []>} : vector<2x32xf32>, vector<32x128xf32>, vector<2x128xf32> -> vector<2x128xf32>
    %175 = arith.addf %173, %174 : vector<2x128xf32>
    %176 = vector.extract_strided_slice %175 {offsets = [0, 0], sizes = [2, 32], strides = [1, 1]} : vector<2x128xf32> to vector<2x32xf32>
    %cst_69 = arith.constant 5.000000e-01 : f32
    %177 = vector.broadcast %cst_69 : f32 to vector<2x32xf32>
    %178 = arith.mulf %177, %176 : vector<2x32xf32>
    %179 = math.tanh %178 : vector<2x32xf32>
    %cst_70 = arith.constant 5.000000e-01 : f32
    %180 = vector.broadcast %cst_70 : f32 to vector<2x32xf32>
    %181 = arith.mulf %180, %179 : vector<2x32xf32>
    %cst_71 = arith.constant 5.000000e-01 : f32
    %182 = vector.broadcast %cst_71 : f32 to vector<2x32xf32>
    %183 = arith.addf %181, %182 : vector<2x32xf32>
    %184 = vector.extract_strided_slice %175 {offsets = [0, 32], sizes = [2, 32], strides = [1, 1]} : vector<2x128xf32> to vector<2x32xf32>
    %cst_72 = arith.constant 5.000000e-01 : f32
    %185 = vector.broadcast %cst_72 : f32 to vector<2x32xf32>
    %186 = arith.mulf %185, %184 : vector<2x32xf32>
    %187 = math.tanh %186 : vector<2x32xf32>
    %cst_73 = arith.constant 5.000000e-01 : f32
    %188 = vector.broadcast %cst_73 : f32 to vector<2x32xf32>
    %189 = arith.mulf %188, %187 : vector<2x32xf32>
    %cst_74 = arith.constant 5.000000e-01 : f32
    %190 = vector.broadcast %cst_74 : f32 to vector<2x32xf32>
    %191 = arith.addf %189, %190 : vector<2x32xf32>
    %192 = vector.extract_strided_slice %175 {offsets = [0, 64], sizes = [2, 32], strides = [1, 1]} : vector<2x128xf32> to vector<2x32xf32>
    %193 = math.tanh %192 : vector<2x32xf32>
    %194 = vector.extract_strided_slice %175 {offsets = [0, 96], sizes = [2, 32], strides = [1, 1]} : vector<2x128xf32> to vector<2x32xf32>
    %cst_75 = arith.constant 5.000000e-01 : f32
    %195 = vector.broadcast %cst_75 : f32 to vector<2x32xf32>
    %196 = arith.mulf %195, %194 : vector<2x32xf32>
    %197 = math.tanh %196 : vector<2x32xf32>
    %cst_76 = arith.constant 5.000000e-01 : f32
    %198 = vector.broadcast %cst_76 : f32 to vector<2x32xf32>
    %199 = arith.mulf %198, %197 : vector<2x32xf32>
    %cst_77 = arith.constant 5.000000e-01 : f32
    %200 = vector.broadcast %cst_77 : f32 to vector<2x32xf32>
    %201 = arith.addf %199, %200 : vector<2x32xf32>
    %202 = arith.mulf %191, %163 : vector<2x32xf32>
    %203 = arith.mulf %183, %193 : vector<2x32xf32>
    %204 = arith.addf %202, %203 : vector<2x32xf32>
    %205 = math.tanh %204 : vector<2x32xf32>
    %206 = arith.mulf %201, %205 : vector<2x32xf32>
    %207 = arith.index_cast %170 : i32 to index
    %c0_78 = arith.constant 0 : index
    %c0_79 = arith.constant 0 : index
    %208 = vector.load %arg3[%207, %c0_78, %c0_79] : memref<8x2x32xf32, #tpu.memory_space<vmem>>, vector<1x2x32xf32>
    %209 = vector.shape_cast %208 : vector<1x2x32xf32> to vector<2x32xf32>
    %210 = vector.shape_cast %206 : vector<2x32xf32> to vector<1x2x32xf32>
    tpu.vector_store %arg3[%207, %c0_78, %c0_79], %210 {strides = array<i32>} : memref<8x2x32xf32, #tpu.memory_space<vmem>>, vector<1x2x32xf32>,
    %c5_i32 = arith.constant 5 : i32
    %c7_i32_80 = arith.constant 7 : i32
    %211 = arith.subi %c7_i32_80, %c5_i32 : i32
    %212 = arith.index_cast %211 : i32 to index
    %c0_81 = arith.constant 0 : index
    %c0_82 = arith.constant 0 : index
    %213 = vector.load %arg1[%212, %c0_81, %c0_82] : memref<8x2x128xf32, #tpu.memory_space<vmem>>, vector<1x2x128xf32>
    %214 = vector.shape_cast %213 : vector<1x2x128xf32> to vector<2x128xf32>
    %cst_83 = arith.constant dense<0.000000e+00> : vector<2x128xf32>
    %215 = tpu.matmul %206, %3, %cst_83 {dimension_numbers = #tpu.dot_dimension_numbers<[1], [0], [0], [1], [0, 0, 1, 1], [], []>} : vector<2x32xf32>, vector<32x128xf32>, vector<2x128xf32> -> vector<2x128xf32>
    %216 = arith.addf %214, %215 : vector<2x128xf32>
    %217 = vector.extract_strided_slice %216 {offsets = [0, 0], sizes = [2, 32], strides = [1, 1]} : vector<2x128xf32> to vector<2x32xf32>
    %cst_84 = arith.constant 5.000000e-01 : f32
    %218 = vector.broadcast %cst_84 : f32 to vector<2x32xf32>
    %219 = arith.mulf %218, %217 : vector<2x32xf32>
    %220 = math.tanh %219 : vector<2x32xf32>
    %cst_85 = arith.constant 5.000000e-01 : f32
    %221 = vector.broadcast %cst_85 : f32 to vector<2x32xf32>
    %222 = arith.mulf %221, %220 : vector<2x32xf32>
    %cst_86 = arith.constant 5.000000e-01 : f32
    %223 = vector.broadcast %cst_86 : f32 to vector<2x32xf32>
    %224 = arith.addf %222, %223 : vector<2x32xf32>
    %225 = vector.extract_strided_slice %216 {offsets = [0, 32], sizes = [2, 32], strides = [1, 1]} : vector<2x128xf32> to vector<2x32xf32>
    %cst_87 = arith.constant 5.000000e-01 : f32
    %226 = vector.broadcast %cst_87 : f32 to vector<2x32xf32>
    %227 = arith.mulf %226, %225 : vector<2x32xf32>
    %228 = math.tanh %227 : vector<2x32xf32>
    %cst_88 = arith.constant 5.000000e-01 : f32
    %229 = vector.broadcast %cst_88 : f32 to vector<2x32xf32>
    %230 = arith.mulf %229, %228 : vector<2x32xf32>
    %cst_89 = arith.constant 5.000000e-01 : f32
    %231 = vector.broadcast %cst_89 : f32 to vector<2x32xf32>
    %232 = arith.addf %230, %231 : vector<2x32xf32>
    %233 = vector.extract_strided_slice %216 {offsets = [0, 64], sizes = [2, 32], strides = [1, 1]} : vector<2x128xf32> to vector<2x32xf32>
    %234 = math.tanh %233 : vector<2x32xf32>
    %235 = vector.extract_strided_slice %216 {offsets = [0, 96], sizes = [2, 32], strides = [1, 1]} : vector<2x128xf32> to vector<2x32xf32>
    %cst_90 = arith.constant 5.000000e-01 : f32
    %236 = vector.broadcast %cst_90 : f32 to vector<2x32xf32>
    %237 = arith.mulf %236, %235 : vector<2x32xf32>
    %238 = math.tanh %237 : vector<2x32xf32>
    %cst_91 = arith.constant 5.000000e-01 : f32
    %239 = vector.broadcast %cst_91 : f32 to vector<2x32xf32>
    %240 = arith.mulf %239, %238 : vector<2x32xf32>
    %cst_92 = arith.constant 5.000000e-01 : f32
    %241 = vector.broadcast %cst_92 : f32 to vector<2x32xf32>
    %242 = arith.addf %240, %241 : vector<2x32xf32>
    %243 = arith.mulf %232, %204 : vector<2x32xf32>
    %244 = arith.mulf %224, %234 : vector<2x32xf32>
    %245 = arith.addf %243, %244 : vector<2x32xf32>
    %246 = math.tanh %245 : vector<2x32xf32>
    %247 = arith.mulf %242, %246 : vector<2x32xf32>
    %248 = arith.index_cast %211 : i32 to index
    %c0_93 = arith.constant 0 : index
    %c0_94 = arith.constant 0 : index
    %249 = vector.load %arg3[%248, %c0_93, %c0_94] : memref<8x2x32xf32, #tpu.memory_space<vmem>>, vector<1x2x32xf32>
    %250 = vector.shape_cast %249 : vector<1x2x32xf32> to vector<2x32xf32>
    %251 = vector.shape_cast %247 : vector<2x32xf32> to vector<1x2x32xf32>
    tpu.vector_store %arg3[%248, %c0_93, %c0_94], %251 {strides = array<i32>} : memref<8x2x32xf32, #tpu.memory_space<vmem>>, vector<1x2x32xf32>,
    %c6_i32 = arith.constant 6 : i32
    %c7_i32_95 = arith.constant 7 : i32
    %252 = arith.subi %c7_i32_95, %c6_i32 : i32
    %253 = arith.index_cast %252 : i32 to index
    %c0_96 = arith.constant 0 : index
    %c0_97 = arith.constant 0 : index
    %254 = vector.load %arg1[%253, %c0_96, %c0_97] : memref<8x2x128xf32, #tpu.memory_space<vmem>>, vector<1x2x128xf32>
    %255 = vector.shape_cast %254 : vector<1x2x128xf32> to vector<2x128xf32>
    %cst_98 = arith.constant dense<0.000000e+00> : vector<2x128xf32>
    %256 = tpu.matmul %247, %3, %cst_98 {dimension_numbers = #tpu.dot_dimension_numbers<[1], [0], [0], [1], [0, 0, 1, 1], [], []>} : vector<2x32xf32>, vector<32x128xf32>, vector<2x128xf32> -> vector<2x128xf32>
    %257 = arith.addf %255, %256 : vector<2x128xf32>
    %258 = vector.extract_strided_slice %257 {offsets = [0, 0], sizes = [2, 32], strides = [1, 1]} : vector<2x128xf32> to vector<2x32xf32>
    %cst_99 = arith.constant 5.000000e-01 : f32
    %259 = vector.broadcast %cst_99 : f32 to vector<2x32xf32>
    %260 = arith.mulf %259, %258 : vector<2x32xf32>
    %261 = math.tanh %260 : vector<2x32xf32>
    %cst_100 = arith.constant 5.000000e-01 : f32
    %262 = vector.broadcast %cst_100 : f32 to vector<2x32xf32>
    %263 = arith.mulf %262, %261 : vector<2x32xf32>
    %cst_101 = arith.constant 5.000000e-01 : f32
    %264 = vector.broadcast %cst_101 : f32 to vector<2x32xf32>
    %265 = arith.addf %263, %264 : vector<2x32xf32>
    %266 = vector.extract_strided_slice %257 {offsets = [0, 32], sizes = [2, 32], strides = [1, 1]} : vector<2x128xf32> to vector<2x32xf32>
    %cst_102 = arith.constant 5.000000e-01 : f32
    %267 = vector.broadcast %cst_102 : f32 to vector<2x32xf32>
    %268 = arith.mulf %267, %266 : vector<2x32xf32>
    %269 = math.tanh %268 : vector<2x32xf32>
    %cst_103 = arith.constant 5.000000e-01 : f32
    %270 = vector.broadcast %cst_103 : f32 to vector<2x32xf32>
    %271 = arith.mulf %270, %269 : vector<2x32xf32>
    %cst_104 = arith.constant 5.000000e-01 : f32
    %272 = vector.broadcast %cst_104 : f32 to vector<2x32xf32>
    %273 = arith.addf %271, %272 : vector<2x32xf32>
    %274 = vector.extract_strided_slice %257 {offsets = [0, 64], sizes = [2, 32], strides = [1, 1]} : vector<2x128xf32> to vector<2x32xf32>
    %275 = math.tanh %274 : vector<2x32xf32>
    %276 = vector.extract_strided_slice %257 {offsets = [0, 96], sizes = [2, 32], strides = [1, 1]} : vector<2x128xf32> to vector<2x32xf32>
    %cst_105 = arith.constant 5.000000e-01 : f32
    %277 = vector.broadcast %cst_105 : f32 to vector<2x32xf32>
    %278 = arith.mulf %277, %276 : vector<2x32xf32>
    %279 = math.tanh %278 : vector<2x32xf32>
    %cst_106 = arith.constant 5.000000e-01 : f32
    %280 = vector.broadcast %cst_106 : f32 to vector<2x32xf32>
    %281 = arith.mulf %280, %279 : vector<2x32xf32>
    %cst_107 = arith.constant 5.000000e-01 : f32
    %282 = vector.broadcast %cst_107 : f32 to vector<2x32xf32>
    %283 = arith.addf %281, %282 : vector<2x32xf32>
    %284 = arith.mulf %273, %245 : vector<2x32xf32>
    %285 = arith.mulf %265, %275 : vector<2x32xf32>
    %286 = arith.addf %284, %285 : vector<2x32xf32>
    %287 = math.tanh %286 : vector<2x32xf32>
    %288 = arith.mulf %283, %287 : vector<2x32xf32>
    %289 = arith.index_cast %252 : i32 to index
    %c0_108 = arith.constant 0 : index
    %c0_109 = arith.constant 0 : index
    %290 = vector.load %arg3[%289, %c0_108, %c0_109] : memref<8x2x32xf32, #tpu.memory_space<vmem>>, vector<1x2x32xf32>
    %291 = vector.shape_cast %290 : vector<1x2x32xf32> to vector<2x32xf32>
    %292 = vector.shape_cast %288 : vector<2x32xf32> to vector<1x2x32xf32>
    tpu.vector_store %arg3[%289, %c0_108, %c0_109], %292 {strides = array<i32>} : memref<8x2x32xf32, #tpu.memory_space<vmem>>, vector<1x2x32xf32>,
    %c7_i32_110 = arith.constant 7 : i32
    %c7_i32_111 = arith.constant 7 : i32
    %293 = arith.subi %c7_i32_111, %c7_i32_110 : i32
    %294 = arith.index_cast %293 : i32 to index
    %c0_112 = arith.constant 0 : index
    %c0_113 = arith.constant 0 : index
    %295 = vector.load %arg1[%294, %c0_112, %c0_113] : memref<8x2x128xf32, #tpu.memory_space<vmem>>, vector<1x2x128xf32>
    %296 = vector.shape_cast %295 : vector<1x2x128xf32> to vector<2x128xf32>
    %cst_114 = arith.constant dense<0.000000e+00> : vector<2x128xf32>
    %297 = tpu.matmul %288, %3, %cst_114 {dimension_numbers = #tpu.dot_dimension_numbers<[1], [0], [0], [1], [0, 0, 1, 1], [], []>} : vector<2x32xf32>, vector<32x128xf32>, vector<2x128xf32> -> vector<2x128xf32>
    %298 = arith.addf %296, %297 : vector<2x128xf32>
    %299 = vector.extract_strided_slice %298 {offsets = [0, 0], sizes = [2, 32], strides = [1, 1]} : vector<2x128xf32> to vector<2x32xf32>
    %cst_115 = arith.constant 5.000000e-01 : f32
    %300 = vector.broadcast %cst_115 : f32 to vector<2x32xf32>
    %301 = arith.mulf %300, %299 : vector<2x32xf32>
    %302 = math.tanh %301 : vector<2x32xf32>
    %cst_116 = arith.constant 5.000000e-01 : f32
    %303 = vector.broadcast %cst_116 : f32 to vector<2x32xf32>
    %304 = arith.mulf %303, %302 : vector<2x32xf32>
    %cst_117 = arith.constant 5.000000e-01 : f32
    %305 = vector.broadcast %cst_117 : f32 to vector<2x32xf32>
    %306 = arith.addf %304, %305 : vector<2x32xf32>
    %307 = vector.extract_strided_slice %298 {offsets = [0, 32], sizes = [2, 32], strides = [1, 1]} : vector<2x128xf32> to vector<2x32xf32>
    %cst_118 = arith.constant 5.000000e-01 : f32
    %308 = vector.broadcast %cst_118 : f32 to vector<2x32xf32>
    %309 = arith.mulf %308, %307 : vector<2x32xf32>
    %310 = math.tanh %309 : vector<2x32xf32>
    %cst_119 = arith.constant 5.000000e-01 : f32
    %311 = vector.broadcast %cst_119 : f32 to vector<2x32xf32>
    %312 = arith.mulf %311, %310 : vector<2x32xf32>
    %cst_120 = arith.constant 5.000000e-01 : f32
    %313 = vector.broadcast %cst_120 : f32 to vector<2x32xf32>
    %314 = arith.addf %312, %313 : vector<2x32xf32>
    %315 = vector.extract_strided_slice %298 {offsets = [0, 64], sizes = [2, 32], strides = [1, 1]} : vector<2x128xf32> to vector<2x32xf32>
    %316 = math.tanh %315 : vector<2x32xf32>
    %317 = vector.extract_strided_slice %298 {offsets = [0, 96], sizes = [2, 32], strides = [1, 1]} : vector<2x128xf32> to vector<2x32xf32>
    %cst_121 = arith.constant 5.000000e-01 : f32
    %318 = vector.broadcast %cst_121 : f32 to vector<2x32xf32>
    %319 = arith.mulf %318, %317 : vector<2x32xf32>
    %320 = math.tanh %319 : vector<2x32xf32>
    %cst_122 = arith.constant 5.000000e-01 : f32
    %321 = vector.broadcast %cst_122 : f32 to vector<2x32xf32>
    %322 = arith.mulf %321, %320 : vector<2x32xf32>
    %cst_123 = arith.constant 5.000000e-01 : f32
    %323 = vector.broadcast %cst_123 : f32 to vector<2x32xf32>
    %324 = arith.addf %322, %323 : vector<2x32xf32>
    %325 = arith.mulf %314, %286 : vector<2x32xf32>
    %326 = arith.mulf %306, %316 : vector<2x32xf32>
    %327 = arith.addf %325, %326 : vector<2x32xf32>
    %328 = math.tanh %327 : vector<2x32xf32>
    %329 = arith.mulf %324, %328 : vector<2x32xf32>
    %330 = arith.index_cast %293 : i32 to index
    %c0_124 = arith.constant 0 : index
    %c0_125 = arith.constant 0 : index
    %331 = vector.load %arg3[%330, %c0_124, %c0_125] : memref<8x2x32xf32, #tpu.memory_space<vmem>>, vector<1x2x32xf32>
    %332 = vector.shape_cast %331 : vector<1x2x32xf32> to vector<2x32xf32>
    %333 = vector.shape_cast %329 : vector<2x32xf32> to vector<1x2x32xf32>
    tpu.vector_store %arg3[%330, %c0_124, %c0_125], %333 {strides = array<i32>} : memref<8x2x32xf32, #tpu.memory_space<vmem>>, vector<1x2x32xf32>,
    %c8_i32 = arith.constant 8 : i32
    %c0_126 = arith.constant 0 : index
    %c0_127 = arith.constant 0 : index
    %334 = vector.load %arg4[%c0_126, %c0_127] : memref<2x32xf32, #tpu.memory_space<vmem>>, vector<2x32xf32>
    tpu.vector_store %arg4[%c0_126, %c0_127], %329 {strides = array<i32>} : memref<2x32xf32, #tpu.memory_space<vmem>>, vector<2x32xf32>,
    %c0_128 = arith.constant 0 : index
    %c0_129 = arith.constant 0 : index
    %335 = vector.load %arg5[%c0_128, %c0_129] : memref<2x32xf32, #tpu.memory_space<vmem>>, vector<2x32xf32>
    tpu.vector_store %arg5[%c0_128, %c0_129], %327 {strides = array<i32>} : memref<2x32xf32, #tpu.memory_space<vmem>>, vector<2x32xf32>,
    return
  }
  func.func @transform_0(%arg0: i32) -> (i32, i32, i32) {
    %c0_i32 = arith.constant 0 : i32
    %0 = arith.subi %c0_i32, %arg0 : i32
    %c0_i32_0 = arith.constant 0 : i32
    %c0_i32_1 = arith.constant 0 : i32
    %c0_i32_2 = arith.constant 0 : i32
    return %0, %c0_i32_0, %c0_i32_1 : i32, i32, i32
  }
  func.func @transform_1(%arg0: i32) -> (i32, i32) {
    %c0_i32 = arith.constant 0 : i32
    %c0_i32_0 = arith.constant 0 : i32
    %c0_i32_1 = arith.constant 0 : i32
    return %c0_i32, %c0_i32_0 : i32, i32
  }
  func.func @transform_2(%arg0: i32) -> (i32, i32, i32) {
    %c0_i32 = arith.constant 0 : i32
    %0 = arith.subi %c0_i32, %arg0 : i32
    %c0_i32_0 = arith.constant 0 : i32
    %c0_i32_1 = arith.constant 0 : i32
    %c0_i32_2 = arith.constant 0 : i32
    return %0, %c0_i32_0, %c0_i32_1 : i32, i32, i32
  }
}

module attributes {stable_mosaic.version = 11 : i64} {
  func.func @_input_proj_kernel(%arg0: i32, %arg1: i32, %arg2: memref<16x64xf32, #tpu.memory_space<vmem>>, %arg3: memref<64x128xf32, #tpu.memory_space<vmem>>, %arg4: memref<1x128xf32, #tpu.memory_space<vmem>>, %arg5: memref<16x128xf32, #tpu.memory_space<vmem>>) attributes {dimension_semantics = [#tpu.dimension_semantics<parallel>, #tpu.dimension_semantics<parallel>], iteration_bounds = array<i64: 1, 1>, scalar_prefetch = 0 : i64, scratch_operands = 0 : i64, tpu.core_type = #tpu.core_type<tc>, window_params = [{transform_indices = @transform_0, window_bounds = array<i64: 16, 64>}, {transform_indices = @transform_1, window_bounds = array<i64: 64, 128>}, {transform_indices = @transform_2, window_bounds = array<i64: 1, 128>}, {transform_indices = @transform_3, window_bounds = array<i64: 16, 128>}]} {
    %c0 = arith.constant 0 : index
    %c0_0 = arith.constant 0 : index
    %0 = vector.load %arg2[%c0, %c0_0] : memref<16x64xf32, #tpu.memory_space<vmem>>, vector<16x64xf32>
    %c0_1 = arith.constant 0 : index
    %c0_2 = arith.constant 0 : index
    %1 = vector.load %arg3[%c0_1, %c0_2] : memref<64x128xf32, #tpu.memory_space<vmem>>, vector<64x128xf32>
    %cst = arith.constant dense<0.000000e+00> : vector<16x128xf32>
    %2 = tpu.matmul %0, %1, %cst {dimension_numbers = #tpu.dot_dimension_numbers<[1], [0], [0], [1], [0, 0, 1, 1], [], []>} : vector<16x64xf32>, vector<64x128xf32>, vector<16x128xf32> -> vector<16x128xf32>
    %c0_3 = arith.constant 0 : index
    %c0_4 = arith.constant 0 : index
    %3 = vector.load %arg4[%c0_3, %c0_4] : memref<1x128xf32, #tpu.memory_space<vmem>>, vector<1x128xf32>
    %4 = vector.broadcast %3 : vector<1x128xf32> to vector<16x128xf32>
    %5 = arith.addf %2, %4 : vector<16x128xf32>
    %c0_5 = arith.constant 0 : index
    %c0_6 = arith.constant 0 : index
    %6 = vector.load %arg5[%c0_5, %c0_6] : memref<16x128xf32, #tpu.memory_space<vmem>>, vector<16x128xf32>
    tpu.vector_store %arg5[%c0_5, %c0_6], %5 {strides = array<i32>} : memref<16x128xf32, #tpu.memory_space<vmem>>, vector<16x128xf32>,
    return
  }
  func.func @transform_0(%arg0: i32, %arg1: i32) -> (i32, i32) {
    %c0_i32 = arith.constant 0 : i32
    %c0_i32_0 = arith.constant 0 : i32
    return %arg0, %c0_i32 : i32, i32
  }
  func.func @transform_1(%arg0: i32, %arg1: i32) -> (i32, i32) {
    %c0_i32 = arith.constant 0 : i32
    %c0_i32_0 = arith.constant 0 : i32
    return %c0_i32, %arg1 : i32, i32
  }
  func.func @transform_2(%arg0: i32, %arg1: i32) -> (i32, i32) {
    %c0_i32 = arith.constant 0 : i32
    %c0_i32_0 = arith.constant 0 : i32
    return %c0_i32, %arg1 : i32, i32
  }
  func.func @transform_3(%arg0: i32, %arg1: i32) -> (i32, i32) {
    %c0_i32 = arith.constant 0 : i32
    return %arg0, %arg1 : i32, i32
  }
}

</mosaic_0001>

<llo_original>
// kernel: lstm_layer.10
$region0: #{lstm_layer.10}
  #allocation0 [shape = 'u32[]', space=smem, size = 0x4, offset = 0x4, fixed_abs, tag = 'smem constant byte address 0x4 - core index']
  #allocation1 [shape = 'u32[144,128]{1,0:T(1,128)}', space=vmem, size = 0x12000, scoped, tag = 'internal scratch']
  %s0 = inlined_call_operand.hbm [shape: f32[16,16], index: 0, kind: input, shape index: {}]
  %s1 = inlined_call_operand.vmem [shape: f32[16,128], index: 1, kind: input, shape index: {}]
  %s2 = inlined_call_operand.vmem [shape: f32[1,128], index: 2, kind: input, shape index: {}]
  %s3 = inlined_call_operand.vmem [shape: f32[16,128], index: 3, kind: output, shape index: {}]
  %s4 = sld [smem:[#allocation0]]
  $region26: #{lstm_layer.10} parent=0
    _
  %s6 = ssub.s32 1, %s4
  %s7 = scalar_select 0, %s6, %s4
  $region1: #{lstm_layer.10} parent=0
    #allocation2 [shape = 'u8[8192]{0}', space=vmem, size = 0x2000, scoped, tag = 'input window, operand 0, single buffered']
    #allocation3 [shape = 's32[1]{0}', space=sflag, size = 0x4, scoped, tag = 'scoped memory for lstm_layer.10']
    %8 = vsyncpa [#allocation3], 0
    // Predicated region
    $region2: #{lstm_layer.10} parent=1 // pred_check
      _
    $region3: #{lstm_layer.10} parent=1 // pred_check_branch
      %10 = sbr.rel (0) target = $region5
    $region4: #{lstm_layer.10} parent=1 // pred_region
      %s12 = ssub.s32 256, 256
      %13 = vsyncadd [#allocation3], %s12
      %s14 = sshll.u32 [#allocation2], 4
      %s15 = int_to_ptr.vmem [resolvable:$true] %s14
      %20 = dma.hbm_to_vmem [thread:$0]  %s0, 256, %s15, [#allocation3], 128, 128, 8
    $region5: #{lstm_layer.10} parent=1 // pred_fallthru
      _
    // Predicated region
    $region6: #{lstm_layer.10} parent=1 // pred_check
      _
    $region7: #{lstm_layer.10} parent=1 // pred_check_branch
      %22 = sbr.rel (0) target = $region9
    $region8: #{lstm_layer.10} parent=1 // pred_region
      _
    $region9: #{lstm_layer.10} parent=1 // pred_fallthru
      _
    // Predicated region
    $region10: #{lstm_layer.10} parent=1 // pred_check
      _
    $region11: #{lstm_layer.10} parent=1 // pred_check_branch
      %24 = sbr.rel (0) target = $region13
    $region12: #{lstm_layer.10} parent=1 // pred_region
      _
    $region13: #{lstm_layer.10} parent=1 // pred_fallthru
      _
    // Predicated region
    $region14: #{lstm_layer.10} parent=1 // pred_check
      _
    $region15: #{lstm_layer.10} parent=1 // pred_check_branch
      %26 = sbr.rel (0) target = $region17
    $region16: #{lstm_layer.10} parent=1 // pred_region
      %27 = dma.done [#allocation3], 256
    $region17: #{lstm_layer.10} parent=1 // pred_fallthru
      _
    %v28 = vld [vmem:[#allocation2] sm:$0xff]
    %v29 = vld [vmem:[#allocation2 + $0x8] sm:$0xff]
    %v30 = vld [vmem:[%s1] sm:$0xff]
    %v31 = vld [vmem:[%s1 + $0x8] sm:$0xff]
    %v32 = vld [vmem:[%s2] sm:$0x1]
    %v34 = vlaneseq
    %v35 = vshrl.u32 %v34, 7
    %v36 = vsub.s32 0, %v35
    %v37 = vrot.slane %v32, %v36
    %vm39 = vcmask 130048
    %v41 = vsel %vm39, %v28, 0
    %v44 = vsel %vm39, %v29, 0
    %46 = vmatprep.subr.mxu0 0.0
    %47 = vmatpush1.msra.mxu0 %v30
    %48 = vmatprep.subr.mxu0 0.0
    %49 = vmatpush1.msra.mxu0 %v31
    %50 = vmatprep.subr.mxu0 0.0
    %51 = vmatpush1.msra.mxu0 0.0
    %52 = vmatprep.subr.mxu0 0.0
    %53 = vmatpush1.msra.mxu0 0.0
    %54 = vmatprep.subr.mxu0 0.0
    %55 = vmatpush1.msra.mxu0 0.0
    %56 = vmatprep.subr.mxu0 0.0
    %57 = vmatpush1.msra.mxu0 0.0
    %58 = vmatprep.subr.mxu0 0.0
    %59 = vmatpush1.msra.mxu0 0.0
    %60 = vmatprep.subr.mxu0 0.0
    %61 = vmatpush1.msra.mxu0 0.0
    %62 = vmatprep.subr.mxu0 0.0
    %63 = vmatpush1.msra.mxu0 0.0
    %64 = vmatprep.subr.mxu0 0.0
    %65 = vmatpush1.msra.mxu0 0.0
    %66 = vmatprep.subr.mxu0 0.0
    %67 = vmatpush1.msra.mxu0 0.0
    %68 = vmatprep.subr.mxu0 0.0
    %69 = vmatpush1.msra.mxu0 0.0
    %70 = vmatprep.subr.mxu0 0.0
    %71 = vmatpush1.msra.mxu0 0.0
    %72 = vmatprep.subr.mxu0 0.0
    %73 = vmatpush1.msra.mxu0 0.0
    %74 = vmatprep.subr.mxu0 0.0
    %75 = vmatpush1.msra.mxu0 0.0
    %76 = vmatprep.subr.mxu0 0.0
    %77 = vmatpush1.msra.mxu0 0.0
    %78 = vmatprep.subr.mxu0 0.0
    %79 = vmatpush1.msra.mxu0 0.0
    %80 = vmatprep.subr.mxu0 0.0
    %81 = vmatpush1.msra.mxu0 0.0
    %82 = vmatprep.subr.mxu0 0.0
    %83 = vmatpush1.msra.mxu0 0.0
    %84 = vmatprep.subr.mxu0 0.0
    %85 = vmatpush1.msra.mxu0 0.0
    %86 = vmatprep.subr.mxu0 0.0
    %87 = vmatpush1.msra.mxu0 0.0
    %88 = vmatprep.subr.mxu0 0.0
    %89 = vmatpush1.msra.mxu0 0.0
    %90 = vmatprep.subr.mxu0 0.0
    %91 = vmatpush1.msra.mxu0 0.0
    %92 = vmatprep.subr.mxu0 0.0
    %93 = vmatpush1.msra.mxu0 0.0
    %94 = vmatprep.subr.mxu0 0.0
    %95 = vmatpush1.msra.mxu0 0.0
    %96 = vmatprep.subr.mxu0 0.0
    %97 = vmatpush1.msra.mxu0 0.0
    %98 = vmatprep.subr.mxu0 0.0
    %99 = vmatpush1.msra.mxu0 0.0
    %100 = vmatprep.subr.mxu0 0.0
    %101 = vmatpush1.msra.mxu0 0.0
    %102 = vmatprep.subr.mxu0 0.0
    %103 = vmatpush1.msra.mxu0 0.0
    %104 = vmatprep.subr.mxu0 0.0
    %105 = vmatpush1.msra.mxu0 0.0
    %106 = vmatprep.subr.mxu0 0.0
    %107 = vmatpush1.msra.mxu0 0.0
    %108 = vmatprep.subr.mxu0 0.0
    %109 = vmatpush1.msra.mxu0 0.0
    %110 = vmatprep.mubr.f32.mxu0 0.0
    %111 = vmatmul.mubr.f32.gmra.mrb[0].mxu0 %v41
    %v112 = vpop.f32.mrb[0].mxu0
    %v113 = vadd.f32 %v37, %v112
    %v114 = vpop.f32.mrb[0].mxu0
    %115 = vmatprep.mubr.f32.mxu0 0.0
    %116 = vmatmul.mubr.f32.gmra.mrb[0].mxu0 %v44
    %v117 = vpop.f32.mrb[0].mxu0
    %v118 = vadd.f32 %v37, %v117
    %v119 = vpop.f32.mrb[0].mxu0
    %120 = vdwg.mxu0
    %121 = vst [vmem:[%s3] sm:$0xff] %v113
    %122 = vst [vmem:[%s3 + $0x8] sm:$0xff] %v118
    // Predicated region
    $region18: #{lstm_layer.10} parent=1 // pred_check
      _
    $region19: #{lstm_layer.10} parent=1 // pred_check_branch
      %124 = sbr.rel (0) target = $region21
    $region20: #{lstm_layer.10} parent=1 // pred_region
      _
    $region21: #{lstm_layer.10} parent=1 // pred_fallthru
      _
    // Predicated region
    $region22: #{lstm_layer.10} parent=1 // pred_check
      _
    $region23: #{lstm_layer.10} parent=1 // pred_check_branch
      %126 = sbr.rel (0) target = $region25
    $region24: #{lstm_layer.10} parent=1 // pred_region
      _
    $region25: #{lstm_layer.10} parent=1 // pred_fallthru
      _
    %127 = vsyncpa [#allocation3], 1

// kernel: lstm_layer.8
$region0: #{lstm_layer.8}
  #allocation0 [shape = 'u32[]', space=smem, size = 0x4, offset = 0x4, fixed_abs, tag = 'smem constant byte address 0x4 - core index']
  #allocation1 [shape = 'u32[144,128]{1,0:T(1,128)}', space=vmem, size = 0x12000, scoped, tag = 'internal scratch']
  %s0 = inlined_call_operand.vmem [shape: f32[16,16], index: 0, kind: input, shape index: {}]
  %s1 = inlined_call_operand.vmem [shape: f32[16,128], index: 1, kind: input, shape index: {}]
  %s2 = inlined_call_operand.vmem [shape: f32[1,128], index: 2, kind: input, shape index: {}]
  %s3 = inlined_call_operand.vmem [shape: f32[16,128], index: 3, kind: output, shape index: {}]
  %s4 = sld [smem:[#allocation0]]
  $region22: #{lstm_layer.8} parent=0
    _
  %s6 = ssub.s32 1, %s4
  %s7 = scalar_select 0, %s6, %s4
  // Predicated region
  $region2: #{lstm_layer.8} parent=0 // pred_check
    _
  $region3: #{lstm_layer.8} parent=0 // pred_check_branch
    %9 = sbr.rel (0) target = $region5
  $region4: #{lstm_layer.8} parent=0 // pred_region
    _
  $region5: #{lstm_layer.8} parent=0 // pred_fallthru
    _
  // Predicated region
  $region6: #{lstm_layer.8} parent=0 // pred_check
    _
  $region7: #{lstm_layer.8} parent=0 // pred_check_branch
    %11 = sbr.rel (0) target = $region9
  $region8: #{lstm_layer.8} parent=0 // pred_region
    _
  $region9: #{lstm_layer.8} parent=0 // pred_fallthru
    _
  // Predicated region
  $region10: #{lstm_layer.8} parent=0 // pred_check
    _
  $region11: #{lstm_layer.8} parent=0 // pred_check_branch
    %13 = sbr.rel (0) target = $region13
  $region12: #{lstm_layer.8} parent=0 // pred_region
    _
  $region13: #{lstm_layer.8} parent=0 // pred_fallthru
    _
  %v14 = vld [vmem:[%s0] sm:$0xff]
  %v15 = vld [vmem:[%s0 + $0x8] sm:$0xff]
  %v16 = vld [vmem:[%s1] sm:$0xff]
  %v17 = vld [vmem:[%s1 + $0x8] sm:$0xff]
  %v18 = vld [vmem:[%s2] sm:$0x1]
  %v20 = vlaneseq
  %v21 = vshrl.u32 %v20, 7
  %v22 = vsub.s32 0, %v21
  %v23 = vrot.slane %v18, %v22
  %vm25 = vcmask 130048
  %v27 = vsel %vm25, %v14, 0
  %v30 = vsel %vm25, %v15, 0
  %32 = vmatprep.subr.mxu0 0.0
  %33 = vmatpush1.msra.mxu0 %v16
  %34 = vmatprep.subr.mxu0 0.0
  %35 = vmatpush1.msra.mxu0 %v17
  %36 = vmatprep.subr.mxu0 0.0
  %37 = vmatpush1.msra.mxu0 0.0
  %38 = vmatprep.subr.mxu0 0.0
  %39 = vmatpush1.msra.mxu0 0.0
  %40 = vmatprep.subr.mxu0 0.0
  %41 = vmatpush1.msra.mxu0 0.0
  %42 = vmatprep.subr.mxu0 0.0
  %43 = vmatpush1.msra.mxu0 0.0
  %44 = vmatprep.subr.mxu0 0.0
  %45 = vmatpush1.msra.mxu0 0.0
  %46 = vmatprep.subr.mxu0 0.0
  %47 = vmatpush1.msra.mxu0 0.0
  %48 = vmatprep.subr.mxu0 0.0
  %49 = vmatpush1.msra.mxu0 0.0
  %50 = vmatprep.subr.mxu0 0.0
  %51 = vmatpush1.msra.mxu0 0.0
  %52 = vmatprep.subr.mxu0 0.0
  %53 = vmatpush1.msra.mxu0 0.0
  %54 = vmatprep.subr.mxu0 0.0
  %55 = vmatpush1.msra.mxu0 0.0
  %56 = vmatprep.subr.mxu0 0.0
  %57 = vmatpush1.msra.mxu0 0.0
  %58 = vmatprep.subr.mxu0 0.0
  %59 = vmatpush1.msra.mxu0 0.0
  %60 = vmatprep.subr.mxu0 0.0
  %61 = vmatpush1.msra.mxu0 0.0
  %62 = vmatprep.subr.mxu0 0.0
  %63 = vmatpush1.msra.mxu0 0.0
  %64 = vmatprep.subr.mxu0 0.0
  %65 = vmatpush1.msra.mxu0 0.0
  %66 = vmatprep.subr.mxu0 0.0
  %67 = vmatpush1.msra.mxu0 0.0
  %68 = vmatprep.subr.mxu0 0.0
  %69 = vmatpush1.msra.mxu0 0.0
  %70 = vmatprep.subr.mxu0 0.0
  %71 = vmatpush1.msra.mxu0 0.0
  %72 = vmatprep.subr.mxu0 0.0
  %73 = vmatpush1.msra.mxu0 0.0
  %74 = vmatprep.subr.mxu0 0.0
  %75 = vmatpush1.msra.mxu0 0.0
  %76 = vmatprep.subr.mxu0 0.0
  %77 = vmatpush1.msra.mxu0 0.0
  %78 = vmatprep.subr.mxu0 0.0
  %79 = vmatpush1.msra.mxu0 0.0
  %80 = vmatprep.subr.mxu0 0.0
  %81 = vmatpush1.msra.mxu0 0.0
  %82 = vmatprep.subr.mxu0 0.0
  %83 = vmatpush1.msra.mxu0 0.0
  %84 = vmatprep.subr.mxu0 0.0
  %85 = vmatpush1.msra.mxu0 0.0
  %86 = vmatprep.subr.mxu0 0.0
  %87 = vmatpush1.msra.mxu0 0.0
  %88 = vmatprep.subr.mxu0 0.0
  %89 = vmatpush1.msra.mxu0 0.0
  %90 = vmatprep.subr.mxu0 0.0
  %91 = vmatpush1.msra.mxu0 0.0
  %92 = vmatprep.subr.mxu0 0.0
  %93 = vmatpush1.msra.mxu0 0.0
  %94 = vmatprep.subr.mxu0 0.0
  %95 = vmatpush1.msra.mxu0 0.0
  %96 = vmatprep.mubr.f32.mxu0 0.0
  %97 = vmatmul.mubr.f32.gmra.mrb[0].mxu0 %v27
  %v98 = vpop.f32.mrb[0].mxu0
  %v99 = vadd.f32 %v23, %v98
  %v100 = vpop.f32.mrb[0].mxu0
  %101 = vmatprep.mubr.f32.mxu0 0.0
  %102 = vmatmul.mubr.f32.gmra.mrb[0].mxu0 %v30
  %v103 = vpop.f32.mrb[0].mxu0
  %v104 = vadd.f32 %v23, %v103
  %v105 = vpop.f32.mrb[0].mxu0
  %106 = vdwg.mxu0
  %107 = vst [vmem:[%s3] sm:$0xff] %v99
  %108 = vst [vmem:[%s3 + $0x8] sm:$0xff] %v104
  // Predicated region
  $region14: #{lstm_layer.8} parent=0 // pred_check
    _
  $region15: #{lstm_layer.8} parent=0 // pred_check_branch
    %110 = sbr.rel (0) target = $region17
  $region16: #{lstm_layer.8} parent=0 // pred_region
    _
  $region17: #{lstm_layer.8} parent=0 // pred_fallthru
    _
  // Predicated region
  $region18: #{lstm_layer.8} parent=0 // pred_check
    _
  $region19: #{lstm_layer.8} parent=0 // pred_check_branch
    %112 = sbr.rel (0) target = $region21
  $region20: #{lstm_layer.8} parent=0 // pred_region
    _
  $region21: #{lstm_layer.8} parent=0 // pred_fallthru
    _

// kernel: lstm_layer.9
$region0: #{lstm_layer.9}
  #allocation0 [shape = 'u32[]', space=smem, size = 0x4, offset = 0x4, fixed_abs, tag = 'smem constant byte address 0x4 - core index']
  #allocation1 [shape = 'u32[144,128]{1,0:T(1,128)}', space=vmem, size = 0x12000, scoped, tag = 'internal scratch']
  #allocation2 [shape = 'f32[2,32]{1,0:T(2,128)}', space=vmem, size = 0x400, scoped, tag = 'scratch operand']
  #allocation3 [shape = 'f32[2,32]{1,0:T(2,128)}', space=vmem, size = 0x400, scoped, tag = 'scratch operand']
  %s0 = inlined_call_operand.vmem [shape: f32[8,2,128], index: 0, kind: input, shape index: {}]
  %s1 = inlined_call_operand.vmem [shape: f32[32,128], index: 1, kind: input, shape index: {}]
  %s2 = inlined_call_operand.vmem [shape: f32[8,2,32], index: 2, kind: output, shape index: {}]
  %s3 = sld [smem:[#allocation0]]
  $region22: #{lstm_layer.9} parent=0
    _
  %s5 = ssub.s32 1, %s3
  %s6 = scalar_select 0, %s5, %s3
  // Predicated region
  $region2: #{lstm_layer.9} parent=0 // pred_check
    _
  $region3: #{lstm_layer.9} parent=0 // pred_check_branch
    %8 = sbr.rel (0) target = $region5
  $region4: #{lstm_layer.9} parent=0 // pred_region
    _
  $region5: #{lstm_layer.9} parent=0 // pred_fallthru
    _
  // Predicated region
  $region6: #{lstm_layer.9} parent=0 // pred_check
    _
  $region7: #{lstm_layer.9} parent=0 // pred_check_branch
    %10 = sbr.rel (0) target = $region9
  $region8: #{lstm_layer.9} parent=0 // pred_region
    _
  $region9: #{lstm_layer.9} parent=0 // pred_fallthru
    _
  %p11 = scmp.eq.s32.totalorder 0, 0
  // Predicated region
  $region10: #{lstm_layer.9} parent=0 // pred_check
    %p12 = pneg %p11
  $region11: #{lstm_layer.9} parent=0 // pred_check_branch
    %14 = sbr.rel (%p12) target = $region13
  $region12: #{lstm_layer.9} parent=0 // pred_region
    %vm15 = vcmask 254976
    %16 = vst.msk [vmem:[#allocation2] sm:$0x3] %vm15, 0.0
    %17 = vst.msk [vmem:[#allocation3] sm:$0x3] %vm15, 0.0
  $region13: #{lstm_layer.9} parent=0 // pred_fallthru
    _
  %v18 = vld [vmem:[%s1] sm:$0xff]
  %v19 = vld [vmem:[%s1 + $0x8] sm:$0xff]
  %v20 = vld [vmem:[%s1 + $0x10] sm:$0xff]
  %v21 = vld [vmem:[%s1 + $0x18] sm:$0xff]
  %v22 = vld [vmem:[#allocation2] sm:$0x3]
  %v23 = vld [vmem:[#allocation3] sm:$0x3]
  %v24 = vld [vmem:[%s0] sm:$0x3]
  %vm25 = vcmask 261120
  %v27 = vsel %vm25, %v22, 0
  %29 = vmatprep.subr.mxu0 0.0
  %30 = vmatpush1.msra.mxu0 %v18
  %31 = vmatprep.subr.mxu0 0.0
  %32 = vmatpush1.msra.mxu0 %v19
  %33 = vmatprep.subr.mxu0 0.0
  %34 = vmatpush1.msra.mxu0 %v20
  %35 = vmatprep.subr.mxu0 0.0
  %36 = vmatpush1.msra.mxu0 %v21
  %37 = vmatprep.subr.mxu0 0.0
  %38 = vmatpush1.msra.mxu0 0.0
  %39 = vmatprep.subr.mxu0 0.0
  %40 = vmatpush1.msra.mxu0 0.0
  %41 = vmatprep.subr.mxu0 0.0
  %42 = vmatpush1.msra.mxu0 0.0
  %43 = vmatprep.subr.mxu0 0.0
  %44 = vmatpush1.msra.mxu0 0.0
  %45 = vmatprep.subr.mxu0 0.0
  %46 = vmatpush1.msra.mxu0 0.0
  %47 = vmatprep.subr.mxu0 0.0
  %48 = vmatpush1.msra.mxu0 0.0
  %49 = vmatprep.subr.mxu0 0.0
  %50 = vmatpush1.msra.mxu0 0.0
  %51 = vmatprep.subr.mxu0 0.0
  %52 = vmatpush1.msra.mxu0 0.0
  %53 = vmatprep.subr.mxu0 0.0
  %54 = vmatpush1.msra.mxu0 0.0
  %55 = vmatprep.subr.mxu0 0.0
  %56 = vmatpush1.msra.mxu0 0.0
  %57 = vmatprep.subr.mxu0 0.0
  %58 = vmatpush1.msra.mxu0 0.0
  %59 = vmatprep.subr.mxu0 0.0
  %60 = vmatpush1.msra.mxu0 0.0
  %61 = vmatprep.subr.mxu0 0.0
  %62 = vmatpush1.msra.mxu0 0.0
  %63 = vmatprep.subr.mxu0 0.0
  %64 = vmatpush1.msra.mxu0 0.0
  %65 = vmatprep.subr.mxu0 0.0
  %66 = vmatpush1.msra.mxu0 0.0
  %67 = vmatprep.subr.mxu0 0.0
  %68 = vmatpush1.msra.mxu0 0.0
  %69 = vmatprep.subr.mxu0 0.0
  %70 = vmatpush1.msra.mxu0 0.0
  %71 = vmatprep.subr.mxu0 0.0
  %72 = vmatpush1.msra.mxu0 0.0
  %73 = vmatprep.subr.mxu0 0.0
  %74 = vmatpush1.msra.mxu0 0.0
  %75 = vmatprep.subr.mxu0 0.0
  %76 = vmatpush1.msra.mxu0 0.0
  %77 = vmatprep.subr.mxu0 0.0
  %78 = vmatpush1.msra.mxu0 0.0
  %79 = vmatprep.subr.mxu0 0.0
  %80 = vmatpush1.msra.mxu0 0.0
  %81 = vmatprep.subr.mxu0 0.0
  %82 = vmatpush1.msra.mxu0 0.0
  %83 = vmatprep.subr.mxu0 0.0
  %84 = vmatpush1.msra.mxu0 0.0
  %85 = vmatprep.subr.mxu0 0.0
  %86 = vmatpush1.msra.mxu0 0.0
  %87 = vmatprep.subr.mxu0 0.0
  %88 = vmatpush1.msra.mxu0 0.0
  %89 = vmatprep.subr.mxu0 0.0
  %90 = vmatpush1.msra.mxu0 0.0
  %91 = vmatprep.subr.mxu0 0.0
  %92 = vmatpush1.msra.mxu0 0.0
  %93 = vmatprep.mubr.f32.mxu0 0.0
  %94 = vmatmul.mubr.f32.gmra.mrb[0].mxu0 %v27
  %v95 = vpop.f32.mrb[0].mxu0
  %v96 = vadd.f32 0.0, %v95
  %v97 = vpop.f32.mrb[0].mxu0
  %98 = vdwg.mxu0
  %v99 = vadd.f32 %v24, %v96
  %v100 = vmul.f32 %v99, 0.5
  %v101 = vtanh.pop %v100
  %v102 = vmul.f32 %v101, 0.5
  %v103 = vadd.f32 %v102, 0.5
  %v104 = vtanh.pop %v99
  %106 = vrot.lane.b32.xlu0 %v23, 32
  %v107 = vpop.permute.xlu0 %106
  %v109 = vmul.f32 %v103, %v107
  %111 = vrot.lane.b32.xlu0 %v104, 64
  %v112 = vpop.permute.xlu0 %111
  %v114 = vmul.f32 %v103, %v112
  %116 = vrot.lane.b32.xlu0 %v114, 32
  %v117 = vpop.permute.xlu0 %116
  %v119 = vadd.f32 %v109, %v117
  %v120 = vtanh.pop %v119
  %122 = vrot.lane.b32.xlu0 %v120, 64
  %v123 = vpop.permute.xlu0 %122
  %v125 = vmul.f32 %v103, %v123
  %127 = vrot.lane.b32.xlu0 %v125, 32
  %v128 = vpop.permute.xlu0 %127
  %vm130 = vcmask 254976
  %131 = vst.msk [vmem:[%s2] sm:$0x3] %vm130, %v128
  %s132 = scalar_lea.vmem %s0, 2
  %v133 = vld [vmem:[%s132] sm:$0x3]
  %v134 = vsel %vm25, %v128, 0
  %136 = vmatprep.subr.mxu0 0.0
  %137 = vmatpush1.msra.mxu0 %v18
  %138 = vmatprep.subr.mxu0 0.0
  %139 = vmatpush1.msra.mxu0 %v19
  %140 = vmatprep.subr.mxu0 0.0
  %141 = vmatpush1.msra.mxu0 %v20
  %142 = vmatprep.subr.mxu0 0.0
  %143 = vmatpush1.msra.mxu0 %v21
  %144 = vmatprep.subr.mxu0 0.0
  %145 = vmatpush1.msra.mxu0 0.0
  %146 = vmatprep.subr.mxu0 0.0
  %147 = vmatpush1.msra.mxu0 0.0
  %148 = vmatprep.subr.mxu0 0.0
  %149 = vmatpush1.msra.mxu0 0.0
  %150 = vmatprep.subr.mxu0 0.0
  %151 = vmatpush1.msra.mxu0 0.0
  %152 = vmatprep.subr.mxu0 0.0
  %153 = vmatpush1.msra.mxu0 0.0
  %154 = vmatprep.subr.mxu0 0.0
  %155 = vmatpush1.msra.mxu0 0.0
  %156 = vmatprep.subr.mxu0 0.0
  %157 = vmatpush1.msra.mxu0 0.0
  %158 = vmatprep.subr.mxu0 0.0
  %159 = vmatpush1.msra.mxu0 0.0
  %160 = vmatprep.subr.mxu0 0.0
  %161 = vmatpush1.msra.mxu0 0.0
  %162 = vmatprep.subr.mxu0 0.0
  %163 = vmatpush1.msra.mxu0 0.0
  %164 = vmatprep.subr.mxu0 0.0
  %165 = vmatpush1.msra.mxu0 0.0
  %166 = vmatprep.subr.mxu0 0.0
  %167 = vmatpush1.msra.mxu0 0.0
  %168 = vmatprep.subr.mxu0 0.0
  %169 = vmatpush1.msra.mxu0 0.0
  %170 = vmatprep.subr.mxu0 0.0
  %171 = vmatpush1.msra.mxu0 0.0
  %172 = vmatprep.subr.mxu0 0.0
  %173 = vmatpush1.msra.mxu0 0.0
  %174 = vmatprep.subr.mxu0 0.0
  %175 = vmatpush1.msra.mxu0 0.0
  %176 = vmatprep.subr.mxu0 0.0
  %177 = vmatpush1.msra.mxu0 0.0
  %178 = vmatprep.subr.mxu0 0.0
  %179 = vmatpush1.msra.mxu0 0.0
  %180 = vmatprep.subr.mxu0 0.0
  %181 = vmatpush1.msra.mxu0 0.0
  %182 = vmatprep.subr.mxu0 0.0
  %183 = vmatpush1.msra.mxu0 0.0
  %184 = vmatprep.subr.mxu0 0.0
  %185 = vmatpush1.msra.mxu0 0.0
  %186 = vmatprep.subr.mxu0 0.0
  %187 = vmatpush1.msra.mxu0 0.0
  %188 = vmatprep.subr.mxu0 0.0
  %189 = vmatpush1.msra.mxu0 0.0
  %190 = vmatprep.subr.mxu0 0.0
  %191 = vmatpush1.msra.mxu0 0.0
  %192 = vmatprep.subr.mxu0 0.0
  %193 = vmatpush1.msra.mxu0 0.0
  %194 = vmatprep.subr.mxu0 0.0
  %195 = vmatpush1.msra.mxu0 0.0
  %196 = vmatprep.subr.mxu0 0.0
  %197 = vmatpush1.msra.mxu0 0.0
  %198 = vmatprep.subr.mxu0 0.0
  %199 = vmatpush1.msra.mxu0 0.0
  %200 = vmatprep.mubr.f32.mxu0 0.0
  %201 = vmatmul.mubr.f32.gmra.mrb[0].mxu0 %v134
  %v202 = vpop.f32.mrb[0].mxu0
  %v203 = vadd.f32 0.0, %v202
  %v204 = vpop.f32.mrb[0].mxu0
  %205 = vdwg.mxu0
  %v206 = vadd.f32 %v133, %v203
  %v207 = vmul.f32 %v206, 0.5
  %v208 = vtanh.pop %v207
  %v209 = vmul.f32 %v208, 0.5
  %v210 = vadd.f32 %v209, 0.5
  %v211 = vtanh.pop %v206
  %v212 = vmul.f32 %v210, %v119
  %214 = vrot.lane.b32.xlu0 %v211, 64
  %v215 = vpop.permute.xlu0 %214
  %v217 = vmul.f32 %v210, %v215
  %219 = vrot.lane.b32.xlu0 %v217, 32
  %v220 = vpop.permute.xlu0 %219
  %v222 = vadd.f32 %v212, %v220
  %v223 = vtanh.pop %v222
  %225 = vrot.lane.b32.xlu0 %v223, 64
  %v226 = vpop.permute.xlu0 %225
  %v228 = vmul.f32 %v210, %v226
  %230 = vrot.lane.b32.xlu0 %v228, 32
  %v231 = vpop.permute.xlu0 %230
  %s233 = scalar_lea.vmem %s2, 2
  %234 = vst.msk [vmem:[%s233] sm:$0x3] %vm130, %v231
  %s235 = scalar_lea.vmem %s0, 4
  %v236 = vld [vmem:[%s235] sm:$0x3]
  %v237 = vsel %vm25, %v231, 0
  %239 = vmatprep.subr.mxu0 0.0
  %240 = vmatpush1.msra.mxu0 %v18
  %241 = vmatprep.subr.mxu0 0.0
  %242 = vmatpush1.msra.mxu0 %v19
  %243 = vmatprep.subr.mxu0 0.0
  %244 = vmatpush1.msra.mxu0 %v20
  %245 = vmatprep.subr.mxu0 0.0
  %246 = vmatpush1.msra.mxu0 %v21
  %247 = vmatprep.subr.mxu0 0.0
  %248 = vmatpush1.msra.mxu0 0.0
  %249 = vmatprep.subr.mxu0 0.0
  %250 = vmatpush1.msra.mxu0 0.0
  %251 = vmatprep.subr.mxu0 0.0
  %252 = vmatpush1.msra.mxu0 0.0
  %253 = vmatprep.subr.mxu0 0.0
  %254 = vmatpush1.msra.mxu0 0.0
  %255 = vmatprep.subr.mxu0 0.0
  %256 = vmatpush1.msra.mxu0 0.0
  %257 = vmatprep.subr.mxu0 0.0
  %258 = vmatpush1.msra.mxu0 0.0
  %259 = vmatprep.subr.mxu0 0.0
  %260 = vmatpush1.msra.mxu0 0.0
  %261 = vmatprep.subr.mxu0 0.0
  %262 = vmatpush1.msra.mxu0 0.0
  %263 = vmatprep.subr.mxu0 0.0
  %264 = vmatpush1.msra.mxu0 0.0
  %265 = vmatprep.subr.mxu0 0.0
  %266 = vmatpush1.msra.mxu0 0.0
  %267 = vmatprep.subr.mxu0 0.0
  %268 = vmatpush1.msra.mxu0 0.0
  %269 = vmatprep.subr.mxu0 0.0
  %270 = vmatpush1.msra.mxu0 0.0
  %271 = vmatprep.subr.mxu0 0.0
  %272 = vmatpush1.msra.mxu0 0.0
  %273 = vmatprep.subr.mxu0 0.0
  %274 = vmatpush1.msra.mxu0 0.0
  %275 = vmatprep.subr.mxu0 0.0
  %276 = vmatpush1.msra.mxu0 0.0
  %277 = vmatprep.subr.mxu0 0.0
  %278 = vmatpush1.msra.mxu0 0.0
  %279 = vmatprep.subr.mxu0 0.0
  %280 = vmatpush1.msra.mxu0 0.0
  %281 = vmatprep.subr.mxu0 0.0
  %282 = vmatpush1.msra.mxu0 0.0
  %283 = vmatprep.subr.mxu0 0.0
  %284 = vmatpush1.msra.mxu0 0.0
  %285 = vmatprep.subr.mxu0 0.0
  %286 = vmatpush1.msra.mxu0 0.0
  %287 = vmatprep.subr.mxu0 0.0
  %288 = vmatpush1.msra.mxu0 0.0
  %289 = vmatprep.subr.mxu0 0.0
  %290 = vmatpush1.msra.mxu0 0.0
  %291 = vmatprep.subr.mxu0 0.0
  %292 = vmatpush1.msra.mxu0 0.0
  %293 = vmatprep.subr.mxu0 0.0
  %294 = vmatpush1.msra.mxu0 0.0
  %295 = vmatprep.subr.mxu0 0.0
  %296 = vmatpush1.msra.mxu0 0.0
  %297 = vmatprep.subr.mxu0 0.0
  %298 = vmatpush1.msra.mxu0 0.0
  %299 = vmatprep.subr.mxu0 0.0
  %300 = vmatpush1.msra.mxu0 0.0
  %301 = vmatprep.subr.mxu0 0.0
  %302 = vmatpush1.msra.mxu0 0.0
  %303 = vmatprep.mubr.f32.mxu0 0.0
  %304 = vmatmul.mubr.f32.gmra.mrb[0].mxu0 %v237
  %v305 = vpop.f32.mrb[0].mxu0
  %v306 = vadd.f32 0.0, %v305
  %v307 = vpop.f32.mrb[0].mxu0
  %308 = vdwg.mxu0
  %v309 = vadd.f32 %v236, %v306
  %v310 = vmul.f32 %v309, 0.5
  %v311 = vtanh.pop %v310
  %v312 = vmul.f32 %v311, 0.5
  %v313 = vadd.f32 %v312, 0.5
  %v314 = vtanh.pop %v309
  %v315 = vmul.f32 %v313, %v222
  %317 = vrot.lane.b32.xlu0 %v314, 64
  %v318 = vpop.permute.xlu0 %317
  %v320 = vmul.f32 %v313, %v318
  %322 = vrot.lane.b32.xlu0 %v320, 32
  %v323 = vpop.permute.xlu0 %322
  %v325 = vadd.f32 %v315, %v323
  %v326 = vtanh.pop %v325
  %328 = vrot.lane.b32.xlu0 %v326, 64
  %v329 = vpop.permute.xlu0 %328
  %v331 = vmul.f32 %v313, %v329
  %333 = vrot.lane.b32.xlu0 %v331, 32
  %v334 = vpop.permute.xlu0 %333
  %s336 = scalar_lea.vmem %s2, 4
  %337 = vst.msk [vmem:[%s336] sm:$0x3] %vm130, %v334
  %s338 = scalar_lea.vmem %s0, 6
  %v339 = vld [vmem:[%s338] sm:$0x3]
  %v340 = vsel %vm25, %v334, 0
  %342 = vmatprep.subr.mxu0 0.0
  %343 = vmatpush1.msra.mxu0 %v18
  %344 = vmatprep.subr.mxu0 0.0
  %345 = vmatpush1.msra.mxu0 %v19
  %346 = vmatprep.subr.mxu0 0.0
  %347 = vmatpush1.msra.mxu0 %v20
  %348 = vmatprep.subr.mxu0 0.0
  %349 = vmatpush1.msra.mxu0 %v21
  %350 = vmatprep.subr.mxu0 0.0
  %351 = vmatpush1.msra.mxu0 0.0
  %352 = vmatprep.subr.mxu0 0.0
  %353 = vmatpush1.msra.mxu0 0.0
  %354 = vmatprep.subr.mxu0 0.0
  %355 = vmatpush1.msra.mxu0 0.0
  %356 = vmatprep.subr.mxu0 0.0
  %357 = vmatpush1.msra.mxu0 0.0
  %358 = vmatprep.subr.mxu0 0.0
  %359 = vmatpush1.msra.mxu0 0.0
  %360 = vmatprep.subr.mxu0 0.0
  %361 = vmatpush1.msra.mxu0 0.0
  %362 = vmatprep.subr.mxu0 0.0
  %363 = vmatpush1.msra.mxu0 0.0
  %364 = vmatprep.subr.mxu0 0.0
  %365 = vmatpush1.msra.mxu0 0.0
  %366 = vmatprep.subr.mxu0 0.0
  %367 = vmatpush1.msra.mxu0 0.0
  %368 = vmatprep.subr.mxu0 0.0
  %369 = vmatpush1.msra.mxu0 0.0
  %370 = vmatprep.subr.mxu0 0.0
  %371 = vmatpush1.msra.mxu0 0.0
  %372 = vmatprep.subr.mxu0 0.0
  %373 = vmatpush1.msra.mxu0 0.0
  %374 = vmatprep.subr.mxu0 0.0
  %375 = vmatpush1.msra.mxu0 0.0
  %376 = vmatprep.subr.mxu0 0.0
  %377 = vmatpush1.msra.mxu0 0.0
  %378 = vmatprep.subr.mxu0 0.0
  %379 = vmatpush1.msra.mxu0 0.0
  %380 = vmatprep.subr.mxu0 0.0
  %381 = vmatpush1.msra.mxu0 0.0
  %382 = vmatprep.subr.mxu0 0.0
  %383 = vmatpush1.msra.mxu0 0.0
  %384 = vmatprep.subr.mxu0 0.0
  %385 = vmatpush1.msra.mxu0 0.0
  %386 = vmatprep.subr.mxu0 0.0
  %387 = vmatpush1.msra.mxu0 0.0
  %388 = vmatprep.subr.mxu0 0.0
  %389 = vmatpush1.msra.mxu0 0.0
  %390 = vmatprep.subr.mxu0 0.0
  %391 = vmatpush1.msra.mxu0 0.0
  %392 = vmatprep.subr.mxu0 0.0
  %393 = vmatpush1.msra.mxu0 0.0
  %394 = vmatprep.subr.mxu0 0.0
  %395 = vmatpush1.msra.mxu0 0.0
  %396 = vmatprep.subr.mxu0 0.0
  %397 = vmatpush1.msra.mxu0 0.0
  %398 = vmatprep.subr.mxu0 0.0
  %399 = vmatpush1.msra.mxu0 0.0
  %400 = vmatprep.subr.mxu0 0.0
  %401 = vmatpush1.msra.mxu0 0.0
  %402 = vmatprep.subr.mxu0 0.0
  %403 = vmatpush1.msra.mxu0 0.0
  %404 = vmatprep.subr.mxu0 0.0
  %405 = vmatpush1.msra.mxu0 0.0
  %406 = vmatprep.mubr.f32.mxu0 0.0
  %407 = vmatmul.mubr.f32.gmra.mrb[0].mxu0 %v340
  %v408 = vpop.f32.mrb[0].mxu0
  %v409 = vadd.f32 0.0, %v408
  %v410 = vpop.f32.mrb[0].mxu0
  %411 = vdwg.mxu0
  %v412 = vadd.f32 %v339, %v409
  %v413 = vmul.f32 %v412, 0.5
  %v414 = vtanh.pop %v413
  %v415 = vmul.f32 %v414, 0.5
  %v416 = vadd.f32 %v415, 0.5
  %v417 = vtanh.pop %v412
  %v418 = vmul.f32 %v416, %v325
  %420 = vrot.lane.b32.xlu0 %v417, 64
  %v421 = vpop.permute.xlu0 %420
  %v423 = vmul.f32 %v416, %v421
  %425 = vrot.lane.b32.xlu0 %v423, 32
  %v426 = vpop.permute.xlu0 %425
  %v428 = vadd.f32 %v418, %v426
  %v429 = vtanh.pop %v428
  %431 = vrot.lane.b32.xlu0 %v429, 64
  %v432 = vpop.permute.xlu0 %431
  %v434 = vmul.f32 %v416, %v432
  %436 = vrot.lane.b32.xlu0 %v434, 32
  %v437 = vpop.permute.xlu0 %436
  %s439 = scalar_lea.vmem %s2, 6
  %440 = vst.msk [vmem:[%s439] sm:$0x3] %vm130, %v437
  %s441 = scalar_lea.vmem %s0, 8
  %v442 = vld [vmem:[%s441] sm:$0x3]
  %v443 = vsel %vm25, %v437, 0
  %445 = vmatprep.subr.mxu0 0.0
  %446 = vmatpush1.msra.mxu0 %v18
  %447 = vmatprep.subr.mxu0 0.0
  %448 = vmatpush1.msra.mxu0 %v19
  %449 = vmatprep.subr.mxu0 0.0
  %450 = vmatpush1.msra.mxu0 %v20
  %451 = vmatprep.subr.mxu0 0.0
  %452 = vmatpush1.msra.mxu0 %v21
  %453 = vmatprep.subr.mxu0 0.0
  %454 = vmatpush1.msra.mxu0 0.0
  %455 = vmatprep.subr.mxu0 0.0
  %456 = vmatpush1.msra.mxu0 0.0
  %457 = vmatprep.subr.mxu0 0.0
  %458 = vmatpush1.msra.mxu0 0.0
  %459 = vmatprep.subr.mxu0 0.0
  %460 = vmatpush1.msra.mxu0 0.0
  %461 = vmatprep.subr.mxu0 0.0
  %462 = vmatpush1.msra.mxu0 0.0
  %463 = vmatprep.subr.mxu0 0.0
  %464 = vmatpush1.msra.mxu0 0.0
  %465 = vmatprep.subr.mxu0 0.0
  %466 = vmatpush1.msra.mxu0 0.0
  %467 = vmatprep.subr.mxu0 0.0
  %468 = vmatpush1.msra.mxu0 0.0
  %469 = vmatprep.subr.mxu0 0.0
  %470 = vmatpush1.msra.mxu0 0.0
  %471 = vmatprep.subr.mxu0 0.0
  %472 = vmatpush1.msra.mxu0 0.0
  %473 = vmatprep.subr.mxu0 0.0
  %474 = vmatpush1.msra.mxu0 0.0
  %475 = vmatprep.subr.mxu0 0.0
  %476 = vmatpush1.msra.mxu0 0.0
  %477 = vmatprep.subr.mxu0 0.0
  %478 = vmatpush1.msra.mxu0 0.0
  %479 = vmatprep.subr.mxu0 0.0
  %480 = vmatpush1.msra.mxu0 0.0
  %481 = vmatprep.subr.mxu0 0.0
  %482 = vmatpush1.msra.mxu0 0.0
  %483 = vmatprep.subr.mxu0 0.0
  %484 = vmatpush1.msra.mxu0 0.0
  %485 = vmatprep.subr.mxu0 0.0
  %486 = vmatpush1.msra.mxu0 0.0
  %487 = vmatprep.subr.mxu0 0.0
  %488 = vmatpush1.msra.mxu0 0.0
  %489 = vmatprep.subr.mxu0 0.0
  %490 = vmatpush1.msra.mxu0 0.0
  %491 = vmatprep.subr.mxu0 0.0
  %492 = vmatpush1.msra.mxu0 0.0
  %493 = vmatprep.subr.mxu0 0.0
  %494 = vmatpush1.msra.mxu0 0.0
  %495 = vmatprep.subr.mxu0 0.0
  %496 = vmatpush1.msra.mxu0 0.0
  %497 = vmatprep.subr.mxu0 0.0
  %498 = vmatpush1.msra.mxu0 0.0
  %499 = vmatprep.subr.mxu0 0.0
  %500 = vmatpush1.msra.mxu0 0.0
  %501 = vmatprep.subr.mxu0 0.0
  %502 = vmatpush1.msra.mxu0 0.0
  %503 = vmatprep.subr.mxu0 0.0
  %504 = vmatpush1.msra.mxu0 0.0
  %505 = vmatprep.subr.mxu0 0.0
  %506 = vmatpush1.msra.mxu0 0.0
  %507 = vmatprep.subr.mxu0 0.0
  %508 = vmatpush1.msra.mxu0 0.0
  %509 = vmatprep.mubr.f32.mxu0 0.0
  %510 = vmatmul.mubr.f32.gmra.mrb[0].mxu0 %v443
  %v511 = vpop.f32.mrb[0].mxu0
  %v512 = vadd.f32 0.0, %v511
  %v513 = vpop.f32.mrb[0].mxu0
  %514 = vdwg.mxu0
  %v515 = vadd.f32 %v442, %v512
  %v516 = vmul.f32 %v515, 0.5
  %v517 = vtanh.pop %v516
  %v518 = vmul.f32 %v517, 0.5
  %v519 = vadd.f32 %v518, 0.5
  %v520 = vtanh.pop %v515
  %v521 = vmul.f32 %v519, %v428
  %523 = vrot.lane.b32.xlu0 %v520, 64
  %v524 = vpop.permute.xlu0 %523
  %v526 = vmul.f32 %v519, %v524
  %528 = vrot.lane.b32.xlu0 %v526, 32
  %v529 = vpop.permute.xlu0 %528
  %v531 = vadd.f32 %v521, %v529
  %v532 = vtanh.pop %v531
  %534 = vrot.lane.b32.xlu0 %v532, 64
  %v535 = vpop.permute.xlu0 %534
  %v537 = vmul.f32 %v519, %v535
  %539 = vrot.lane.b32.xlu0 %v537, 32
  %v540 = vpop.permute.xlu0 %539
  %s542 = scalar_lea.vmem %s2, 8
  %543 = vst.msk [vmem:[%s542] sm:$0x3] %vm130, %v540
  %s544 = scalar_lea.vmem %s0, 10
  %v545 = vld [vmem:[%s544] sm:$0x3]
  %v546 = vsel %vm25, %v540, 0
  %548 = vmatprep.subr.mxu0 0.0
  %549 = vmatpush1.msra.mxu0 %v18
  %550 = vmatprep.subr.mxu0 0.0
  %551 = vmatpush1.msra.mxu0 %v19
  %552 = vmatprep.subr.mxu0 0.0
  %553 = vmatpush1.msra.mxu0 %v20
  %554 = vmatprep.subr.mxu0 0.0
  %555 = vmatpush1.msra.mxu0 %v21
  %556 = vmatprep.subr.mxu0 0.0
  %557 = vmatpush1.msra.mxu0 0.0
  %558 = vmatprep.subr.mxu0 0.0
  %559 = vmatpush1.msra.mxu0 0.0
  %560 = vmatprep.subr.mxu0 0.0
  %561 = vmatpush1.msra.mxu0 0.0
  %562 = vmatprep.subr.mxu0 0.0
  %563 = vmatpush1.msra.mxu0 0.0
  %564 = vmatprep.subr.mxu0 0.0
  %565 = vmatpush1.msra.mxu0 0.0
  %566 = vmatprep.subr.mxu0 0.0
  %567 = vmatpush1.msra.mxu0 0.0
  %568 = vmatprep.subr.mxu0 0.0
  %569 = vmatpush1.msra.mxu0 0.0
  %570 = vmatprep.subr.mxu0 0.0
  %571 = vmatpush1.msra.mxu0 0.0
  %572 = vmatprep.subr.mxu0 0.0
  %573 = vmatpush1.msra.mxu0 0.0
  %574 = vmatprep.subr.mxu0 0.0
  %575 = vmatpush1.msra.mxu0 0.0
  %576 = vmatprep.subr.mxu0 0.0
  %577 = vmatpush1.msra.mxu0 0.0
  %578 = vmatprep.subr.mxu0 0.0
  %579 = vmatpush1.msra.mxu0 0.0
  %580 = vmatprep.subr.mxu0 0.0
  %581 = vmatpush1.msra.mxu0 0.0
  %582 = vmatprep.subr.mxu0 0.0
  %583 = vmatpush1.msra.mxu0 0.0
  %584 = vmatprep.subr.mxu0 0.0
  %585 = vmatpush1.msra.mxu0 0.0
  %586 = vmatprep.subr.mxu0 0.0
  %587 = vmatpush1.msra.mxu0 0.0
  %588 = vmatprep.subr.mxu0 0.0
  %589 = vmatpush1.msra.mxu0 0.0
  %590 = vmatprep.subr.mxu0 0.0
  %591 = vmatpush1.msra.mxu0 0.0
  %592 = vmatprep.subr.mxu0 0.0
  %593 = vmatpush1.msra.mxu0 0.0
  %594 = vmatprep.subr.mxu0 0.0
  %595 = vmatpush1.msra.mxu0 0.0
  %596 = vmatprep.subr.mxu0 0.0
  %597 = vmatpush1.msra.mxu0 0.0
  %598 = vmatprep.subr.mxu0 0.0
  %599 = vmatpush1.msra.mxu0 0.0
  %600 = vmatprep.subr.mxu0 0.0
  %601 = vmatpush1.msra.mxu0 0.0
  %602 = vmatprep.subr.mxu0 0.0
  %603 = vmatpush1.msra.mxu0 0.0
  %604 = vmatprep.subr.mxu0 0.0
  %605 = vmatpush1.msra.mxu0 0.0
  %606 = vmatprep.subr.mxu0 0.0
  %607 = vmatpush1.msra.mxu0 0.0
  %608 = vmatprep.subr.mxu0 0.0
  %609 = vmatpush1.msra.mxu0 0.0
  %610 = vmatprep.subr.mxu0 0.0
  %611 = vmatpush1.msra.mxu0 0.0
  %612 = vmatprep.mubr.f32.mxu0 0.0
  %613 = vmatmul.mubr.f32.gmra.mrb[0].mxu0 %v546
  %v614 = vpop.f32.mrb[0].mxu0
  %v615 = vadd.f32 0.0, %v614
  %v616 = vpop.f32.mrb[0].mxu0
  %617 = vdwg.mxu0
  %v618 = vadd.f32 %v545, %v615
  %v619 = vmul.f32 %v618, 0.5
  %v620 = vtanh.pop %v619
  %v621 = vmul.f32 %v620, 0.5
  %v622 = vadd.f32 %v621, 0.5
  %v623 = vtanh.pop %v618
  %v624 = vmul.f32 %v622, %v531
  %626 = vrot.lane.b32.xlu0 %v623, 64
  %v627 = vpop.permute.xlu0 %626
  %v629 = vmul.f32 %v622, %v627
  %631 = vrot.lane.b32.xlu0 %v629, 32
  %v632 = vpop.permute.xlu0 %631
  %v634 = vadd.f32 %v624, %v632
  %v635 = vtanh.pop %v634
  %637 = vrot.lane.b32.xlu0 %v635, 64
  %v638 = vpop.permute.xlu0 %637
  %v640 = vmul.f32 %v622, %v638
  %642 = vrot.lane.b32.xlu0 %v640, 32
  %v643 = vpop.permute.xlu0 %642
  %s645 = scalar_lea.vmem %s2, 10
  %646 = vst.msk [vmem:[%s645] sm:$0x3] %vm130, %v643
  %s647 = scalar_lea.vmem %s0, 12
  %v648 = vld [vmem:[%s647] sm:$0x3]
  %v649 = vsel %vm25, %v643, 0
  %651 = vmatprep.subr.mxu0 0.0
  %652 = vmatpush1.msra.mxu0 %v18
  %653 = vmatprep.subr.mxu0 0.0
  %654 = vmatpush1.msra.mxu0 %v19
  %655 = vmatprep.subr.mxu0 0.0
  %656 = vmatpush1.msra.mxu0 %v20
  %657 = vmatprep.subr.mxu0 0.0
  %658 = vmatpush1.msra.mxu0 %v21
  %659 = vmatprep.subr.mxu0 0.0
  %660 = vmatpush1.msra.mxu0 0.0
  %661 = vmatprep.subr.mxu0 0.0
  %662 = vmatpush1.msra.mxu0 0.0
  %663 = vmatprep.subr.mxu0 0.0
  %664 = vmatpush1.msra.mxu0 0.0
  %665 = vmatprep.subr.mxu0 0.0
  %666 = vmatpush1.msra.mxu0 0.0
  %667 = vmatprep.subr.mxu0 0.0
  %668 = vmatpush1.msra.mxu0 0.0
  %669 = vmatprep.subr.mxu0 0.0
  %670 = vmatpush1.msra.mxu0 0.0
  %671 = vmatprep.subr.mxu0 0.0
  %672 = vmatpush1.msra.mxu0 0.0
  %673 = vmatprep.subr.mxu0 0.0
  %674 = vmatpush1.msra.mxu0 0.0
  %675 = vmatprep.subr.mxu0 0.0
  %676 = vmatpush1.msra.mxu0 0.0
  %677 = vmatprep.subr.mxu0 0.0
  %678 = vmatpush1.msra.mxu0 0.0
  %679 = vmatprep.subr.mxu0 0.0
  %680 = vmatpush1.msra.mxu0 0.0
  %681 = vmatprep.subr.mxu0 0.0
  %682 = vmatpush1.msra.mxu0 0.0
  %683 = vmatprep.subr.mxu0 0.0
  %684 = vmatpush1.msra.mxu0 0.0
  %685 = vmatprep.subr.mxu0 0.0
  %686 = vmatpush1.msra.mxu0 0.0
  %687 = vmatprep.subr.mxu0 0.0
  %688 = vmatpush1.msra.mxu0 0.0
  %689 = vmatprep.subr.mxu0 0.0
  %690 = vmatpush1.msra.mxu0 0.0
  %691 = vmatprep.subr.mxu0 0.0
  %692 = vmatpush1.msra.mxu0 0.0
  %693 = vmatprep.subr.mxu0 0.0
  %694 = vmatpush1.msra.mxu0 0.0
  %695 = vmatprep.subr.mxu0 0.0
  %696 = vmatpush1.msra.mxu0 0.0
  %697 = vmatprep.subr.mxu0 0.0
  %698 = vmatpush1.msra.mxu0 0.0
  %699 = vmatprep.subr.mxu0 0.0
  %700 = vmatpush1.msra.mxu0 0.0
  %701 = vmatprep.subr.mxu0 0.0
  %702 = vmatpush1.msra.mxu0 0.0
  %703 = vmatprep.subr.mxu0 0.0
  %704 = vmatpush1.msra.mxu0 0.0
  %705 = vmatprep.subr.mxu0 0.0
  %706 = vmatpush1.msra.mxu0 0.0
  %707 = vmatprep.subr.mxu0 0.0
  %708 = vmatpush1.msra.mxu0 0.0
  %709 = vmatprep.subr.mxu0 0.0
  %710 = vmatpush1.msra.mxu0 0.0
  %711 = vmatprep.subr.mxu0 0.0
  %712 = vmatpush1.msra.mxu0 0.0
  %713 = vmatprep.subr.mxu0 0.0
  %714 = vmatpush1.msra.mxu0 0.0
  %715 = vmatprep.mubr.f32.mxu0 0.0
  %716 = vmatmul.mubr.f32.gmra.mrb[0].mxu0 %v649
  %v717 = vpop.f32.mrb[0].mxu0
  %v718 = vadd.f32 0.0, %v717
  %v719 = vpop.f32.mrb[0].mxu0
  %720 = vdwg.mxu0
  %v721 = vadd.f32 %v648, %v718
  %v722 = vmul.f32 %v721, 0.5
  %v723 = vtanh.pop %v722
  %v724 = vmul.f32 %v723, 0.5
  %v725 = vadd.f32 %v724, 0.5
  %v726 = vtanh.pop %v721
  %v727 = vmul.f32 %v725, %v634
  %729 = vrot.lane.b32.xlu0 %v726, 64
  %v730 = vpop.permute.xlu0 %729
  %v732 = vmul.f32 %v725, %v730
  %734 = vrot.lane.b32.xlu0 %v732, 32
  %v735 = vpop.permute.xlu0 %734
  %v737 = vadd.f32 %v727, %v735
  %v738 = vtanh.pop %v737
  %740 = vrot.lane.b32.xlu0 %v738, 64
  %v741 = vpop.permute.xlu0 %740
  %v743 = vmul.f32 %v725, %v741
  %745 = vrot.lane.b32.xlu0 %v743, 32
  %v746 = vpop.permute.xlu0 %745
  %s748 = scalar_lea.vmem %s2, 12
  %749 = vst.msk [vmem:[%s748] sm:$0x3] %vm130, %v746
  %s750 = scalar_lea.vmem %s0, 14
  %v751 = vld [vmem:[%s750] sm:$0x3]
  %v752 = vsel %vm25, %v746, 0
  %754 = vmatprep.subr.mxu0 0.0
  %755 = vmatpush1.msra.mxu0 %v18
  %756 = vmatprep.subr.mxu0 0.0
  %757 = vmatpush1.msra.mxu0 %v19
  %758 = vmatprep.subr.mxu0 0.0
  %759 = vmatpush1.msra.mxu0 %v20
  %760 = vmatprep.subr.mxu0 0.0
  %761 = vmatpush1.msra.mxu0 %v21
  %762 = vmatprep.subr.mxu0 0.0
  %763 = vmatpush1.msra.mxu0 0.0
  %764 = vmatprep.subr.mxu0 0.0
  %765 = vmatpush1.msra.mxu0 0.0
  %766 = vmatprep.subr.mxu0 0.0
  %767 = vmatpush1.msra.mxu0 0.0
  %768 = vmatprep.subr.mxu0 0.0
  %769 = vmatpush1.msra.mxu0 0.0
  %770 = vmatprep.subr.mxu0 0.0
  %771 = vmatpush1.msra.mxu0 0.0
  %772 = vmatprep.subr.mxu0 0.0
  %773 = vmatpush1.msra.mxu0 0.0
  %774 = vmatprep.subr.mxu0 0.0
  %775 = vmatpush1.msra.mxu0 0.0
  %776 = vmatprep.subr.mxu0 0.0
  %777 = vmatpush1.msra.mxu0 0.0
  %778 = vmatprep.subr.mxu0 0.0
  %779 = vmatpush1.msra.mxu0 0.0
  %780 = vmatprep.subr.mxu0 0.0
  %781 = vmatpush1.msra.mxu0 0.0
  %782 = vmatprep.subr.mxu0 0.0
  %783 = vmatpush1.msra.mxu0 0.0
  %784 = vmatprep.subr.mxu0 0.0
  %785 = vmatpush1.msra.mxu0 0.0
  %786 = vmatprep.subr.mxu0 0.0
  %787 = vmatpush1.msra.mxu0 0.0
  %788 = vmatprep.subr.mxu0 0.0
  %789 = vmatpush1.msra.mxu0 0.0
  %790 = vmatprep.subr.mxu0 0.0
  %791 = vmatpush1.msra.mxu0 0.0
  %792 = vmatprep.subr.mxu0 0.0
  %793 = vmatpush1.msra.mxu0 0.0
  %794 = vmatprep.subr.mxu0 0.0
  %795 = vmatpush1.msra.mxu0 0.0
  %796 = vmatprep.subr.mxu0 0.0
  %797 = vmatpush1.msra.mxu0 0.0
  %798 = vmatprep.subr.mxu0 0.0
  %799 = vmatpush1.msra.mxu0 0.0
  %800 = vmatprep.subr.mxu0 0.0
  %801 = vmatpush1.msra.mxu0 0.0
  %802 = vmatprep.subr.mxu0 0.0
  %803 = vmatpush1.msra.mxu0 0.0
  %804 = vmatprep.subr.mxu0 0.0
  %805 = vmatpush1.msra.mxu0 0.0
  %806 = vmatprep.subr.mxu0 0.0
  %807 = vmatpush1.msra.mxu0 0.0
  %808 = vmatprep.subr.mxu0 0.0
  %809 = vmatpush1.msra.mxu0 0.0
  %810 = vmatprep.subr.mxu0 0.0
  %811 = vmatpush1.msra.mxu0 0.0
  %812 = vmatprep.subr.mxu0 0.0
  %813 = vmatpush1.msra.mxu0 0.0
  %814 = vmatprep.subr.mxu0 0.0
  %815 = vmatpush1.msra.mxu0 0.0
  %816 = vmatprep.subr.mxu0 0.0
  %817 = vmatpush1.msra.mxu0 0.0
  %818 = vmatprep.mubr.f32.mxu0 0.0
  %819 = vmatmul.mubr.f32.gmra.mrb[0].mxu0 %v752
  %v820 = vpop.f32.mrb[0].mxu0
  %v821 = vadd.f32 0.0, %v820
  %v822 = vpop.f32.mrb[0].mxu0
  %823 = vdwg.mxu0
  %v824 = vadd.f32 %v751, %v821
  %v825 = vmul.f32 %v824, 0.5
  %v826 = vtanh.pop %v825
  %v827 = vmul.f32 %v826, 0.5
  %v828 = vadd.f32 %v827, 0.5
  %v829 = vtanh.pop %v824
  %v830 = vmul.f32 %v828, %v737
  %832 = vrot.lane.b32.xlu0 %v829, 64
  %v833 = vpop.permute.xlu0 %832
  %v835 = vmul.f32 %v828, %v833
  %837 = vrot.lane.b32.xlu0 %v835, 32
  %v838 = vpop.permute.xlu0 %837
  %v840 = vadd.f32 %v830, %v838
  %v841 = vtanh.pop %v840
  %843 = vrot.lane.b32.xlu0 %v841, 64
  %v844 = vpop.permute.xlu0 %843
  %v846 = vmul.f32 %v828, %v844
  %848 = vrot.lane.b32.xlu0 %v846, 32
  %v849 = vpop.permute.xlu0 %848
  %s851 = scalar_lea.vmem %s2, 14
  %852 = vst.msk [vmem:[%s851] sm:$0x3] %vm130, %v849
  %853 = vst.msk [vmem:[#allocation2] sm:$0x3] %vm130, %v849
  %855 = vrot.lane.b32.xlu0 %v840, 96
  %v856 = vpop.permute.xlu0 %855
  %858 = vst.msk [vmem:[#allocation3] sm:$0x3] %vm130, %v856
  // Predicated region
  $region14: #{lstm_layer.9} parent=0 // pred_check
    _
  $region15: #{lstm_layer.9} parent=0 // pred_check_branch
    %860 = sbr.rel (0) target = $region17
  $region16: #{lstm_layer.9} parent=0 // pred_region
    _
  $region17: #{lstm_layer.9} parent=0 // pred_fallthru
    _
  // Predicated region
  $region18: #{lstm_layer.9} parent=0 // pred_check
    _
  $region19: #{lstm_layer.9} parent=0 // pred_check_branch
    %862 = sbr.rel (0) target = $region21
  $region20: #{lstm_layer.9} parent=0 // pred_region
    _
  $region21: #{lstm_layer.9} parent=0 // pred_fallthru
    _

// kernel: lstm_layer.11
$region0: #{lstm_layer.11}
  #allocation0 [shape = 'u32[]', space=smem, size = 0x4, offset = 0x4, fixed_abs, tag = 'smem constant byte address 0x4 - core index']
  #allocation1 [shape = 'u32[144,128]{1,0:T(1,128)}', space=vmem, size = 0x12000, scoped, tag = 'internal scratch']
  #allocation2 [shape = 'f32[2,32]{1,0:T(2,128)}', space=vmem, size = 0x400, scoped, tag = 'scratch operand']
  #allocation3 [shape = 'f32[2,32]{1,0:T(2,128)}', space=vmem, size = 0x400, scoped, tag = 'scratch operand']
  %s0 = inlined_call_operand.vmem [shape: f32[8,2,128], index: 0, kind: input, shape index: {}]
  %s1 = inlined_call_operand.vmem [shape: f32[32,128], index: 1, kind: input, shape index: {}]
  %s2 = inlined_call_operand.vmem [shape: f32[8,2,32], index: 2, kind: output, shape index: {}]
  %s3 = sld [smem:[#allocation0]]
  $region22: #{lstm_layer.11} parent=0
    _
  %s5 = ssub.s32 1, %s3
  %s6 = scalar_select 0, %s5, %s3
  // Predicated region
  $region2: #{lstm_layer.11} parent=0 // pred_check
    _
  $region3: #{lstm_layer.11} parent=0 // pred_check_branch
    %8 = sbr.rel (0) target = $region5
  $region4: #{lstm_layer.11} parent=0 // pred_region
    %s9 = ssub.s32 0, 0
    %s10 = smul.u32 8, %s9
    %p11 = scmp.lt.s32.totalorder %s10, 7
    %s12 = scalar_select %p11, %s10, 7
    %s13 = smul.addr %s12, 2
    %s14 = scalar_lea.vmem %s0, %s13
    %s15 = ssub.s32 0, 0
    %s16 = smul.u32 8, %s15
  $region5: #{lstm_layer.11} parent=0 // pred_fallthru
    _
  // Predicated region
  $region6: #{lstm_layer.11} parent=0 // pred_check
    _
  $region7: #{lstm_layer.11} parent=0 // pred_check_branch
    %18 = sbr.rel (0) target = $region9
  $region8: #{lstm_layer.11} parent=0 // pred_region
    _
  $region9: #{lstm_layer.11} parent=0 // pred_fallthru
    _
  %s19 = ssub.s32 0, 0
  %s20 = smul.u32 8, %s19
  %p21 = scmp.lt.s32.totalorder %s20, 7
  %s22 = scalar_select %p21, %s20, 7
  %s23 = smul.addr %s22, 2
  %s24 = scalar_lea.vmem %s0, %s23
  %s25 = ssub.s32 0, 0
  %s26 = smul.u32 8, %s25
  %p27 = scmp.lt.s32.totalorder %s26, 7
  %s28 = scalar_select %p27, %s26, 7
  %s29 = smul.addr %s28, 2
  %s30 = scalar_lea.vmem %s2, %s29
  %s31 = ssub.s32 0, 0
  %s32 = smul.u32 8, %s31
  %p33 = scmp.lt.s32.totalorder %s32, 7
  %s34 = scalar_select %p33, %s32, 7
  %s35 = smul.addr %s34, 2
  %s36 = scalar_lea.vmem %s0, %s35
  %s37 = ssub.s32 0, 0
  %s38 = smul.u32 8, %s37
  %s39 = ssub.s32 0, 0
  %s40 = smul.u32 8, %s39
  %p41 = scmp.lt.s32.totalorder %s40, 7
  %s42 = scalar_select %p41, %s40, 7
  %s43 = smul.addr %s42, 2
  %s44 = scalar_lea.vmem %s2, %s43
  %s45 = ssub.s32 0, 0
  %s46 = smul.u32 8, %s45
  %p47 = scmp.eq.s32.totalorder 0, 0
  // Predicated region
  $region10: #{lstm_layer.11} parent=0 // pred_check
    %p48 = pneg %p47
  $region11: #{lstm_layer.11} parent=0 // pred_check_branch
    %50 = sbr.rel (%p48) target = $region13
  $region12: #{lstm_layer.11} parent=0 // pred_region
    %vm51 = vcmask 254976
    %52 = vst.msk [vmem:[#allocation2] sm:$0x3] %vm51, 0.0
    %53 = vst.msk [vmem:[#allocation3] sm:$0x3] %vm51, 0.0
  $region13: #{lstm_layer.11} parent=0 // pred_fallthru
    _
  %v54 = vld [vmem:[%s1] sm:$0xff]
  %v55 = vld [vmem:[%s1 + $0x8] sm:$0xff]
  %v56 = vld [vmem:[%s1 + $0x10] sm:$0xff]
  %v57 = vld [vmem:[%s1 + $0x18] sm:$0xff]
  %v58 = vld [vmem:[#allocation2] sm:$0x3]
  %v59 = vld [vmem:[#allocation3] sm:$0x3]
  %s60 = scalar_lea.vmem %s36, 14
  %v61 = vld [vmem:[%s60] sm:$0x3]
  %vm62 = vcmask 261120
  %v64 = vsel %vm62, %v58, 0
  %66 = vmatprep.subr.mxu0 0.0
  %67 = vmatpush1.msra.mxu0 %v54
  %68 = vmatprep.subr.mxu0 0.0
  %69 = vmatpush1.msra.mxu0 %v55
  %70 = vmatprep.subr.mxu0 0.0
  %71 = vmatpush1.msra.mxu0 %v56
  %72 = vmatprep.subr.mxu0 0.0
  %73 = vmatpush1.msra.mxu0 %v57
  %74 = vmatprep.subr.mxu0 0.0
  %75 = vmatpush1.msra.mxu0 0.0
  %76 = vmatprep.subr.mxu0 0.0
  %77 = vmatpush1.msra.mxu0 0.0
  %78 = vmatprep.subr.mxu0 0.0
  %79 = vmatpush1.msra.mxu0 0.0
  %80 = vmatprep.subr.mxu0 0.0
  %81 = vmatpush1.msra.mxu0 0.0
  %82 = vmatprep.subr.mxu0 0.0
  %83 = vmatpush1.msra.mxu0 0.0
  %84 = vmatprep.subr.mxu0 0.0
  %85 = vmatpush1.msra.mxu0 0.0
  %86 = vmatprep.subr.mxu0 0.0
  %87 = vmatpush1.msra.mxu0 0.0
  %88 = vmatprep.subr.mxu0 0.0
  %89 = vmatpush1.msra.mxu0 0.0
  %90 = vmatprep.subr.mxu0 0.0
  %91 = vmatpush1.msra.mxu0 0.0
  %92 = vmatprep.subr.mxu0 0.0
  %93 = vmatpush1.msra.mxu0 0.0
  %94 = vmatprep.subr.mxu0 0.0
  %95 = vmatpush1.msra.mxu0 0.0
  %96 = vmatprep.subr.mxu0 0.0
  %97 = vmatpush1.msra.mxu0 0.0
  %98 = vmatprep.subr.mxu0 0.0
  %99 = vmatpush1.msra.mxu0 0.0
  %100 = vmatprep.subr.mxu0 0.0
  %101 = vmatpush1.msra.mxu0 0.0
  %102 = vmatprep.subr.mxu0 0.0
  %103 = vmatpush1.msra.mxu0 0.0
  %104 = vmatprep.subr.mxu0 0.0
  %105 = vmatpush1.msra.mxu0 0.0
  %106 = vmatprep.subr.mxu0 0.0
  %107 = vmatpush1.msra.mxu0 0.0
  %108 = vmatprep.subr.mxu0 0.0
  %109 = vmatpush1.msra.mxu0 0.0
  %110 = vmatprep.subr.mxu0 0.0
  %111 = vmatpush1.msra.mxu0 0.0
  %112 = vmatprep.subr.mxu0 0.0
  %113 = vmatpush1.msra.mxu0 0.0
  %114 = vmatprep.subr.mxu0 0.0
  %115 = vmatpush1.msra.mxu0 0.0
  %116 = vmatprep.subr.mxu0 0.0
  %117 = vmatpush1.msra.mxu0 0.0
  %118 = vmatprep.subr.mxu0 0.0
  %119 = vmatpush1.msra.mxu0 0.0
  %120 = vmatprep.subr.mxu0 0.0
  %121 = vmatpush1.msra.mxu0 0.0
  %122 = vmatprep.subr.mxu0 0.0
  %123 = vmatpush1.msra.mxu0 0.0
  %124 = vmatprep.subr.mxu0 0.0
  %125 = vmatpush1.msra.mxu0 0.0
  %126 = vmatprep.subr.mxu0 0.0
  %127 = vmatpush1.msra.mxu0 0.0
  %128 = vmatprep.subr.mxu0 0.0
  %129 = vmatpush1.msra.mxu0 0.0
  %130 = vmatprep.mubr.f32.mxu0 0.0
  %131 = vmatmul.mubr.f32.gmra.mrb[0].mxu0 %v64
  %v132 = vpop.f32.mrb[0].mxu0
  %v133 = vadd.f32 0.0, %v132
  %v134 = vpop.f32.mrb[0].mxu0
  %135 = vdwg.mxu0
  %v136 = vadd.f32 %v61, %v133
  %v137 = vmul.f32 %v136, 0.5
  %v138 = vtanh.pop %v137
  %v139 = vmul.f32 %v138, 0.5
  %v140 = vadd.f32 %v139, 0.5
  %v141 = vtanh.pop %v136
  %143 = vrot.lane.b32.xlu0 %v59, 32
  %v144 = vpop.permute.xlu0 %143
  %v146 = vmul.f32 %v140, %v144
  %148 = vrot.lane.b32.xlu0 %v141, 64
  %v149 = vpop.permute.xlu0 %148
  %v151 = vmul.f32 %v140, %v149
  %153 = vrot.lane.b32.xlu0 %v151, 32
  %v154 = vpop.permute.xlu0 %153
  %v156 = vadd.f32 %v146, %v154
  %v157 = vtanh.pop %v156
  %159 = vrot.lane.b32.xlu0 %v157, 64
  %v160 = vpop.permute.xlu0 %159
  %v162 = vmul.f32 %v140, %v160
  %164 = vrot.lane.b32.xlu0 %v162, 32
  %v165 = vpop.permute.xlu0 %164
  %s167 = scalar_lea.vmem %s44, 14
  %vm168 = vcmask 254976
  %169 = vst.msk [vmem:[%s167] sm:$0x3] %vm168, %v165
  %s170 = scalar_lea.vmem %s36, 12
  %v171 = vld [vmem:[%s170] sm:$0x3]
  %v172 = vsel %vm62, %v165, 0
  %174 = vmatprep.subr.mxu0 0.0
  %175 = vmatpush1.msra.mxu0 %v54
  %176 = vmatprep.subr.mxu0 0.0
  %177 = vmatpush1.msra.mxu0 %v55
  %178 = vmatprep.subr.mxu0 0.0
  %179 = vmatpush1.msra.mxu0 %v56
  %180 = vmatprep.subr.mxu0 0.0
  %181 = vmatpush1.msra.mxu0 %v57
  %182 = vmatprep.subr.mxu0 0.0
  %183 = vmatpush1.msra.mxu0 0.0
  %184 = vmatprep.subr.mxu0 0.0
  %185 = vmatpush1.msra.mxu0 0.0
  %186 = vmatprep.subr.mxu0 0.0
  %187 = vmatpush1.msra.mxu0 0.0
  %188 = vmatprep.subr.mxu0 0.0
  %189 = vmatpush1.msra.mxu0 0.0
  %190 = vmatprep.subr.mxu0 0.0
  %191 = vmatpush1.msra.mxu0 0.0
  %192 = vmatprep.subr.mxu0 0.0
  %193 = vmatpush1.msra.mxu0 0.0
  %194 = vmatprep.subr.mxu0 0.0
  %195 = vmatpush1.msra.mxu0 0.0
  %196 = vmatprep.subr.mxu0 0.0
  %197 = vmatpush1.msra.mxu0 0.0
  %198 = vmatprep.subr.mxu0 0.0
  %199 = vmatpush1.msra.mxu0 0.0
  %200 = vmatprep.subr.mxu0 0.0
  %201 = vmatpush1.msra.mxu0 0.0
  %202 = vmatprep.subr.mxu0 0.0
  %203 = vmatpush1.msra.mxu0 0.0
  %204 = vmatprep.subr.mxu0 0.0
  %205 = vmatpush1.msra.mxu0 0.0
  %206 = vmatprep.subr.mxu0 0.0
  %207 = vmatpush1.msra.mxu0 0.0
  %208 = vmatprep.subr.mxu0 0.0
  %209 = vmatpush1.msra.mxu0 0.0
  %210 = vmatprep.subr.mxu0 0.0
  %211 = vmatpush1.msra.mxu0 0.0
  %212 = vmatprep.subr.mxu0 0.0
  %213 = vmatpush1.msra.mxu0 0.0
  %214 = vmatprep.subr.mxu0 0.0
  %215 = vmatpush1.msra.mxu0 0.0
  %216 = vmatprep.subr.mxu0 0.0
  %217 = vmatpush1.msra.mxu0 0.0
  %218 = vmatprep.subr.mxu0 0.0
  %219 = vmatpush1.msra.mxu0 0.0
  %220 = vmatprep.subr.mxu0 0.0
  %221 = vmatpush1.msra.mxu0 0.0
  %222 = vmatprep.subr.mxu0 0.0
  %223 = vmatpush1.msra.mxu0 0.0
  %224 = vmatprep.subr.mxu0 0.0
  %225 = vmatpush1.msra.mxu0 0.0
  %226 = vmatprep.subr.mxu0 0.0
  %227 = vmatpush1.msra.mxu0 0.0
  %228 = vmatprep.subr.mxu0 0.0
  %229 = vmatpush1.msra.mxu0 0.0
  %230 = vmatprep.subr.mxu0 0.0
  %231 = vmatpush1.msra.mxu0 0.0
  %232 = vmatprep.subr.mxu0 0.0
  %233 = vmatpush1.msra.mxu0 0.0
  %234 = vmatprep.subr.mxu0 0.0
  %235 = vmatpush1.msra.mxu0 0.0
  %236 = vmatprep.subr.mxu0 0.0
  %237 = vmatpush1.msra.mxu0 0.0
  %238 = vmatprep.mubr.f32.mxu0 0.0
  %239 = vmatmul.mubr.f32.gmra.mrb[0].mxu0 %v172
  %v240 = vpop.f32.mrb[0].mxu0
  %v241 = vadd.f32 0.0, %v240
  %v242 = vpop.f32.mrb[0].mxu0
  %243 = vdwg.mxu0
  %v244 = vadd.f32 %v171, %v241
  %v245 = vmul.f32 %v244, 0.5
  %v246 = vtanh.pop %v245
  %v247 = vmul.f32 %v246, 0.5
  %v248 = vadd.f32 %v247, 0.5
  %v249 = vtanh.pop %v244
  %v250 = vmul.f32 %v248, %v156
  %252 = vrot.lane.b32.xlu0 %v249, 64
  %v253 = vpop.permute.xlu0 %252
  %v255 = vmul.f32 %v248, %v253
  %257 = vrot.lane.b32.xlu0 %v255, 32
  %v258 = vpop.permute.xlu0 %257
  %v260 = vadd.f32 %v250, %v258
  %v261 = vtanh.pop %v260
  %263 = vrot.lane.b32.xlu0 %v261, 64
  %v264 = vpop.permute.xlu0 %263
  %v266 = vmul.f32 %v248, %v264
  %268 = vrot.lane.b32.xlu0 %v266, 32
  %v269 = vpop.permute.xlu0 %268
  %s271 = scalar_lea.vmem %s44, 12
  %272 = vst.msk [vmem:[%s271] sm:$0x3] %vm168, %v269
  %s273 = scalar_lea.vmem %s36, 10
  %v274 = vld [vmem:[%s273] sm:$0x3]
  %v275 = vsel %vm62, %v269, 0
  %277 = vmatprep.subr.mxu0 0.0
  %278 = vmatpush1.msra.mxu0 %v54
  %279 = vmatprep.subr.mxu0 0.0
  %280 = vmatpush1.msra.mxu0 %v55
  %281 = vmatprep.subr.mxu0 0.0
  %282 = vmatpush1.msra.mxu0 %v56
  %283 = vmatprep.subr.mxu0 0.0
  %284 = vmatpush1.msra.mxu0 %v57
  %285 = vmatprep.subr.mxu0 0.0
  %286 = vmatpush1.msra.mxu0 0.0
  %287 = vmatprep.subr.mxu0 0.0
  %288 = vmatpush1.msra.mxu0 0.0
  %289 = vmatprep.subr.mxu0 0.0
  %290 = vmatpush1.msra.mxu0 0.0
  %291 = vmatprep.subr.mxu0 0.0
  %292 = vmatpush1.msra.mxu0 0.0
  %293 = vmatprep.subr.mxu0 0.0
  %294 = vmatpush1.msra.mxu0 0.0
  %295 = vmatprep.subr.mxu0 0.0
  %296 = vmatpush1.msra.mxu0 0.0
  %297 = vmatprep.subr.mxu0 0.0
  %298 = vmatpush1.msra.mxu0 0.0
  %299 = vmatprep.subr.mxu0 0.0
  %300 = vmatpush1.msra.mxu0 0.0
  %301 = vmatprep.subr.mxu0 0.0
  %302 = vmatpush1.msra.mxu0 0.0
  %303 = vmatprep.subr.mxu0 0.0
  %304 = vmatpush1.msra.mxu0 0.0
  %305 = vmatprep.subr.mxu0 0.0
  %306 = vmatpush1.msra.mxu0 0.0
  %307 = vmatprep.subr.mxu0 0.0
  %308 = vmatpush1.msra.mxu0 0.0
  %309 = vmatprep.subr.mxu0 0.0
  %310 = vmatpush1.msra.mxu0 0.0
  %311 = vmatprep.subr.mxu0 0.0
  %312 = vmatpush1.msra.mxu0 0.0
  %313 = vmatprep.subr.mxu0 0.0
  %314 = vmatpush1.msra.mxu0 0.0
  %315 = vmatprep.subr.mxu0 0.0
  %316 = vmatpush1.msra.mxu0 0.0
  %317 = vmatprep.subr.mxu0 0.0
  %318 = vmatpush1.msra.mxu0 0.0
  %319 = vmatprep.subr.mxu0 0.0
  %320 = vmatpush1.msra.mxu0 0.0
  %321 = vmatprep.subr.mxu0 0.0
  %322 = vmatpush1.msra.mxu0 0.0
  %323 = vmatprep.subr.mxu0 0.0
  %324 = vmatpush1.msra.mxu0 0.0
  %325 = vmatprep.subr.mxu0 0.0
  %326 = vmatpush1.msra.mxu0 0.0
  %327 = vmatprep.subr.mxu0 0.0
  %328 = vmatpush1.msra.mxu0 0.0
  %329 = vmatprep.subr.mxu0 0.0
  %330 = vmatpush1.msra.mxu0 0.0
  %331 = vmatprep.subr.mxu0 0.0
  %332 = vmatpush1.msra.mxu0 0.0
  %333 = vmatprep.subr.mxu0 0.0
  %334 = vmatpush1.msra.mxu0 0.0
  %335 = vmatprep.subr.mxu0 0.0
  %336 = vmatpush1.msra.mxu0 0.0
  %337 = vmatprep.subr.mxu0 0.0
  %338 = vmatpush1.msra.mxu0 0.0
  %339 = vmatprep.subr.mxu0 0.0
  %340 = vmatpush1.msra.mxu0 0.0
  %341 = vmatprep.mubr.f32.mxu0 0.0
  %342 = vmatmul.mubr.f32.gmra.mrb[0].mxu0 %v275
  %v343 = vpop.f32.mrb[0].mxu0
  %v344 = vadd.f32 0.0, %v343
  %v345 = vpop.f32.mrb[0].mxu0
  %346 = vdwg.mxu0
  %v347 = vadd.f32 %v274, %v344
  %v348 = vmul.f32 %v347, 0.5
  %v349 = vtanh.pop %v348
  %v350 = vmul.f32 %v349, 0.5
  %v351 = vadd.f32 %v350, 0.5
  %v352 = vtanh.pop %v347
  %v353 = vmul.f32 %v351, %v260
  %355 = vrot.lane.b32.xlu0 %v352, 64
  %v356 = vpop.permute.xlu0 %355
  %v358 = vmul.f32 %v351, %v356
  %360 = vrot.lane.b32.xlu0 %v358, 32
  %v361 = vpop.permute.xlu0 %360
  %v363 = vadd.f32 %v353, %v361
  %v364 = vtanh.pop %v363
  %366 = vrot.lane.b32.xlu0 %v364, 64
  %v367 = vpop.permute.xlu0 %366
  %v369 = vmul.f32 %v351, %v367
  %371 = vrot.lane.b32.xlu0 %v369, 32
  %v372 = vpop.permute.xlu0 %371
  %s374 = scalar_lea.vmem %s44, 10
  %375 = vst.msk [vmem:[%s374] sm:$0x3] %vm168, %v372
  %s376 = scalar_lea.vmem %s36, 8
  %v377 = vld [vmem:[%s376] sm:$0x3]
  %v378 = vsel %vm62, %v372, 0
  %380 = vmatprep.subr.mxu0 0.0
  %381 = vmatpush1.msra.mxu0 %v54
  %382 = vmatprep.subr.mxu0 0.0
  %383 = vmatpush1.msra.mxu0 %v55
  %384 = vmatprep.subr.mxu0 0.0
  %385 = vmatpush1.msra.mxu0 %v56
  %386 = vmatprep.subr.mxu0 0.0
  %387 = vmatpush1.msra.mxu0 %v57
  %388 = vmatprep.subr.mxu0 0.0
  %389 = vmatpush1.msra.mxu0 0.0
  %390 = vmatprep.subr.mxu0 0.0
  %391 = vmatpush1.msra.mxu0 0.0
  %392 = vmatprep.subr.mxu0 0.0
  %393 = vmatpush1.msra.mxu0 0.0
  %394 = vmatprep.subr.mxu0 0.0
  %395 = vmatpush1.msra.mxu0 0.0
  %396 = vmatprep.subr.mxu0 0.0
  %397 = vmatpush1.msra.mxu0 0.0
  %398 = vmatprep.subr.mxu0 0.0
  %399 = vmatpush1.msra.mxu0 0.0
  %400 = vmatprep.subr.mxu0 0.0
  %401 = vmatpush1.msra.mxu0 0.0
  %402 = vmatprep.subr.mxu0 0.0
  %403 = vmatpush1.msra.mxu0 0.0
  %404 = vmatprep.subr.mxu0 0.0
  %405 = vmatpush1.msra.mxu0 0.0
  %406 = vmatprep.subr.mxu0 0.0
  %407 = vmatpush1.msra.mxu0 0.0
  %408 = vmatprep.subr.mxu0 0.0
  %409 = vmatpush1.msra.mxu0 0.0
  %410 = vmatprep.subr.mxu0 0.0
  %411 = vmatpush1.msra.mxu0 0.0
  %412 = vmatprep.subr.mxu0 0.0
  %413 = vmatpush1.msra.mxu0 0.0
  %414 = vmatprep.subr.mxu0 0.0
  %415 = vmatpush1.msra.mxu0 0.0
  %416 = vmatprep.subr.mxu0 0.0
  %417 = vmatpush1.msra.mxu0 0.0
  %418 = vmatprep.subr.mxu0 0.0
  %419 = vmatpush1.msra.mxu0 0.0
  %420 = vmatprep.subr.mxu0 0.0
  %421 = vmatpush1.msra.mxu0 0.0
  %422 = vmatprep.subr.mxu0 0.0
  %423 = vmatpush1.msra.mxu0 0.0
  %424 = vmatprep.subr.mxu0 0.0
  %425 = vmatpush1.msra.mxu0 0.0
  %426 = vmatprep.subr.mxu0 0.0
  %427 = vmatpush1.msra.mxu0 0.0
  %428 = vmatprep.subr.mxu0 0.0
  %429 = vmatpush1.msra.mxu0 0.0
  %430 = vmatprep.subr.mxu0 0.0
  %431 = vmatpush1.msra.mxu0 0.0
  %432 = vmatprep.subr.mxu0 0.0
  %433 = vmatpush1.msra.mxu0 0.0
  %434 = vmatprep.subr.mxu0 0.0
  %435 = vmatpush1.msra.mxu0 0.0
  %436 = vmatprep.subr.mxu0 0.0
  %437 = vmatpush1.msra.mxu0 0.0
  %438 = vmatprep.subr.mxu0 0.0
  %439 = vmatpush1.msra.mxu0 0.0
  %440 = vmatprep.subr.mxu0 0.0
  %441 = vmatpush1.msra.mxu0 0.0
  %442 = vmatprep.subr.mxu0 0.0
  %443 = vmatpush1.msra.mxu0 0.0
  %444 = vmatprep.mubr.f32.mxu0 0.0
  %445 = vmatmul.mubr.f32.gmra.mrb[0].mxu0 %v378
  %v446 = vpop.f32.mrb[0].mxu0
  %v447 = vadd.f32 0.0, %v446
  %v448 = vpop.f32.mrb[0].mxu0
  %449 = vdwg.mxu0
  %v450 = vadd.f32 %v377, %v447
  %v451 = vmul.f32 %v450, 0.5
  %v452 = vtanh.pop %v451
  %v453 = vmul.f32 %v452, 0.5
  %v454 = vadd.f32 %v453, 0.5
  %v455 = vtanh.pop %v450
  %v456 = vmul.f32 %v454, %v363
  %458 = vrot.lane.b32.xlu0 %v455, 64
  %v459 = vpop.permute.xlu0 %458
  %v461 = vmul.f32 %v454, %v459
  %463 = vrot.lane.b32.xlu0 %v461, 32
  %v464 = vpop.permute.xlu0 %463
  %v466 = vadd.f32 %v456, %v464
  %v467 = vtanh.pop %v466
  %469 = vrot.lane.b32.xlu0 %v467, 64
  %v470 = vpop.permute.xlu0 %469
  %v472 = vmul.f32 %v454, %v470
  %474 = vrot.lane.b32.xlu0 %v472, 32
  %v475 = vpop.permute.xlu0 %474
  %s477 = scalar_lea.vmem %s44, 8
  %478 = vst.msk [vmem:[%s477] sm:$0x3] %vm168, %v475
  %s479 = scalar_lea.vmem %s36, 6
  %v480 = vld [vmem:[%s479] sm:$0x3]
  %v481 = vsel %vm62, %v475, 0
  %483 = vmatprep.subr.mxu0 0.0
  %484 = vmatpush1.msra.mxu0 %v54
  %485 = vmatprep.subr.mxu0 0.0
  %486 = vmatpush1.msra.mxu0 %v55
  %487 = vmatprep.subr.mxu0 0.0
  %488 = vmatpush1.msra.mxu0 %v56
  %489 = vmatprep.subr.mxu0 0.0
  %490 = vmatpush1.msra.mxu0 %v57
  %491 = vmatprep.subr.mxu0 0.0
  %492 = vmatpush1.msra.mxu0 0.0
  %493 = vmatprep.subr.mxu0 0.0
  %494 = vmatpush1.msra.mxu0 0.0
  %495 = vmatprep.subr.mxu0 0.0
  %496 = vmatpush1.msra.mxu0 0.0
  %497 = vmatprep.subr.mxu0 0.0
  %498 = vmatpush1.msra.mxu0 0.0
  %499 = vmatprep.subr.mxu0 0.0
  %500 = vmatpush1.msra.mxu0 0.0
  %501 = vmatprep.subr.mxu0 0.0
  %502 = vmatpush1.msra.mxu0 0.0
  %503 = vmatprep.subr.mxu0 0.0
  %504 = vmatpush1.msra.mxu0 0.0
  %505 = vmatprep.subr.mxu0 0.0
  %506 = vmatpush1.msra.mxu0 0.0
  %507 = vmatprep.subr.mxu0 0.0
  %508 = vmatpush1.msra.mxu0 0.0
  %509 = vmatprep.subr.mxu0 0.0
  %510 = vmatpush1.msra.mxu0 0.0
  %511 = vmatprep.subr.mxu0 0.0
  %512 = vmatpush1.msra.mxu0 0.0
  %513 = vmatprep.subr.mxu0 0.0
  %514 = vmatpush1.msra.mxu0 0.0
  %515 = vmatprep.subr.mxu0 0.0
  %516 = vmatpush1.msra.mxu0 0.0
  %517 = vmatprep.subr.mxu0 0.0
  %518 = vmatpush1.msra.mxu0 0.0
  %519 = vmatprep.subr.mxu0 0.0
  %520 = vmatpush1.msra.mxu0 0.0
  %521 = vmatprep.subr.mxu0 0.0
  %522 = vmatpush1.msra.mxu0 0.0
  %523 = vmatprep.subr.mxu0 0.0
  %524 = vmatpush1.msra.mxu0 0.0
  %525 = vmatprep.subr.mxu0 0.0
  %526 = vmatpush1.msra.mxu0 0.0
  %527 = vmatprep.subr.mxu0 0.0
  %528 = vmatpush1.msra.mxu0 0.0
  %529 = vmatprep.subr.mxu0 0.0
  %530 = vmatpush1.msra.mxu0 0.0
  %531 = vmatprep.subr.mxu0 0.0
  %532 = vmatpush1.msra.mxu0 0.0
  %533 = vmatprep.subr.mxu0 0.0
  %534 = vmatpush1.msra.mxu0 0.0
  %535 = vmatprep.subr.mxu0 0.0
  %536 = vmatpush1.msra.mxu0 0.0
  %537 = vmatprep.subr.mxu0 0.0
  %538 = vmatpush1.msra.mxu0 0.0
  %539 = vmatprep.subr.mxu0 0.0
  %540 = vmatpush1.msra.mxu0 0.0
  %541 = vmatprep.subr.mxu0 0.0
  %542 = vmatpush1.msra.mxu0 0.0
  %543 = vmatprep.subr.mxu0 0.0
  %544 = vmatpush1.msra.mxu0 0.0
  %545 = vmatprep.subr.mxu0 0.0
  %546 = vmatpush1.msra.mxu0 0.0
  %547 = vmatprep.mubr.f32.mxu0 0.0
  %548 = vmatmul.mubr.f32.gmra.mrb[0].mxu0 %v481
  %v549 = vpop.f32.mrb[0].mxu0
  %v550 = vadd.f32 0.0, %v549
  %v551 = vpop.f32.mrb[0].mxu0
  %552 = vdwg.mxu0
  %v553 = vadd.f32 %v480, %v550
  %v554 = vmul.f32 %v553, 0.5
  %v555 = vtanh.pop %v554
  %v556 = vmul.f32 %v555, 0.5
  %v557 = vadd.f32 %v556, 0.5
  %v558 = vtanh.pop %v553
  %v559 = vmul.f32 %v557, %v466
  %561 = vrot.lane.b32.xlu0 %v558, 64
  %v562 = vpop.permute.xlu0 %561
  %v564 = vmul.f32 %v557, %v562
  %566 = vrot.lane.b32.xlu0 %v564, 32
  %v567 = vpop.permute.xlu0 %566
  %v569 = vadd.f32 %v559, %v567
  %v570 = vtanh.pop %v569
  %572 = vrot.lane.b32.xlu0 %v570, 64
  %v573 = vpop.permute.xlu0 %572
  %v575 = vmul.f32 %v557, %v573
  %577 = vrot.lane.b32.xlu0 %v575, 32
  %v578 = vpop.permute.xlu0 %577
  %s580 = scalar_lea.vmem %s44, 6
  %581 = vst.msk [vmem:[%s580] sm:$0x3] %vm168, %v578
  %s582 = scalar_lea.vmem %s36, 4
  %v583 = vld [vmem:[%s582] sm:$0x3]
  %v584 = vsel %vm62, %v578, 0
  %586 = vmatprep.subr.mxu0 0.0
  %587 = vmatpush1.msra.mxu0 %v54
  %588 = vmatprep.subr.mxu0 0.0
  %589 = vmatpush1.msra.mxu0 %v55
  %590 = vmatprep.subr.mxu0 0.0
  %591 = vmatpush1.msra.mxu0 %v56
  %592 = vmatprep.subr.mxu0 0.0
  %593 = vmatpush1.msra.mxu0 %v57
  %594 = vmatprep.subr.mxu0 0.0
  %595 = vmatpush1.msra.mxu0 0.0
  %596 = vmatprep.subr.mxu0 0.0
  %597 = vmatpush1.msra.mxu0 0.0
  %598 = vmatprep.subr.mxu0 0.0
  %599 = vmatpush1.msra.mxu0 0.0
  %600 = vmatprep.subr.mxu0 0.0
  %601 = vmatpush1.msra.mxu0 0.0
  %602 = vmatprep.subr.mxu0 0.0
  %603 = vmatpush1.msra.mxu0 0.0
  %604 = vmatprep.subr.mxu0 0.0
  %605 = vmatpush1.msra.mxu0 0.0
  %606 = vmatprep.subr.mxu0 0.0
  %607 = vmatpush1.msra.mxu0 0.0
  %608 = vmatprep.subr.mxu0 0.0
  %609 = vmatpush1.msra.mxu0 0.0
  %610 = vmatprep.subr.mxu0 0.0
  %611 = vmatpush1.msra.mxu0 0.0
  %612 = vmatprep.subr.mxu0 0.0
  %613 = vmatpush1.msra.mxu0 0.0
  %614 = vmatprep.subr.mxu0 0.0
  %615 = vmatpush1.msra.mxu0 0.0
  %616 = vmatprep.subr.mxu0 0.0
  %617 = vmatpush1.msra.mxu0 0.0
  %618 = vmatprep.subr.mxu0 0.0
  %619 = vmatpush1.msra.mxu0 0.0
  %620 = vmatprep.subr.mxu0 0.0
  %621 = vmatpush1.msra.mxu0 0.0
  %622 = vmatprep.subr.mxu0 0.0
  %623 = vmatpush1.msra.mxu0 0.0
  %624 = vmatprep.subr.mxu0 0.0
  %625 = vmatpush1.msra.mxu0 0.0
  %626 = vmatprep.subr.mxu0 0.0
  %627 = vmatpush1.msra.mxu0 0.0
  %628 = vmatprep.subr.mxu0 0.0
  %629 = vmatpush1.msra.mxu0 0.0
  %630 = vmatprep.subr.mxu0 0.0
  %631 = vmatpush1.msra.mxu0 0.0
  %632 = vmatprep.subr.mxu0 0.0
  %633 = vmatpush1.msra.mxu0 0.0
  %634 = vmatprep.subr.mxu0 0.0
  %635 = vmatpush1.msra.mxu0 0.0
  %636 = vmatprep.subr.mxu0 0.0
  %637 = vmatpush1.msra.mxu0 0.0
  %638 = vmatprep.subr.mxu0 0.0
  %639 = vmatpush1.msra.mxu0 0.0
  %640 = vmatprep.subr.mxu0 0.0
  %641 = vmatpush1.msra.mxu0 0.0
  %642 = vmatprep.subr.mxu0 0.0
  %643 = vmatpush1.msra.mxu0 0.0
  %644 = vmatprep.subr.mxu0 0.0
  %645 = vmatpush1.msra.mxu0 0.0
  %646 = vmatprep.subr.mxu0 0.0
  %647 = vmatpush1.msra.mxu0 0.0
  %648 = vmatprep.subr.mxu0 0.0
  %649 = vmatpush1.msra.mxu0 0.0
  %650 = vmatprep.mubr.f32.mxu0 0.0
  %651 = vmatmul.mubr.f32.gmra.mrb[0].mxu0 %v584
  %v652 = vpop.f32.mrb[0].mxu0
  %v653 = vadd.f32 0.0, %v652
  %v654 = vpop.f32.mrb[0].mxu0
  %655 = vdwg.mxu0
  %v656 = vadd.f32 %v583, %v653
  %v657 = vmul.f32 %v656, 0.5
  %v658 = vtanh.pop %v657
  %v659 = vmul.f32 %v658, 0.5
  %v660 = vadd.f32 %v659, 0.5
  %v661 = vtanh.pop %v656
  %v662 = vmul.f32 %v660, %v569
  %664 = vrot.lane.b32.xlu0 %v661, 64
  %v665 = vpop.permute.xlu0 %664
  %v667 = vmul.f32 %v660, %v665
  %669 = vrot.lane.b32.xlu0 %v667, 32
  %v670 = vpop.permute.xlu0 %669
  %v672 = vadd.f32 %v662, %v670
  %v673 = vtanh.pop %v672
  %675 = vrot.lane.b32.xlu0 %v673, 64
  %v676 = vpop.permute.xlu0 %675
  %v678 = vmul.f32 %v660, %v676
  %680 = vrot.lane.b32.xlu0 %v678, 32
  %v681 = vpop.permute.xlu0 %680
  %s683 = scalar_lea.vmem %s44, 4
  %684 = vst.msk [vmem:[%s683] sm:$0x3] %vm168, %v681
  %s685 = scalar_lea.vmem %s36, 2
  %v686 = vld [vmem:[%s685] sm:$0x3]
  %v687 = vsel %vm62, %v681, 0
  %689 = vmatprep.subr.mxu0 0.0
  %690 = vmatpush1.msra.mxu0 %v54
  %691 = vmatprep.subr.mxu0 0.0
  %692 = vmatpush1.msra.mxu0 %v55
  %693 = vmatprep.subr.mxu0 0.0
  %694 = vmatpush1.msra.mxu0 %v56
  %695 = vmatprep.subr.mxu0 0.0
  %696 = vmatpush1.msra.mxu0 %v57
  %697 = vmatprep.subr.mxu0 0.0
  %698 = vmatpush1.msra.mxu0 0.0
  %699 = vmatprep.subr.mxu0 0.0
  %700 = vmatpush1.msra.mxu0 0.0
  %701 = vmatprep.subr.mxu0 0.0
  %702 = vmatpush1.msra.mxu0 0.0
  %703 = vmatprep.subr.mxu0 0.0
  %704 = vmatpush1.msra.mxu0 0.0
  %705 = vmatprep.subr.mxu0 0.0
  %706 = vmatpush1.msra.mxu0 0.0
  %707 = vmatprep.subr.mxu0 0.0
  %708 = vmatpush1.msra.mxu0 0.0
  %709 = vmatprep.subr.mxu0 0.0
  %710 = vmatpush1.msra.mxu0 0.0
  %711 = vmatprep.subr.mxu0 0.0
  %712 = vmatpush1.msra.mxu0 0.0
  %713 = vmatprep.subr.mxu0 0.0
  %714 = vmatpush1.msra.mxu0 0.0
  %715 = vmatprep.subr.mxu0 0.0
  %716 = vmatpush1.msra.mxu0 0.0
  %717 = vmatprep.subr.mxu0 0.0
  %718 = vmatpush1.msra.mxu0 0.0
  %719 = vmatprep.subr.mxu0 0.0
  %720 = vmatpush1.msra.mxu0 0.0
  %721 = vmatprep.subr.mxu0 0.0
  %722 = vmatpush1.msra.mxu0 0.0
  %723 = vmatprep.subr.mxu0 0.0
  %724 = vmatpush1.msra.mxu0 0.0
  %725 = vmatprep.subr.mxu0 0.0
  %726 = vmatpush1.msra.mxu0 0.0
  %727 = vmatprep.subr.mxu0 0.0
  %728 = vmatpush1.msra.mxu0 0.0
  %729 = vmatprep.subr.mxu0 0.0
  %730 = vmatpush1.msra.mxu0 0.0
  %731 = vmatprep.subr.mxu0 0.0
  %732 = vmatpush1.msra.mxu0 0.0
  %733 = vmatprep.subr.mxu0 0.0
  %734 = vmatpush1.msra.mxu0 0.0
  %735 = vmatprep.subr.mxu0 0.0
  %736 = vmatpush1.msra.mxu0 0.0
  %737 = vmatprep.subr.mxu0 0.0
  %738 = vmatpush1.msra.mxu0 0.0
  %739 = vmatprep.subr.mxu0 0.0
  %740 = vmatpush1.msra.mxu0 0.0
  %741 = vmatprep.subr.mxu0 0.0
  %742 = vmatpush1.msra.mxu0 0.0
  %743 = vmatprep.subr.mxu0 0.0
  %744 = vmatpush1.msra.mxu0 0.0
  %745 = vmatprep.subr.mxu0 0.0
  %746 = vmatpush1.msra.mxu0 0.0
  %747 = vmatprep.subr.mxu0 0.0
  %748 = vmatpush1.msra.mxu0 0.0
  %749 = vmatprep.subr.mxu0 0.0
  %750 = vmatpush1.msra.mxu0 0.0
  %751 = vmatprep.subr.mxu0 0.0
  %752 = vmatpush1.msra.mxu0 0.0
  %753 = vmatprep.mubr.f32.mxu0 0.0
  %754 = vmatmul.mubr.f32.gmra.mrb[0].mxu0 %v687
  %v755 = vpop.f32.mrb[0].mxu0
  %v756 = vadd.f32 0.0, %v755
  %v757 = vpop.f32.mrb[0].mxu0
  %758 = vdwg.mxu0
  %v759 = vadd.f32 %v686, %v756
  %v760 = vmul.f32 %v759, 0.5
  %v761 = vtanh.pop %v760
  %v762 = vmul.f32 %v761, 0.5
  %v763 = vadd.f32 %v762, 0.5
  %v764 = vtanh.pop %v759
  %v765 = vmul.f32 %v763, %v672
  %767 = vrot.lane.b32.xlu0 %v764, 64
  %v768 = vpop.permute.xlu0 %767
  %v770 = vmul.f32 %v763, %v768
  %772 = vrot.lane.b32.xlu0 %v770, 32
  %v773 = vpop.permute.xlu0 %772
  %v775 = vadd.f32 %v765, %v773
  %v776 = vtanh.pop %v775
  %778 = vrot.lane.b32.xlu0 %v776, 64
  %v779 = vpop.permute.xlu0 %778
  %v781 = vmul.f32 %v763, %v779
  %783 = vrot.lane.b32.xlu0 %v781, 32
  %v784 = vpop.permute.xlu0 %783
  %s786 = scalar_lea.vmem %s44, 2
  %787 = vst.msk [vmem:[%s786] sm:$0x3] %vm168, %v784
  %v788 = vld [vmem:[%s36] sm:$0x3]
  %v789 = vsel %vm62, %v784, 0
  %791 = vmatprep.subr.mxu0 0.0
  %792 = vmatpush1.msra.mxu0 %v54
  %793 = vmatprep.subr.mxu0 0.0
  %794 = vmatpush1.msra.mxu0 %v55
  %795 = vmatprep.subr.mxu0 0.0
  %796 = vmatpush1.msra.mxu0 %v56
  %797 = vmatprep.subr.mxu0 0.0
  %798 = vmatpush1.msra.mxu0 %v57
  %799 = vmatprep.subr.mxu0 0.0
  %800 = vmatpush1.msra.mxu0 0.0
  %801 = vmatprep.subr.mxu0 0.0
  %802 = vmatpush1.msra.mxu0 0.0
  %803 = vmatprep.subr.mxu0 0.0
  %804 = vmatpush1.msra.mxu0 0.0
  %805 = vmatprep.subr.mxu0 0.0
  %806 = vmatpush1.msra.mxu0 0.0
  %807 = vmatprep.subr.mxu0 0.0
  %808 = vmatpush1.msra.mxu0 0.0
  %809 = vmatprep.subr.mxu0 0.0
  %810 = vmatpush1.msra.mxu0 0.0
  %811 = vmatprep.subr.mxu0 0.0
  %812 = vmatpush1.msra.mxu0 0.0
  %813 = vmatprep.subr.mxu0 0.0
  %814 = vmatpush1.msra.mxu0 0.0
  %815 = vmatprep.subr.mxu0 0.0
  %816 = vmatpush1.msra.mxu0 0.0
  %817 = vmatprep.subr.mxu0 0.0
  %818 = vmatpush1.msra.mxu0 0.0
  %819 = vmatprep.subr.mxu0 0.0
  %820 = vmatpush1.msra.mxu0 0.0
  %821 = vmatprep.subr.mxu0 0.0
  %822 = vmatpush1.msra.mxu0 0.0
  %823 = vmatprep.subr.mxu0 0.0
  %824 = vmatpush1.msra.mxu0 0.0
  %825 = vmatprep.subr.mxu0 0.0
  %826 = vmatpush1.msra.mxu0 0.0
  %827 = vmatprep.subr.mxu0 0.0
  %828 = vmatpush1.msra.mxu0 0.0
  %829 = vmatprep.subr.mxu0 0.0
  %830 = vmatpush1.msra.mxu0 0.0
  %831 = vmatprep.subr.mxu0 0.0
  %832 = vmatpush1.msra.mxu0 0.0
  %833 = vmatprep.subr.mxu0 0.0
  %834 = vmatpush1.msra.mxu0 0.0
  %835 = vmatprep.subr.mxu0 0.0
  %836 = vmatpush1.msra.mxu0 0.0
  %837 = vmatprep.subr.mxu0 0.0
  %838 = vmatpush1.msra.mxu0 0.0
  %839 = vmatprep.subr.mxu0 0.0
  %840 = vmatpush1.msra.mxu0 0.0
  %841 = vmatprep.subr.mxu0 0.0
  %842 = vmatpush1.msra.mxu0 0.0
  %843 = vmatprep.subr.mxu0 0.0
  %844 = vmatpush1.msra.mxu0 0.0
  %845 = vmatprep.subr.mxu0 0.0
  %846 = vmatpush1.msra.mxu0 0.0
  %847 = vmatprep.subr.mxu0 0.0
  %848 = vmatpush1.msra.mxu0 0.0
  %849 = vmatprep.subr.mxu0 0.0
  %850 = vmatpush1.msra.mxu0 0.0
  %851 = vmatprep.subr.mxu0 0.0
  %852 = vmatpush1.msra.mxu0 0.0
  %853 = vmatprep.subr.mxu0 0.0
  %854 = vmatpush1.msra.mxu0 0.0
  %855 = vmatprep.mubr.f32.mxu0 0.0
  %856 = vmatmul.mubr.f32.gmra.mrb[0].mxu0 %v789
  %v857 = vpop.f32.mrb[0].mxu0
  %v858 = vadd.f32 0.0, %v857
  %v859 = vpop.f32.mrb[0].mxu0
  %860 = vdwg.mxu0
  %v861 = vadd.f32 %v788, %v858
  %v862 = vmul.f32 %v861, 0.5
  %v863 = vtanh.pop %v862
  %v864 = vmul.f32 %v863, 0.5
  %v865 = vadd.f32 %v864, 0.5
  %v866 = vtanh.pop %v861
  %v867 = vmul.f32 %v865, %v775
  %869 = vrot.lane.b32.xlu0 %v866, 64
  %v870 = vpop.permute.xlu0 %869
  %v872 = vmul.f32 %v865, %v870
  %874 = vrot.lane.b32.xlu0 %v872, 32
  %v875 = vpop.permute.xlu0 %874
  %v877 = vadd.f32 %v867, %v875
  %v878 = vtanh.pop %v877
  %880 = vrot.lane.b32.xlu0 %v878, 64
  %v881 = vpop.permute.xlu0 %880
  %v883 = vmul.f32 %v865, %v881
  %885 = vrot.lane.b32.xlu0 %v883, 32
  %v886 = vpop.permute.xlu0 %885
  %888 = vst.msk [vmem:[%s44] sm:$0x3] %vm168, %v886
  %889 = vst.msk [vmem:[#allocation2] sm:$0x3] %vm168, %v886
  %891 = vrot.lane.b32.xlu0 %v877, 96
  %v892 = vpop.permute.xlu0 %891
  %894 = vst.msk [vmem:[#allocation3] sm:$0x3] %vm168, %v892
  %s895 = ssub.s32 0, 0
  %s896 = smul.u32 8, %s895
  %p897 = scmp.lt.s32.totalorder %s896, 7
  %s898 = scalar_select %p897, %s896, 7
  %s899 = smul.addr %s898, 2
  %s900 = scalar_lea.vmem %s2, %s899
  // Predicated region
  $region14: #{lstm_layer.11} parent=0 // pred_check
    _
  $region15: #{lstm_layer.11} parent=0 // pred_check_branch
    %902 = sbr.rel (0) target = $region17
  $region16: #{lstm_layer.11} parent=0 // pred_region
    %s903 = ssub.s32 0, 0
    %s904 = smul.u32 8, %s903
  $region17: #{lstm_layer.11} parent=0 // pred_fallthru
    _
  // Predicated region
  $region18: #{lstm_layer.11} parent=0 // pred_check
    _
  $region19: #{lstm_layer.11} parent=0 // pred_check_branch
    %906 = sbr.rel (0) target = $region21
  $region20: #{lstm_layer.11} parent=0 // pred_region
    %s907 = ssub.s32 0, 0
    %s908 = smul.u32 8, %s907
    %p909 = scmp.lt.s32.totalorder %s908, 7
    %s910 = scalar_select %p909, %s908, 7
    %s911 = smul.addr %s910, 2
    %s912 = scalar_lea.vmem %s2, %s911
  $region21: #{lstm_layer.11} parent=0 // pred_fallthru
    _

// kernel: lstm_layer.14
$region0: #{lstm_layer.14}
  #allocation0 [shape = 'u32[]', space=smem, size = 0x4, offset = 0x4, fixed_abs, tag = 'smem constant byte address 0x4 - core index']
  #allocation1 [shape = 'u32[144,128]{1,0:T(1,128)}', space=vmem, size = 0x12000, scoped, tag = 'internal scratch']
  %s0 = inlined_call_operand.vmem [shape: f32[16,64], index: 0, kind: input, shape index: {}]
  %s1 = inlined_call_operand.vmem [shape: f32[64,128], index: 1, kind: input, shape index: {}]
  %s2 = inlined_call_operand.vmem [shape: f32[1,128], index: 2, kind: input, shape index: {}]
  %s3 = inlined_call_operand.vmem [shape: f32[16,128], index: 3, kind: output, shape index: {}]
  %s4 = sld [smem:[#allocation0]]
  $region22: #{lstm_layer.14} parent=0
    _
  %s6 = ssub.s32 1, %s4
  %s7 = scalar_select 0, %s6, %s4
  // Predicated region
  $region2: #{lstm_layer.14} parent=0 // pred_check
    _
  $region3: #{lstm_layer.14} parent=0 // pred_check_branch
    %9 = sbr.rel (0) target = $region5
  $region4: #{lstm_layer.14} parent=0 // pred_region
    _
  $region5: #{lstm_layer.14} parent=0 // pred_fallthru
    _
  // Predicated region
  $region6: #{lstm_layer.14} parent=0 // pred_check
    _
  $region7: #{lstm_layer.14} parent=0 // pred_check_branch
    %11 = sbr.rel (0) target = $region9
  $region8: #{lstm_layer.14} parent=0 // pred_region
    _
  $region9: #{lstm_layer.14} parent=0 // pred_fallthru
    _
  // Predicated region
  $region10: #{lstm_layer.14} parent=0 // pred_check
    _
  $region11: #{lstm_layer.14} parent=0 // pred_check_branch
    %13 = sbr.rel (0) target = $region13
  $region12: #{lstm_layer.14} parent=0 // pred_region
    _
  $region13: #{lstm_layer.14} parent=0 // pred_fallthru
    _
  %v14 = vld [vmem:[%s0] sm:$0xff]
  %v15 = vld [vmem:[%s0 + $0x8] sm:$0xff]
  %v16 = vld [vmem:[%s1] sm:$0xff]
  %v17 = vld [vmem:[%s1 + $0x8] sm:$0xff]
  %v18 = vld [vmem:[%s1 + $0x10] sm:$0xff]
  %v19 = vld [vmem:[%s1 + $0x18] sm:$0xff]
  %v20 = vld [vmem:[%s1 + $0x20] sm:$0xff]
  %v21 = vld [vmem:[%s1 + $0x28] sm:$0xff]
  %v22 = vld [vmem:[%s1 + $0x30] sm:$0xff]
  %v23 = vld [vmem:[%s1 + $0x38] sm:$0xff]
  %v24 = vld [vmem:[%s2] sm:$0x1]
  %v26 = vlaneseq
  %v27 = vshrl.u32 %v26, 7
  %v28 = vsub.s32 0, %v27
  %v29 = vrot.slane %v24, %v28
  %vm31 = vcmask 523264
  %v33 = vsel %vm31, %v14, 0
  %v36 = vsel %vm31, %v15, 0
  %38 = vmatprep.subr.mxu0 0.0
  %39 = vmatpush1.msra.mxu0 %v16
  %40 = vmatprep.subr.mxu0 0.0
  %41 = vmatpush1.msra.mxu0 %v17
  %42 = vmatprep.subr.mxu0 0.0
  %43 = vmatpush1.msra.mxu0 %v18
  %44 = vmatprep.subr.mxu0 0.0
  %45 = vmatpush1.msra.mxu0 %v19
  %46 = vmatprep.subr.mxu0 0.0
  %47 = vmatpush1.msra.mxu0 %v20
  %48 = vmatprep.subr.mxu0 0.0
  %49 = vmatpush1.msra.mxu0 %v21
  %50 = vmatprep.subr.mxu0 0.0
  %51 = vmatpush1.msra.mxu0 %v22
  %52 = vmatprep.subr.mxu0 0.0
  %53 = vmatpush1.msra.mxu0 %v23
  %54 = vmatprep.subr.mxu0 0.0
  %55 = vmatpush1.msra.mxu0 0.0
  %56 = vmatprep.subr.mxu0 0.0
  %57 = vmatpush1.msra.mxu0 0.0
  %58 = vmatprep.subr.mxu0 0.0
  %59 = vmatpush1.msra.mxu0 0.0
  %60 = vmatprep.subr.mxu0 0.0
  %61 = vmatpush1.msra.mxu0 0.0
  %62 = vmatprep.subr.mxu0 0.0
  %63 = vmatpush1.msra.mxu0 0.0
  %64 = vmatprep.subr.mxu0 0.0
  %65 = vmatpush1.msra.mxu0 0.0
  %66 = vmatprep.subr.mxu0 0.0
  %67 = vmatpush1.msra.mxu0 0.0
  %68 = vmatprep.subr.mxu0 0.0
  %69 = vmatpush1.msra.mxu0 0.0
  %70 = vmatprep.subr.mxu0 0.0
  %71 = vmatpush1.msra.mxu0 0.0
  %72 = vmatprep.subr.mxu0 0.0
  %73 = vmatpush1.msra.mxu0 0.0
  %74 = vmatprep.subr.mxu0 0.0
  %75 = vmatpush1.msra.mxu0 0.0
  %76 = vmatprep.subr.mxu0 0.0
  %77 = vmatpush1.msra.mxu0 0.0
  %78 = vmatprep.subr.mxu0 0.0
  %79 = vmatpush1.msra.mxu0 0.0
  %80 = vmatprep.subr.mxu0 0.0
  %81 = vmatpush1.msra.mxu0 0.0
  %82 = vmatprep.subr.mxu0 0.0
  %83 = vmatpush1.msra.mxu0 0.0
  %84 = vmatprep.subr.mxu0 0.0
  %85 = vmatpush1.msra.mxu0 0.0
  %86 = vmatprep.subr.mxu0 0.0
  %87 = vmatpush1.msra.mxu0 0.0
  %88 = vmatprep.subr.mxu0 0.0
  %89 = vmatpush1.msra.mxu0 0.0
  %90 = vmatprep.subr.mxu0 0.0
  %91 = vmatpush1.msra.mxu0 0.0
  %92 = vmatprep.subr.mxu0 0.0
  %93 = vmatpush1.msra.mxu0 0.0
  %94 = vmatprep.subr.mxu0 0.0
  %95 = vmatpush1.msra.mxu0 0.0
  %96 = vmatprep.subr.mxu0 0.0
  %97 = vmatpush1.msra.mxu0 0.0
  %98 = vmatprep.subr.mxu0 0.0
  %99 = vmatpush1.msra.mxu0 0.0
  %100 = vmatprep.subr.mxu0 0.0
  %101 = vmatpush1.msra.mxu0 0.0
  %102 = vmatprep.mubr.f32.mxu0 0.0
  %103 = vmatmul.mubr.f32.gmra.mrb[0].mxu0 %v33
  %v104 = vpop.f32.mrb[0].mxu0
  %v105 = vadd.f32 %v29, %v104
  %v106 = vpop.f32.mrb[0].mxu0
  %107 = vmatprep.mubr.f32.mxu0 0.0
  %108 = vmatmul.mubr.f32.gmra.mrb[0].mxu0 %v36
  %v109 = vpop.f32.mrb[0].mxu0
  %v110 = vadd.f32 %v29, %v109
  %v111 = vpop.f32.mrb[0].mxu0
  %112 = vdwg.mxu0
  %113 = vst [vmem:[%s3] sm:$0xff] %v105
  %114 = vst [vmem:[%s3 + $0x8] sm:$0xff] %v110
  // Predicated region
  $region14: #{lstm_layer.14} parent=0 // pred_check
    _
  $region15: #{lstm_layer.14} parent=0 // pred_check_branch
    %116 = sbr.rel (0) target = $region17
  $region16: #{lstm_layer.14} parent=0 // pred_region
    _
  $region17: #{lstm_layer.14} parent=0 // pred_fallthru
    _
  // Predicated region
  $region18: #{lstm_layer.14} parent=0 // pred_check
    _
  $region19: #{lstm_layer.14} parent=0 // pred_check_branch
    %118 = sbr.rel (0) target = $region21
  $region20: #{lstm_layer.14} parent=0 // pred_region
    _
  $region21: #{lstm_layer.14} parent=0 // pred_fallthru
    _

</llo_original>
